<compile_context>
chip_gen: v7x
topology: tpu7x:2x2x1
jax: 0.10.0
libtpu: 0.0.40
codegen_flags: <defaults>
</compile_context>

<pallas_src>
import jax
import jax.numpy as jnp
from jax.experimental import pallas as pl
from jax.experimental.pallas import tpu as pltpu

# ---- model hyperparameters (small, consistent with the module) ----
VOCAB_SIZE = 64
N_DIM = 16
WINDOW_SIZE = 2
HIDDEN_DIM = 128                          # matches the module-level hidden_dim
CTX_LEN = 2 * WINDOW_SIZE                 # context word indices per example
IN_DIM = 2 * N_DIM * WINDOW_SIZE          # flattened embedding dim = CTX_LEN * N_DIM
VOCAB_PAD = 128                           # lane-dense output width (>= VOCAB, multiple of 128)
TILE_B = 256                              # batch rows per grid step (fills MXU M-dim)


def cbow_kernel(idx_ref, emb_ref, w1_ref, b1_ref, w2_ref, b2_ref, o_ref):
    # idx_ref: (TILE_B, CTX_LEN) int32  (VMEM, advances with grid)
    # emb_ref: (VOCAB, N_DIM)     bf16  (resident)
    # w1_ref : (IN_DIM, HIDDEN)   bf16  (resident)
    # b1_ref : (1, HIDDEN)        f32   (resident)
    # w2_ref : (HIDDEN, VOCAB_PAD) bf16 (resident, zero-padded columns)
    # b2_ref : (1, VOCAB_PAD)     f32   (resident, zero-padded columns)
    # o_ref  : (TILE_B, VOCAB_PAD) f32  (advances with grid)
    tile_b, ctx_len = idx_ref.shape
    vocab, n_dim = emb_ref.shape
    hidden = w1_ref.shape[1]

    idx = idx_ref[...]                                              # (TILE_B, CTX_LEN)
    iota_v = jax.lax.broadcasted_iota(jnp.int32, (tile_b, vocab), 1)

    # Layer 1: sum over context positions of (one-hot gather) @ W1-slice.
    # Equivalent to concat(emb[idx[:,0]], ..., emb[idx[:,C-1]]) @ W1, but with
    # only 2-D MXU matmuls and no cross-lane data movement.
    h = jnp.zeros((tile_b, hidden), jnp.float32)
    for c in range(ctx_len):                                        # static unroll (CTX_LEN=4)
        onehot = (idx[:, c:c + 1] == iota_v).astype(emb_ref.dtype)  # (TILE_B, VOCAB) bf16
        e_c = jnp.dot(onehot, emb_ref[...],                         # (TILE_B, N_DIM) == emb[idx[:,c]]
                      preferred_element_type=jnp.float32)
        e_c = e_c.astype(w1_ref.dtype)                              # exact (values are bf16 already)
        w1_c = w1_ref[c * n_dim:(c + 1) * n_dim, :]                 # static (N_DIM, HIDDEN) slice
        h = h + jnp.dot(e_c, w1_c, preferred_element_type=jnp.float32)

    # Bias + ReLU (f32), then layer 2 on the MXU into the lane-dense output.
    h = jnp.maximum(h + b1_ref[...], 0.0)                           # (TILE_B, HIDDEN) f32
    out = jnp.dot(h.astype(w2_ref.dtype), w2_ref[...],
                  preferred_element_type=jnp.float32)
    out = out + b2_ref[...]                                         # (TILE_B, VOCAB_PAD)
    o_ref[...] = out.astype(o_ref.dtype)


def cbow_forward(x_idx, emb, w1, b1, w2, b2, *, tile_b=TILE_B):
    """x_idx: (CTX_LEN,) or (B, CTX_LEN) int32 context indices.
    Returns (B, VOCAB_SIZE) f32 logits (B=1 for a single window)."""
    x_idx = jnp.asarray(x_idx, jnp.int32)
    if x_idx.ndim == 1:
        x_idx = x_idx[None, :]
    b = x_idx.shape[0]
    b_pad = ((b + tile_b - 1) // tile_b) * tile_b
    if b_pad != b:
        # pad with index 0 (valid); padded rows are discarded below.
        x_idx = jnp.pad(x_idx, ((0, b_pad - b), (0, 0)))

    # Lane-dense (128-wide) classifier slab: pad W2/b2 columns with zeros.
    w2p = jnp.zeros((HIDDEN_DIM, VOCAB_PAD), w2.dtype).at[:, :VOCAB_SIZE].set(w2)
    b2p = jnp.zeros((1, VOCAB_PAD), b2.dtype).at[:, :VOCAB_SIZE].set(b2)

    grid = (b_pad // tile_b,)
    out = pl.pallas_call(
        cbow_kernel,
        out_shape=jax.ShapeDtypeStruct((b_pad, VOCAB_PAD), jnp.float32),
        grid=grid,
        in_specs=[
            pl.BlockSpec((tile_b, CTX_LEN), lambda i: (i, 0)),        # indices (advance)
            pl.BlockSpec((VOCAB_SIZE, N_DIM), lambda i: (0, 0)),      # embedding (resident)
            pl.BlockSpec((IN_DIM, HIDDEN_DIM), lambda i: (0, 0)),     # W1 (resident)
            pl.BlockSpec((1, HIDDEN_DIM), lambda i: (0, 0)),          # b1 (resident)
            pl.BlockSpec((HIDDEN_DIM, VOCAB_PAD), lambda i: (0, 0)),  # W2 padded (resident)
            pl.BlockSpec((1, VOCAB_PAD), lambda i: (0, 0)),           # b2 padded (resident)
        ],
        out_specs=pl.BlockSpec((tile_b, VOCAB_PAD), lambda i: (i, 0)),
        compiler_params=pltpu.CompilerParams(
            dimension_semantics=("parallel",)),                       # shard batch tiles across TCs (v7x)
    )(x_idx, emb, w1, b1, w2p, b2p)
    return out[:b, :VOCAB_SIZE]


def init_params(key):
    k_emb, k_w1, k_b1, k_w2, k_b2 = jax.random.split(key, 5)
    # Parameters stored bf16 (weights) / f32 (biases); PyTorch-shape-consistent.
    emb = jax.random.normal(k_emb, (VOCAB_SIZE, N_DIM), jnp.float32).astype(jnp.bfloat16)
    lim1 = 1.0 / (IN_DIM ** 0.5)
    w1 = jax.random.uniform(k_w1, (IN_DIM, HIDDEN_DIM), jnp.float32, -lim1, lim1).astype(jnp.bfloat16)
    b1 = jax.random.uniform(k_b1, (1, HIDDEN_DIM), jnp.float32, -lim1, lim1)
    lim2 = 1.0 / (HIDDEN_DIM ** 0.5)
    w2 = jax.random.uniform(k_w2, (HIDDEN_DIM, VOCAB_SIZE), jnp.float32, -lim2, lim2).astype(jnp.bfloat16)
    b2 = jax.random.uniform(k_b2, (1, VOCAB_SIZE), jnp.float32, -lim2, lim2)
    return emb, w1, b1, w2, b2


def reference_forward(x_idx, emb, w1, b1, w2, b2):
    # Pure-JAX reference with the same dtype contract as the kernel
    # (bf16 weights, f32 accumulation, bf16-rounded hidden activations).
    e = emb.astype(jnp.float32)[x_idx]                     # (B, CTX_LEN, N_DIM) gather
    e = e.reshape(x_idx.shape[0], -1)                      # (B, IN_DIM) == .view(1, -1) per row
    h = e @ w1.astype(jnp.float32) + b1
    h = jnp.maximum(h, 0.0)
    h = h.astype(jnp.bfloat16).astype(jnp.float32)
    return h @ w2.astype(jnp.float32) + b2


if __name__ == "__main__":
    key = jax.random.PRNGKey(0)
    k_params, k_x = jax.random.split(key)
    params = init_params(k_params)

    # Batch of context windows (each row is one CBOW forward of the module).
    B = 512
    x_idx = jax.random.randint(k_x, (B, CTX_LEN), 0, VOCAB_SIZE, dtype=jnp.int32)

    out = jax.block_until_ready(cbow_forward(x_idx, *params))
    ref = reference_forward(x_idx, *params)
    assert out.shape == (B, VOCAB_SIZE)
    assert jnp.allclose(out, ref, atol=1e-3, rtol=1e-3), "batched mismatch vs reference"

    # Single-window path, matching the PyTorch module's (1, vocab) output.
    out1 = jax.block_until_ready(cbow_forward(x_idx[0], *params))
    assert out1.shape == (1, VOCAB_SIZE)
    assert jnp.allclose(out1, ref[0:1], atol=1e-3, rtol=1e-3), "single-window mismatch"

    print("KERNEL_OK")
</pallas_src>

<mosaic_0001>
module attributes {stable_mosaic.version = 11 : i64} {
  func.func @cbow_kernel(%arg0: i32, %arg1: memref<256x4xi32, #tpu.memory_space<vmem>>, %arg2: memref<64x16xbf16, #tpu.memory_space<vmem>>, %arg3: memref<64x128xbf16, #tpu.memory_space<vmem>>, %arg4: memref<1x128xf32, #tpu.memory_space<vmem>>, %arg5: memref<128x128xbf16, #tpu.memory_space<vmem>>, %arg6: memref<1x128xf32, #tpu.memory_space<vmem>>, %arg7: memref<256x128xf32, #tpu.memory_space<vmem>>) attributes {dimension_semantics = [#tpu.dimension_semantics<parallel>], iteration_bounds = array<i64: 2>, scalar_prefetch = 0 : i64, scratch_operands = 0 : i64, tpu.core_type = #tpu.core_type<tc>, window_params = [{transform_indices = @transform_0, window_bounds = array<i64: 256, 4>}, {pipeline_mode = #tpu.pipeline_mode<synchronous>, transform_indices = @transform_1, window_bounds = array<i64: 64, 16>}, {pipeline_mode = #tpu.pipeline_mode<synchronous>, transform_indices = @transform_2, window_bounds = array<i64: 64, 128>}, {pipeline_mode = #tpu.pipeline_mode<synchronous>, transform_indices = @transform_3, window_bounds = array<i64: 1, 128>}, {pipeline_mode = #tpu.pipeline_mode<synchronous>, transform_indices = @transform_4, window_bounds = array<i64: 128, 128>}, {pipeline_mode = #tpu.pipeline_mode<synchronous>, transform_indices = @transform_5, window_bounds = array<i64: 1, 128>}, {transform_indices = @transform_6, window_bounds = array<i64: 256, 128>}]} {
    %c0 = arith.constant 0 : index
    %c0_0 = arith.constant 0 : index
    %0 = vector.load %arg1[%c0, %c0_0] : memref<256x4xi32, #tpu.memory_space<vmem>>, vector<256x4xi32>
    %1 = tpu.iota {dimensions = array<i32: 1>} : vector<256x64xi32>
    %cst = arith.constant 0.000000e+00 : f32
    %2 = vector.broadcast %cst : f32 to vector<256x128xf32>
    %3 = vector.extract_strided_slice %0 {offsets = [0, 0], sizes = [256, 1], strides = [1, 1]} : vector<256x4xi32> to vector<256x1xi32>
    %4 = vector.broadcast %3 : vector<256x1xi32> to vector<256x64xi32>
    %5 = arith.cmpi eq, %4, %1 : vector<256x64xi32>
    %6 = arith.extui %5 : vector<256x64xi1> to vector<256x64xi32>
    %7 = arith.sitofp %6 : vector<256x64xi32> to vector<256x64xf32>
    %8 = arith.truncf %7 : vector<256x64xf32> to vector<256x64xbf16>
    %c0_1 = arith.constant 0 : index
    %c0_2 = arith.constant 0 : index
    %9 = vector.load %arg2[%c0_1, %c0_2] : memref<64x16xbf16, #tpu.memory_space<vmem>>, vector<64x16xbf16>
    %cst_3 = arith.constant dense<0.000000e+00> : vector<256x16xf32>
    %10 = tpu.matmul %8, %9, %cst_3 {dimension_numbers = #tpu.dot_dimension_numbers<[1], [0], [0], [1], [0, 0, 1, 1], [], []>} : vector<256x64xbf16>, vector<64x16xbf16>, vector<256x16xf32> -> vector<256x16xf32>
    %11 = arith.truncf %10 : vector<256x16xf32> to vector<256x16xbf16>
    %c0_4 = arith.constant 0 : index
    %c0_5 = arith.constant 0 : index
    %12 = vector.load %arg3[%c0_4, %c0_5] : memref<64x128xbf16, #tpu.memory_space<vmem>>, vector<16x128xbf16>
    %cst_6 = arith.constant dense<0.000000e+00> : vector<256x128xf32>
    %13 = tpu.matmul %11, %12, %cst_6 {dimension_numbers = #tpu.dot_dimension_numbers<[1], [0], [0], [1], [0, 0, 1, 1], [], []>} : vector<256x16xbf16>, vector<16x128xbf16>, vector<256x128xf32> -> vector<256x128xf32>
    %14 = arith.addf %2, %13 : vector<256x128xf32>
    %15 = vector.extract_strided_slice %0 {offsets = [0, 1], sizes = [256, 1], strides = [1, 1]} : vector<256x4xi32> to vector<256x1xi32>
    %16 = vector.broadcast %15 : vector<256x1xi32> to vector<256x64xi32>
    %17 = arith.cmpi eq, %16, %1 : vector<256x64xi32>
    %18 = arith.extui %17 : vector<256x64xi1> to vector<256x64xi32>
    %19 = arith.sitofp %18 : vector<256x64xi32> to vector<256x64xf32>
    %20 = arith.truncf %19 : vector<256x64xf32> to vector<256x64xbf16>
    %c0_7 = arith.constant 0 : index
    %c0_8 = arith.constant 0 : index
    %21 = vector.load %arg2[%c0_7, %c0_8] : memref<64x16xbf16, #tpu.memory_space<vmem>>, vector<64x16xbf16>
    %cst_9 = arith.constant dense<0.000000e+00> : vector<256x16xf32>
    %22 = tpu.matmul %20, %21, %cst_9 {dimension_numbers = #tpu.dot_dimension_numbers<[1], [0], [0], [1], [0, 0, 1, 1], [], []>} : vector<256x64xbf16>, vector<64x16xbf16>, vector<256x16xf32> -> vector<256x16xf32>
    %23 = arith.truncf %22 : vector<256x16xf32> to vector<256x16xbf16>
    %c16 = arith.constant 16 : index
    %c0_10 = arith.constant 0 : index
    %24 = vector.load %arg3[%c16, %c0_10] : memref<64x128xbf16, #tpu.memory_space<vmem>>, vector<16x128xbf16>
    %cst_11 = arith.constant dense<0.000000e+00> : vector<256x128xf32>
    %25 = tpu.matmul %23, %24, %cst_11 {dimension_numbers = #tpu.dot_dimension_numbers<[1], [0], [0], [1], [0, 0, 1, 1], [], []>} : vector<256x16xbf16>, vector<16x128xbf16>, vector<256x128xf32> -> vector<256x128xf32>
    %26 = arith.addf %14, %25 : vector<256x128xf32>
    %27 = vector.extract_strided_slice %0 {offsets = [0, 2], sizes = [256, 1], strides = [1, 1]} : vector<256x4xi32> to vector<256x1xi32>
    %28 = vector.broadcast %27 : vector<256x1xi32> to vector<256x64xi32>
    %29 = arith.cmpi eq, %28, %1 : vector<256x64xi32>
    %30 = arith.extui %29 : vector<256x64xi1> to vector<256x64xi32>
    %31 = arith.sitofp %30 : vector<256x64xi32> to vector<256x64xf32>
    %32 = arith.truncf %31 : vector<256x64xf32> to vector<256x64xbf16>
    %c0_12 = arith.constant 0 : index
    %c0_13 = arith.constant 0 : index
    %33 = vector.load %arg2[%c0_12, %c0_13] : memref<64x16xbf16, #tpu.memory_space<vmem>>, vector<64x16xbf16>
    %cst_14 = arith.constant dense<0.000000e+00> : vector<256x16xf32>
    %34 = tpu.matmul %32, %33, %cst_14 {dimension_numbers = #tpu.dot_dimension_numbers<[1], [0], [0], [1], [0, 0, 1, 1], [], []>} : vector<256x64xbf16>, vector<64x16xbf16>, vector<256x16xf32> -> vector<256x16xf32>
    %35 = arith.truncf %34 : vector<256x16xf32> to vector<256x16xbf16>
    %c32 = arith.constant 32 : index
    %c0_15 = arith.constant 0 : index
    %36 = vector.load %arg3[%c32, %c0_15] : memref<64x128xbf16, #tpu.memory_space<vmem>>, vector<16x128xbf16>
    %cst_16 = arith.constant dense<0.000000e+00> : vector<256x128xf32>
    %37 = tpu.matmul %35, %36, %cst_16 {dimension_numbers = #tpu.dot_dimension_numbers<[1], [0], [0], [1], [0, 0, 1, 1], [], []>} : vector<256x16xbf16>, vector<16x128xbf16>, vector<256x128xf32> -> vector<256x128xf32>
    %38 = arith.addf %26, %37 : vector<256x128xf32>
    %39 = vector.extract_strided_slice %0 {offsets = [0, 3], sizes = [256, 1], strides = [1, 1]} : vector<256x4xi32> to vector<256x1xi32>
    %40 = vector.broadcast %39 : vector<256x1xi32> to vector<256x64xi32>
    %41 = arith.cmpi eq, %40, %1 : vector<256x64xi32>
    %42 = arith.extui %41 : vector<256x64xi1> to vector<256x64xi32>
    %43 = arith.sitofp %42 : vector<256x64xi32> to vector<256x64xf32>
    %44 = arith.truncf %43 : vector<256x64xf32> to vector<256x64xbf16>
    %c0_17 = arith.constant 0 : index
    %c0_18 = arith.constant 0 : index
    %45 = vector.load %arg2[%c0_17, %c0_18] : memref<64x16xbf16, #tpu.memory_space<vmem>>, vector<64x16xbf16>
    %cst_19 = arith.constant dense<0.000000e+00> : vector<256x16xf32>
    %46 = tpu.matmul %44, %45, %cst_19 {dimension_numbers = #tpu.dot_dimension_numbers<[1], [0], [0], [1], [0, 0, 1, 1], [], []>} : vector<256x64xbf16>, vector<64x16xbf16>, vector<256x16xf32> -> vector<256x16xf32>
    %47 = arith.truncf %46 : vector<256x16xf32> to vector<256x16xbf16>
    %c48 = arith.constant 48 : index
    %c0_20 = arith.constant 0 : index
    %48 = vector.load %arg3[%c48, %c0_20] : memref<64x128xbf16, #tpu.memory_space<vmem>>, vector<16x128xbf16>
    %cst_21 = arith.constant dense<0.000000e+00> : vector<256x128xf32>
    %49 = tpu.matmul %47, %48, %cst_21 {dimension_numbers = #tpu.dot_dimension_numbers<[1], [0], [0], [1], [0, 0, 1, 1], [], []>} : vector<256x16xbf16>, vector<16x128xbf16>, vector<256x128xf32> -> vector<256x128xf32>
    %50 = arith.addf %38, %49 : vector<256x128xf32>
    %c0_22 = arith.constant 0 : index
    %c0_23 = arith.constant 0 : index
    %51 = vector.load %arg4[%c0_22, %c0_23] : memref<1x128xf32, #tpu.memory_space<vmem>>, vector<1x128xf32>
    %52 = vector.broadcast %51 : vector<1x128xf32> to vector<256x128xf32>
    %53 = arith.addf %50, %52 : vector<256x128xf32>
    %cst_24 = arith.constant 0.000000e+00 : f32
    %54 = vector.broadcast %cst_24 : f32 to vector<256x128xf32>
    %55 = arith.maximumf %53, %54 : vector<256x128xf32>
    %56 = arith.truncf %55 : vector<256x128xf32> to vector<256x128xbf16>
    %c0_25 = arith.constant 0 : index
    %c0_26 = arith.constant 0 : index
    %57 = vector.load %arg5[%c0_25, %c0_26] : memref<128x128xbf16, #tpu.memory_space<vmem>>, vector<128x128xbf16>
    %cst_27 = arith.constant dense<0.000000e+00> : vector<256x128xf32>
    %58 = tpu.matmul %56, %57, %cst_27 {dimension_numbers = #tpu.dot_dimension_numbers<[1], [0], [0], [1], [0, 0, 1, 1], [], []>} : vector<256x128xbf16>, vector<128x128xbf16>, vector<256x128xf32> -> vector<256x128xf32>
    %c0_28 = arith.constant 0 : index
    %c0_29 = arith.constant 0 : index
    %59 = vector.load %arg6[%c0_28, %c0_29] : memref<1x128xf32, #tpu.memory_space<vmem>>, vector<1x128xf32>
    %60 = vector.broadcast %59 : vector<1x128xf32> to vector<256x128xf32>
    %61 = arith.addf %58, %60 : vector<256x128xf32>
    %c0_30 = arith.constant 0 : index
    %c0_31 = arith.constant 0 : index
    %62 = vector.load %arg7[%c0_30, %c0_31] : memref<256x128xf32, #tpu.memory_space<vmem>>, vector<256x128xf32>
    tpu.vector_store %arg7[%c0_30, %c0_31], %61 {strides = array<i32>} : memref<256x128xf32, #tpu.memory_space<vmem>>, vector<256x128xf32>,
    return
  }
  func.func @transform_0(%arg0: i32) -> (i32, i32) {
    %c0_i32 = arith.constant 0 : i32
    %c0_i32_0 = arith.constant 0 : i32
    return %arg0, %c0_i32 : i32, i32
  }
  func.func @transform_1(%arg0: i32) -> (i32, i32) {
    %c0_i32 = arith.constant 0 : i32
    %c0_i32_0 = arith.constant 0 : i32
    %c0_i32_1 = arith.constant 0 : i32
    return %c0_i32, %c0_i32_0 : i32, i32
  }
  func.func @transform_2(%arg0: i32) -> (i32, i32) {
    %c0_i32 = arith.constant 0 : i32
    %c0_i32_0 = arith.constant 0 : i32
    %c0_i32_1 = arith.constant 0 : i32
    return %c0_i32, %c0_i32_0 : i32, i32
  }
  func.func @transform_3(%arg0: i32) -> (i32, i32) {
    %c0_i32 = arith.constant 0 : i32
    %c0_i32_0 = arith.constant 0 : i32
    %c0_i32_1 = arith.constant 0 : i32
    return %c0_i32, %c0_i32_0 : i32, i32
  }
  func.func @transform_4(%arg0: i32) -> (i32, i32) {
    %c0_i32 = arith.constant 0 : i32
    %c0_i32_0 = arith.constant 0 : i32
    %c0_i32_1 = arith.constant 0 : i32
    return %c0_i32, %c0_i32_0 : i32, i32
  }
  func.func @transform_5(%arg0: i32) -> (i32, i32) {
    %c0_i32 = arith.constant 0 : i32
    %c0_i32_0 = arith.constant 0 : i32
    %c0_i32_1 = arith.constant 0 : i32
    return %c0_i32, %c0_i32_0 : i32, i32
  }
  func.func @transform_6(%arg0: i32) -> (i32, i32) {
    %c0_i32 = arith.constant 0 : i32
    %c0_i32_0 = arith.constant 0 : i32
    return %arg0, %c0_i32 : i32, i32
  }
}

</mosaic_0001>

<llo_original>
// kernel: tpu_custom_call.1
$region0: #{tpu_custom_call.1}
  #allocation0 [shape = 'u32[]', space=smem, size = 0x4, offset = 0x4, fixed_abs, tag = 'smem constant byte address 0x4 - core index']
  #allocation1 [shape = 'u32[144,128]{1,0:T(1,128)}', space=vmem, size = 0x12000, scoped, tag = 'internal scratch']
  %s0 = inlined_call_operand.vmem [shape: s32[512,4], index: 0, kind: input, shape index: {}]
  %s1 = inlined_call_operand.vmem [shape: bf16[64,16], index: 1, kind: input, shape index: {}]
  %s2 = inlined_call_operand.vmem [shape: bf16[64,128], index: 2, kind: input, shape index: {}]
  %s3 = inlined_call_operand.vmem [shape: f32[1,128], index: 3, kind: input, shape index: {}]
  %s4 = inlined_call_operand.vmem [shape: bf16[128,128], index: 4, kind: input, shape index: {}]
  %s5 = inlined_call_operand.vmem [shape: f32[1,128], index: 5, kind: input, shape index: {}]
  %s6 = inlined_call_operand.hbm [shape: f32[512,128], index: 6, kind: output, shape index: {}]
  %s7 = sld [smem:[#allocation0]]
  $region57: #{tpu_custom_call.1} parent=0
    _
  %s9 = ssub.s32 1, %s7
  %s10 = scalar_select 0, %s9, %s7
  $region1: #{tpu_custom_call.1} parent=0
    #allocation2 [shape = 'u8[262144]{0}', space=vmem, size = 0x40000, scoped, tag = 'output window, operand 0']
    #allocation3 [shape = 's32[2]{0}', space=sflag, size = 0x8, scoped, tag = 'scoped memory for tpu_custom_call.1']
    %11 = vsyncpa [#allocation3], 0
    %s12 = scalar_lea.sflag [#allocation3], 1
    %13 = vsyncpa %s12, 0
    loop: start=0, step=1, limit=4
    $region2: #{tpu_custom_call.1} parent=1 // loop_pre_header
      _
    $region3: #{tpu_custom_call.1} parent=1 // loop_header
      %s15 = sphi 0, %s19
      %p16 = scmp.ge.s32.totalorder %s15, 4
      %s25 = sphi 0, %s27
      %s28 = sphi 0, %s25
      %s29 = sphi 0, %s28
      %s45 = sphi 0, %s29
      %s49 = sphi 0, %s49
      %s51 = sphi 0, %s49
      %s52 = sphi 0, %s51
      %s66 = sphi 0, %s52
      %s70 = sphi 0, %s70
      %s72 = sphi 0, %s70
      %s73 = sphi 0, %s72
      %s87 = sphi 0, %s73
      %s91 = sphi 0, %s91
      %s93 = sphi 0, %s91
      %s94 = sphi 0, %s93
      %s108 = sphi 0, %s94
      %s112 = sphi 0, %s112
      %s114 = sphi 0, %s112
      %s115 = sphi 0, %s114
      %s129 = sphi 0, %s115
      %s133 = sphi 0, %s133
      %s135 = sphi 0, %s133
      %s136 = sphi 0, %s135
      %s150 = sphi 0, %s136
      %s156 = sphi 0, %s158
      %s159 = sphi 0, %s156
      %s160 = sphi 0, %s159
      %s176 = sphi 0, %s160
    $region4: #{tpu_custom_call.1} parent=1 // loop_header_branch
      %18 = sbr.rel (%p16) target = $region8
    $region5: #{tpu_custom_call.1} parent=1 // loop_body
      %s20 = ssub.s32 %s15, 1
      %s21 = ssub.s32 %s15, 2
      %s22 = sadd.s32 %s15, 1
      %s23 = ssub.s32 %s15, %s22
      %p24 = scmp.eq.s32.totalorder %s23, 0
      %s26 = sadd.s32 %s25, 1
      %s27 = scalar_select %p24, %s25, %s26
      %p30 = pneg %p24
      %p31 = scmp.eq.s32.totalorder %s15, 1
      %p32 = por %p30, %p31
      %p33 = scmp.ne.s32.totalorder %s25, %s28
      %p34 = scmp.eq.s32.totalorder %s15, 0
      %p35 = por %p33, %p34
      %p36 = scmp.ne.s32.totalorder %s25, %s28
      %p37 = scmp.eq.s32.totalorder %s20, 1
      %p38 = por %p36, %p37
      %p39 = scmp.ne.s32.totalorder %s28, %s29
      %p40 = scmp.eq.s32.totalorder %s20, 0
      %p41 = por %p39, %p40
      %p42 = scmp.ne.s32.totalorder %s28, %s29
      %p43 = scmp.eq.s32.totalorder %s21, 1
      %p44 = por %p42, %p43
      %p46 = scmp.ne.s32.totalorder %s29, %s45
      %p47 = scmp.eq.s32.totalorder %s21, 0
      %p48 = por %p46, %p47
      %s50 = sadd.s32 %s49, 1
      %p53 = scmp.eq.s32.totalorder %s15, 1
      %p54 = scmp.ne.s32.totalorder %s49, %s51
      %p55 = scmp.eq.s32.totalorder %s15, 0
      %p56 = por %p54, %p55
      %p57 = scmp.ne.s32.totalorder %s49, %s51
      %p58 = scmp.eq.s32.totalorder %s20, 1
      %p59 = por %p57, %p58
      %p60 = scmp.ne.s32.totalorder %s51, %s52
      %p61 = scmp.eq.s32.totalorder %s20, 0
      %p62 = por %p60, %p61
      %p63 = scmp.ne.s32.totalorder %s51, %s52
      %p64 = scmp.eq.s32.totalorder %s21, 1
      %p65 = por %p63, %p64
      %p67 = scmp.ne.s32.totalorder %s52, %s66
      %p68 = scmp.eq.s32.totalorder %s21, 0
      %p69 = por %p67, %p68
      %s71 = sadd.s32 %s70, 1
      %p74 = scmp.eq.s32.totalorder %s15, 1
      %p75 = scmp.ne.s32.totalorder %s70, %s72
      %p76 = scmp.eq.s32.totalorder %s15, 0
      %p77 = por %p75, %p76
      %p78 = scmp.ne.s32.totalorder %s70, %s72
      %p79 = scmp.eq.s32.totalorder %s20, 1
      %p80 = por %p78, %p79
      %p81 = scmp.ne.s32.totalorder %s72, %s73
      %p82 = scmp.eq.s32.totalorder %s20, 0
      %p83 = por %p81, %p82
      %p84 = scmp.ne.s32.totalorder %s72, %s73
      %p85 = scmp.eq.s32.totalorder %s21, 1
      %p86 = por %p84, %p85
      %p88 = scmp.ne.s32.totalorder %s73, %s87
      %p89 = scmp.eq.s32.totalorder %s21, 0
      %p90 = por %p88, %p89
      %s92 = sadd.s32 %s91, 1
      %p95 = scmp.eq.s32.totalorder %s15, 1
      %p96 = scmp.ne.s32.totalorder %s91, %s93
      %p97 = scmp.eq.s32.totalorder %s15, 0
      %p98 = por %p96, %p97
      %p99 = scmp.ne.s32.totalorder %s91, %s93
      %p100 = scmp.eq.s32.totalorder %s20, 1
      %p101 = por %p99, %p100
      %p102 = scmp.ne.s32.totalorder %s93, %s94
      %p103 = scmp.eq.s32.totalorder %s20, 0
      %p104 = por %p102, %p103
      %p105 = scmp.ne.s32.totalorder %s93, %s94
      %p106 = scmp.eq.s32.totalorder %s21, 1
      %p107 = por %p105, %p106
      %p109 = scmp.ne.s32.totalorder %s94, %s108
      %p110 = scmp.eq.s32.totalorder %s21, 0
      %p111 = por %p109, %p110
      %s113 = sadd.s32 %s112, 1
      %p116 = scmp.eq.s32.totalorder %s15, 1
      %p117 = scmp.ne.s32.totalorder %s112, %s114
      %p118 = scmp.eq.s32.totalorder %s15, 0
      %p119 = por %p117, %p118
      %p120 = scmp.ne.s32.totalorder %s112, %s114
      %p121 = scmp.eq.s32.totalorder %s20, 1
      %p122 = por %p120, %p121
      %p123 = scmp.ne.s32.totalorder %s114, %s115
      %p124 = scmp.eq.s32.totalorder %s20, 0
      %p125 = por %p123, %p124
      %p126 = scmp.ne.s32.totalorder %s114, %s115
      %p127 = scmp.eq.s32.totalorder %s21, 1
      %p128 = por %p126, %p127
      %p130 = scmp.ne.s32.totalorder %s115, %s129
      %p131 = scmp.eq.s32.totalorder %s21, 0
      %p132 = por %p130, %p131
      %s134 = sadd.s32 %s133, 1
      %p137 = scmp.eq.s32.totalorder %s15, 1
      %p138 = scmp.ne.s32.totalorder %s133, %s135
      %p139 = scmp.eq.s32.totalorder %s15, 0
      %p140 = por %p138, %p139
      %p141 = scmp.ne.s32.totalorder %s133, %s135
      %p142 = scmp.eq.s32.totalorder %s20, 1
      %p143 = por %p141, %p142
      %p144 = scmp.ne.s32.totalorder %s135, %s136
      %p145 = scmp.eq.s32.totalorder %s20, 0
      %p146 = por %p144, %p145
      %p147 = scmp.ne.s32.totalorder %s135, %s136
      %p148 = scmp.eq.s32.totalorder %s21, 1
      %p149 = por %p147, %p148
      %p151 = scmp.ne.s32.totalorder %s136, %s150
      %p152 = scmp.eq.s32.totalorder %s21, 0
      %p153 = por %p151, %p152
      %s154 = ssub.s32 %s15, %s22
      %p155 = scmp.eq.s32.totalorder %s154, 0
      %s157 = sadd.s32 %s156, 1
      %s158 = scalar_select %p155, %s156, %s157
      %p161 = pneg %p155
      %p162 = scmp.eq.s32.totalorder %s15, 1
      %p163 = por %p161, %p162
      %p164 = scmp.ne.s32.totalorder %s156, %s159
      %p165 = scmp.eq.s32.totalorder %s15, 0
      %p166 = por %p164, %p165
      %p167 = scmp.ne.s32.totalorder %s156, %s159
      %p168 = scmp.eq.s32.totalorder %s20, 1
      %p169 = por %p167, %p168
      %p170 = scmp.ne.s32.totalorder %s159, %s160
      %p171 = scmp.eq.s32.totalorder %s20, 0
      %p172 = por %p170, %p171
      %p173 = scmp.ne.s32.totalorder %s159, %s160
      %p174 = scmp.eq.s32.totalorder %s21, 1
      %p175 = por %p173, %p174
      %p177 = scmp.ne.s32.totalorder %s160, %s176
      %p178 = scmp.eq.s32.totalorder %s21, 0
      %p179 = por %p177, %p178
      %p180 = scmp.le.s32.totalorder 1, %s15
      %p181 = scmp.lt.s32.totalorder %s15, 3
      %p182 = pnand %p180, %p181
      %p183 = pneg %p182
      // Predicated region
      $region9: #{tpu_custom_call.1} parent=5 // pred_check
        _
      $region10: #{tpu_custom_call.1} parent=5 // pred_check_branch
        %185 = sbr.rel (%p182) target = $region12
      $region11: #{tpu_custom_call.1} parent=5 // pred_region
        %s186 = ssub.s32 %s15, 1
        // Predicated region
        $region13: #{tpu_custom_call.1} parent=11 // pred_check
          %p187 = pneg %p62
        $region14: #{tpu_custom_call.1} parent=11 // pred_check_branch
          %189 = sbr.rel (%p187) target = $region16
        $region15: #{tpu_custom_call.1} parent=11 // pred_region
          _
        $region16: #{tpu_custom_call.1} parent=11 // pred_fallthru
          _
        // Predicated region
        $region17: #{tpu_custom_call.1} parent=11 // pred_check
          %p190 = pneg %p83
        $region18: #{tpu_custom_call.1} parent=11 // pred_check_branch
          %192 = sbr.rel (%p190) target = $region20
        $region19: #{tpu_custom_call.1} parent=11 // pred_region
          _
        $region20: #{tpu_custom_call.1} parent=11 // pred_fallthru
          _
        // Predicated region
        $region21: #{tpu_custom_call.1} parent=11 // pred_check
          %p193 = pneg %p104
        $region22: #{tpu_custom_call.1} parent=11 // pred_check_branch
          %195 = sbr.rel (%p193) target = $region24
        $region23: #{tpu_custom_call.1} parent=11 // pred_region
          _
        $region24: #{tpu_custom_call.1} parent=11 // pred_fallthru
          _
        // Predicated region
        $region25: #{tpu_custom_call.1} parent=11 // pred_check
          %p196 = pneg %p125
        $region26: #{tpu_custom_call.1} parent=11 // pred_check_branch
          %198 = sbr.rel (%p196) target = $region28
        $region27: #{tpu_custom_call.1} parent=11 // pred_region
          _
        $region28: #{tpu_custom_call.1} parent=11 // pred_fallthru
          _
        // Predicated region
        $region29: #{tpu_custom_call.1} parent=11 // pred_check
          %p199 = pneg %p146
        $region30: #{tpu_custom_call.1} parent=11 // pred_check_branch
          %201 = sbr.rel (%p199) target = $region32
        $region31: #{tpu_custom_call.1} parent=11 // pred_region
          _
        $region32: #{tpu_custom_call.1} parent=11 // pred_fallthru
          _
      $region12: #{tpu_custom_call.1} parent=5 // pred_fallthru
        _
      %p202 = scmp.lt.s32.totalorder %s15, 2
      // Predicated region
      $region33: #{tpu_custom_call.1} parent=5 // pred_check
        %p203 = pneg %p202
      $region34: #{tpu_custom_call.1} parent=5 // pred_check_branch
        %205 = sbr.rel (%p203) target = $region36
      $region35: #{tpu_custom_call.1} parent=5 // pred_region
        // Predicated region
        $region37: #{tpu_custom_call.1} parent=35 // pred_check
          %p206 = pneg %p35
        $region38: #{tpu_custom_call.1} parent=35 // pred_check_branch
          %208 = sbr.rel (%p206) target = $region40
        $region39: #{tpu_custom_call.1} parent=35 // pred_region
          %s209 = smul.u32 32, %s15
          %p210 = scmp.lt.s32.totalorder %s209, 63
          %s211 = scalar_select %p210, %s209, 63
          %s212 = smul.addr %s211, 8
          %s213 = scalar_lea.vmem %s0, %s212
          %s214 = smul.u32 32, %s15
        $region40: #{tpu_custom_call.1} parent=35 // pred_fallthru
          _
      $region36: #{tpu_custom_call.1} parent=5 // pred_fallthru
        _
      %p215 = scmp.le.s32.totalorder 1, %s15
      %p216 = scmp.lt.s32.totalorder %s15, 3
      %p217 = pnand %p215, %p216
      %p218 = pneg %p217
      // Predicated region
      $region41: #{tpu_custom_call.1} parent=5 // pred_check
        _
      $region42: #{tpu_custom_call.1} parent=5 // pred_check_branch
        %220 = sbr.rel (%p217) target = $region44
      $region43: #{tpu_custom_call.1} parent=5 // pred_region
        %s221 = ssub.s32 %s15, 1
        %s222 = smul.u32 32, %s20
        %p223 = scmp.lt.s32.totalorder %s222, 63
        %s224 = scalar_select %p223, %s222, 63
        %s225 = smul.addr %s224, 8
        %s226 = scalar_lea.vmem %s0, %s225
        %p227 = pneg %p41
        %p228 = pneg %p38
        %p229 = pneg %p62
        %p230 = pneg %p59
        %p231 = pneg %p83
        %p232 = pneg %p80
        %p233 = pneg %p104
        %p234 = pneg %p101
        %p235 = pneg %p125
        %p236 = pneg %p122
        %p237 = pneg %p146
        %p238 = pneg %p143
        %p239 = pneg %p172
        %p240 = pneg %p169
        %s241 = sand.u32 %s159, 1
        %s242 = scalar_lea.sflag [#allocation3], %s241
        %s243 = sand.u32 %s159, 1
        %s244 = smul.addr %s243, 256
        %s245 = scalar_lea.vmem [#allocation2], %s244
        %s246 = smul.u32 32, %s20
        %p247 = scmp.lt.s32.totalorder %s246, 63
        %s248 = scalar_select %p247, %s246, 63
        %s249 = smul.addr %s248, 8
        %s250 = scalar_lea.vmem %s0, %s249
        %s251 = smul.u32 32, %s20
        %s252 = smul.u32 32, %s20
        %v254 = vld [vmem:[%s250] sm:$0xff]
        %v255 = vld [vmem:[%s250 + $0x8] sm:$0xff]
        %v256 = vld [vmem:[%s250 + $0x10] sm:$0xff]
        %v257 = vld [vmem:[%s250 + $0x18] sm:$0xff]
        %v258 = vld [vmem:[%s250 + $0x20] sm:$0xff]
        %v259 = vld [vmem:[%s250 + $0x28] sm:$0xff]
        %v260 = vld [vmem:[%s250 + $0x30] sm:$0xff]
        %v261 = vld [vmem:[%s250 + $0x38] sm:$0xff]
        %v262 = vld [vmem:[%s250 + $0x40] sm:$0xff]
        %v263 = vld [vmem:[%s250 + $0x48] sm:$0xff]
        %v264 = vld [vmem:[%s250 + $0x50] sm:$0xff]
        %v265 = vld [vmem:[%s250 + $0x58] sm:$0xff]
        %v266 = vld [vmem:[%s250 + $0x60] sm:$0xff]
        %v267 = vld [vmem:[%s250 + $0x68] sm:$0xff]
        %v268 = vld [vmem:[%s250 + $0x70] sm:$0xff]
        %v269 = vld [vmem:[%s250 + $0x78] sm:$0xff]
        %v270 = vld [vmem:[%s250 + $0x80] sm:$0xff]
        %v271 = vld [vmem:[%s250 + $0x88] sm:$0xff]
        %v272 = vld [vmem:[%s250 + $0x90] sm:$0xff]
        %v273 = vld [vmem:[%s250 + $0x98] sm:$0xff]
        %v274 = vld [vmem:[%s250 + $0xa0] sm:$0xff]
        %v275 = vld [vmem:[%s250 + $0xa8] sm:$0xff]
        %v276 = vld [vmem:[%s250 + $0xb0] sm:$0xff]
        %v277 = vld [vmem:[%s250 + $0xb8] sm:$0xff]
        %v278 = vld [vmem:[%s250 + $0xc0] sm:$0xff]
        %v279 = vld [vmem:[%s250 + $0xc8] sm:$0xff]
        %v280 = vld [vmem:[%s250 + $0xd0] sm:$0xff]
        %v281 = vld [vmem:[%s250 + $0xd8] sm:$0xff]
        %v282 = vld [vmem:[%s250 + $0xe0] sm:$0xff]
        %v283 = vld [vmem:[%s250 + $0xe8] sm:$0xff]
        %v284 = vld [vmem:[%s250 + $0xf0] sm:$0xff]
        %v285 = vld [vmem:[%s250 + $0xf8] sm:$0xff]
        %v286 = vlaneseq
        %v287 = vand.u32 %v286, 127
        %288 = vset.pattern.permute.xlu0 0
        %289 = vperm.xlu0 %288, %v254
        %v290 = vpop.permute.xlu0 %289
        %291 = vset.pattern.permute.xlu0 0
        %292 = vperm.xlu0 %291, %v255
        %v293 = vpop.permute.xlu0 %292
        %294 = vset.pattern.permute.xlu0 0
        %295 = vperm.xlu0 %294, %v256
        %v296 = vpop.permute.xlu0 %295
        %297 = vset.pattern.permute.xlu0 0
        %298 = vperm.xlu0 %297, %v257
        %v299 = vpop.permute.xlu0 %298
        %300 = vset.pattern.permute.xlu0 0
        %301 = vperm.xlu0 %300, %v258
        %v302 = vpop.permute.xlu0 %301
        %303 = vset.pattern.permute.xlu0 0
        %304 = vperm.xlu0 %303, %v259
        %v305 = vpop.permute.xlu0 %304
        %306 = vset.pattern.permute.xlu0 0
        %307 = vperm.xlu0 %306, %v260
        %v308 = vpop.permute.xlu0 %307
        %309 = vset.pattern.permute.xlu0 0
        %310 = vperm.xlu0 %309, %v261
        %v311 = vpop.permute.xlu0 %310
        %312 = vset.pattern.permute.xlu0 0
        %313 = vperm.xlu0 %312, %v262
        %v314 = vpop.permute.xlu0 %313
        %315 = vset.pattern.permute.xlu0 0
        %316 = vperm.xlu0 %315, %v263
        %v317 = vpop.permute.xlu0 %316
        %318 = vset.pattern.permute.xlu0 0
        %319 = vperm.xlu0 %318, %v264
        %v320 = vpop.permute.xlu0 %319
        %321 = vset.pattern.permute.xlu0 0
        %322 = vperm.xlu0 %321, %v265
        %v323 = vpop.permute.xlu0 %322
        %324 = vset.pattern.permute.xlu0 0
        %325 = vperm.xlu0 %324, %v266
        %v326 = vpop.permute.xlu0 %325
        %327 = vset.pattern.permute.xlu0 0
        %328 = vperm.xlu0 %327, %v267
        %v329 = vpop.permute.xlu0 %328
        %330 = vset.pattern.permute.xlu0 0
        %331 = vperm.xlu0 %330, %v268
        %v332 = vpop.permute.xlu0 %331
        %333 = vset.pattern.permute.xlu0 0
        %334 = vperm.xlu0 %333, %v269
        %v335 = vpop.permute.xlu0 %334
        %336 = vset.pattern.permute.xlu0 0
        %337 = vperm.xlu0 %336, %v270
        %v338 = vpop.permute.xlu0 %337
        %339 = vset.pattern.permute.xlu0 0
        %340 = vperm.xlu0 %339, %v271
        %v341 = vpop.permute.xlu0 %340
        %342 = vset.pattern.permute.xlu0 0
        %343 = vperm.xlu0 %342, %v272
        %v344 = vpop.permute.xlu0 %343
        %345 = vset.pattern.permute.xlu0 0
        %346 = vperm.xlu0 %345, %v273
        %v347 = vpop.permute.xlu0 %346
        %348 = vset.pattern.permute.xlu0 0
        %349 = vperm.xlu0 %348, %v274
        %v350 = vpop.permute.xlu0 %349
        %351 = vset.pattern.permute.xlu0 0
        %352 = vperm.xlu0 %351, %v275
        %v353 = vpop.permute.xlu0 %352
        %354 = vset.pattern.permute.xlu0 0
        %355 = vperm.xlu0 %354, %v276
        %v356 = vpop.permute.xlu0 %355
        %357 = vset.pattern.permute.xlu0 0
        %358 = vperm.xlu0 %357, %v277
        %v359 = vpop.permute.xlu0 %358
        %360 = vset.pattern.permute.xlu0 0
        %361 = vperm.xlu0 %360, %v278
        %v362 = vpop.permute.xlu0 %361
        %363 = vset.pattern.permute.xlu0 0
        %364 = vperm.xlu0 %363, %v279
        %v365 = vpop.permute.xlu0 %364
        %366 = vset.pattern.permute.xlu0 0
        %367 = vperm.xlu0 %366, %v280
        %v368 = vpop.permute.xlu0 %367
        %369 = vset.pattern.permute.xlu0 0
        %370 = vperm.xlu0 %369, %v281
        %v371 = vpop.permute.xlu0 %370
        %372 = vset.pattern.permute.xlu0 0
        %373 = vperm.xlu0 %372, %v282
        %v374 = vpop.permute.xlu0 %373
        %375 = vset.pattern.permute.xlu0 0
        %376 = vperm.xlu0 %375, %v283
        %v377 = vpop.permute.xlu0 %376
        %378 = vset.pattern.permute.xlu0 0
        %379 = vperm.xlu0 %378, %v284
        %v380 = vpop.permute.xlu0 %379
        %381 = vset.pattern.permute.xlu0 0
        %382 = vperm.xlu0 %381, %v285
        %v383 = vpop.permute.xlu0 %382
        %vm384 = vcmp.eq.s32.totalorder %v290, %v287
        %vm385 = vcmp.eq.s32.totalorder %v293, %v287
        %vm386 = vcmp.eq.s32.totalorder %v296, %v287
        %vm387 = vcmp.eq.s32.totalorder %v299, %v287
        %vm388 = vcmp.eq.s32.totalorder %v302, %v287
        %vm389 = vcmp.eq.s32.totalorder %v305, %v287
        %vm390 = vcmp.eq.s32.totalorder %v308, %v287
        %vm391 = vcmp.eq.s32.totalorder %v311, %v287
        %vm392 = vcmp.eq.s32.totalorder %v314, %v287
        %vm393 = vcmp.eq.s32.totalorder %v317, %v287
        %vm394 = vcmp.eq.s32.totalorder %v320, %v287
        %vm395 = vcmp.eq.s32.totalorder %v323, %v287
        %vm396 = vcmp.eq.s32.totalorder %v326, %v287
        %vm397 = vcmp.eq.s32.totalorder %v329, %v287
        %vm398 = vcmp.eq.s32.totalorder %v332, %v287
        %vm399 = vcmp.eq.s32.totalorder %v335, %v287
        %vm400 = vcmp.eq.s32.totalorder %v338, %v287
        %vm401 = vcmp.eq.s32.totalorder %v341, %v287
        %vm402 = vcmp.eq.s32.totalorder %v344, %v287
        %vm403 = vcmp.eq.s32.totalorder %v347, %v287
        %vm404 = vcmp.eq.s32.totalorder %v350, %v287
        %vm405 = vcmp.eq.s32.totalorder %v353, %v287
        %vm406 = vcmp.eq.s32.totalorder %v356, %v287
        %vm407 = vcmp.eq.s32.totalorder %v359, %v287
        %vm408 = vcmp.eq.s32.totalorder %v362, %v287
        %vm409 = vcmp.eq.s32.totalorder %v365, %v287
        %vm410 = vcmp.eq.s32.totalorder %v368, %v287
        %vm411 = vcmp.eq.s32.totalorder %v371, %v287
        %vm412 = vcmp.eq.s32.totalorder %v374, %v287
        %vm413 = vcmp.eq.s32.totalorder %v377, %v287
        %vm414 = vcmp.eq.s32.totalorder %v380, %v287
        %vm415 = vcmp.eq.s32.totalorder %v383, %v287
        %v416 = vsel %vm384, 1, 0
        %v417 = vsel %vm385, 1, 0
        %v418 = vsel %vm386, 1, 0
        %v419 = vsel %vm387, 1, 0
        %v420 = vsel %vm388, 1, 0
        %v421 = vsel %vm389, 1, 0
        %v422 = vsel %vm390, 1, 0
        %v423 = vsel %vm391, 1, 0
        %v424 = vsel %vm392, 1, 0
        %v425 = vsel %vm393, 1, 0
        %v426 = vsel %vm394, 1, 0
        %v427 = vsel %vm395, 1, 0
        %v428 = vsel %vm396, 1, 0
        %v429 = vsel %vm397, 1, 0
        %v430 = vsel %vm398, 1, 0
        %v431 = vsel %vm399, 1, 0
        %v432 = vsel %vm400, 1, 0
        %v433 = vsel %vm401, 1, 0
        %v434 = vsel %vm402, 1, 0
        %v435 = vsel %vm403, 1, 0
        %v436 = vsel %vm404, 1, 0
        %v437 = vsel %vm405, 1, 0
        %v438 = vsel %vm406, 1, 0
        %v439 = vsel %vm407, 1, 0
        %v440 = vsel %vm408, 1, 0
        %v441 = vsel %vm409, 1, 0
        %v442 = vsel %vm410, 1, 0
        %v443 = vsel %vm411, 1, 0
        %v444 = vsel %vm412, 1, 0
        %v445 = vsel %vm413, 1, 0
        %v446 = vsel %vm414, 1, 0
        %v447 = vsel %vm415, 1, 0
        %v448 = vcvt.s32.f32 %v416
        %v449 = vcvt.s32.f32 %v417
        %v450 = vcvt.s32.f32 %v418
        %v451 = vcvt.s32.f32 %v419
        %v452 = vcvt.s32.f32 %v420
        %v453 = vcvt.s32.f32 %v421
        %v454 = vcvt.s32.f32 %v422
        %v455 = vcvt.s32.f32 %v423
        %v456 = vcvt.s32.f32 %v424
        %v457 = vcvt.s32.f32 %v425
        %v458 = vcvt.s32.f32 %v426
        %v459 = vcvt.s32.f32 %v427
        %v460 = vcvt.s32.f32 %v428
        %v461 = vcvt.s32.f32 %v429
        %v462 = vcvt.s32.f32 %v430
        %v463 = vcvt.s32.f32 %v431
        %v464 = vcvt.s32.f32 %v432
        %v465 = vcvt.s32.f32 %v433
        %v466 = vcvt.s32.f32 %v434
        %v467 = vcvt.s32.f32 %v435
        %v468 = vcvt.s32.f32 %v436
        %v469 = vcvt.s32.f32 %v437
        %v470 = vcvt.s32.f32 %v438
        %v471 = vcvt.s32.f32 %v439
        %v472 = vcvt.s32.f32 %v440
        %v473 = vcvt.s32.f32 %v441
        %v474 = vcvt.s32.f32 %v442
        %v475 = vcvt.s32.f32 %v443
        %v476 = vcvt.s32.f32 %v444
        %v477 = vcvt.s32.f32 %v445
        %v478 = vcvt.s32.f32 %v446
        %v479 = vcvt.s32.f32 %v447
        %v480 = vpack.c.bf16 %v449, %v448
        %v481 = vpack.c.bf16 %v451, %v450
        %v482 = vpack.c.bf16 %v453, %v452
        %v483 = vpack.c.bf16 %v455, %v454
        %v484 = vpack.c.bf16 %v457, %v456
        %v485 = vpack.c.bf16 %v459, %v458
        %v486 = vpack.c.bf16 %v461, %v460
        %v487 = vpack.c.bf16 %v463, %v462
        %v488 = vpack.c.bf16 %v465, %v464
        %v489 = vpack.c.bf16 %v467, %v466
        %v490 = vpack.c.bf16 %v469, %v468
        %v491 = vpack.c.bf16 %v471, %v470
        %v492 = vpack.c.bf16 %v473, %v472
        %v493 = vpack.c.bf16 %v475, %v474
        %v494 = vpack.c.bf16 %v477, %v476
        %v495 = vpack.c.bf16 %v479, %v478
        %v496 = vld [vmem:[%s1] sm:$0xf]
        %v497 = vld [vmem:[%s1 + $0x4] sm:$0xf]
        %v498 = vld [vmem:[%s1 + $0x8] sm:$0xf]
        %v499 = vld [vmem:[%s1 + $0xc] sm:$0xf]
        %v500 = vld [vmem:[%s1 + $0x10] sm:$0xf]
        %v501 = vld [vmem:[%s1 + $0x14] sm:$0xf]
        %v502 = vld [vmem:[%s1 + $0x18] sm:$0xf]
        %v503 = vld [vmem:[%s1 + $0x1c] sm:$0xf]
        %v512 = vunpack.c.l.b16 %v496
        %v513 = vunpack.c.l.b16 %v497
        %v514 = vunpack.c.l.b16 %v498
        %v515 = vunpack.c.l.b16 %v499
        %v516 = vunpack.c.l.b16 %v500
        %v517 = vunpack.c.l.b16 %v501
        %v518 = vunpack.c.l.b16 %v502
        %v519 = vunpack.c.l.b16 %v503
        %v520 = vpack.c.b16 %v513, %v512
        %v521 = vpack.c.b16 %v515, %v514
        %v522 = vpack.c.b16 %v517, %v516
        %v523 = vpack.c.b16 %v519, %v518
        %vm528 = vcmask 523264
        %v530 = vsel %vm528, %v480, 0
        %v533 = vsel %vm528, %v481, 0
        %v536 = vsel %vm528, %v482, 0
        %v539 = vsel %vm528, %v483, 0
        %v542 = vsel %vm528, %v484, 0
        %v545 = vsel %vm528, %v485, 0
        %v548 = vsel %vm528, %v486, 0
        %v551 = vsel %vm528, %v487, 0
        %v554 = vsel %vm528, %v488, 0
        %v557 = vsel %vm528, %v489, 0
        %v560 = vsel %vm528, %v490, 0
        %v563 = vsel %vm528, %v491, 0
        %v566 = vsel %vm528, %v492, 0
        %v569 = vsel %vm528, %v493, 0
        %v572 = vsel %vm528, %v494, 0
        %v575 = vsel %vm528, %v495, 0
        %577 = vmatprep.subr.bf16.mxu0 0
        %578 = vmatpush1.bf16.msra.mxu0 %v520
        %579 = vmatprep.subr.bf16.mxu0 0
        %580 = vmatpush1.bf16.msra.mxu0 %v521
        %581 = vmatprep.subr.bf16.mxu0 0
        %582 = vmatpush1.bf16.msra.mxu0 %v522
        %583 = vmatprep.subr.bf16.mxu0 0
        %584 = vmatpush1.bf16.msra.mxu0 %v523
        %585 = vmatprep.subr.bf16.mxu0 0
        %586 = vmatpush1.bf16.msra.mxu0 0
        %587 = vmatprep.subr.bf16.mxu0 0
        %588 = vmatpush1.bf16.msra.mxu0 0
        %589 = vmatprep.subr.bf16.mxu0 0
        %590 = vmatpush1.bf16.msra.mxu0 0
        %591 = vmatprep.subr.bf16.mxu0 0
        %592 = vmatpush1.bf16.msra.mxu0 0
        %593 = vmatprep.subr.bf16.mxu0 0
        %594 = vmatpush1.bf16.msra.mxu0 0
        %595 = vmatprep.subr.bf16.mxu0 0
        %596 = vmatpush1.bf16.msra.mxu0 0
        %597 = vmatprep.subr.bf16.mxu0 0
        %598 = vmatpush1.bf16.msra.mxu0 0
        %599 = vmatprep.subr.bf16.mxu0 0
        %600 = vmatpush1.bf16.msra.mxu0 0
        %601 = vmatprep.subr.bf16.mxu0 0
        %602 = vmatpush1.bf16.msra.mxu0 0
        %603 = vmatprep.subr.bf16.mxu0 0
        %604 = vmatpush1.bf16.msra.mxu0 0
        %605 = vmatprep.subr.bf16.mxu0 0
        %606 = vmatpush1.bf16.msra.mxu0 0
        %607 = vmatprep.subr.bf16.mxu0 0
        %608 = vmatpush1.bf16.msra.mxu0 0
        %609 = vmatprep.mubr.bf16.mxu0 0
        %610 = vmatmul.mubr.bf16.gmra.mrb[0].mxu0 %v530
        %v611 = vpop.f32.mrb[0].mxu0
        %v612 = vadd.f32 0.0, %v611
        %v613 = vpop.f32.mrb[0].mxu0
        %v614 = vpop.f32.mrb[0].mxu0
        %v615 = vadd.f32 0.0, %v614
        %v616 = vpop.f32.mrb[0].mxu0
        %617 = vmatprep.mubr.bf16.mxu0 0
        %618 = vmatmul.mubr.bf16.gmra.mrb[0].mxu0 %v533
        %v619 = vpop.f32.mrb[0].mxu0
        %v620 = vadd.f32 0.0, %v619
        %v621 = vpop.f32.mrb[0].mxu0
        %v622 = vpop.f32.mrb[0].mxu0
        %v623 = vadd.f32 0.0, %v622
        %v624 = vpop.f32.mrb[0].mxu0
        %625 = vmatprep.mubr.bf16.mxu0 0
        %626 = vmatmul.mubr.bf16.gmra.mrb[0].mxu0 %v536
        %v627 = vpop.f32.mrb[0].mxu0
        %v628 = vadd.f32 0.0, %v627
        %v629 = vpop.f32.mrb[0].mxu0
        %v630 = vpop.f32.mrb[0].mxu0
        %v631 = vadd.f32 0.0, %v630
        %v632 = vpop.f32.mrb[0].mxu0
        %633 = vmatprep.mubr.bf16.mxu0 0
        %634 = vmatmul.mubr.bf16.gmra.mrb[0].mxu0 %v539
        %v635 = vpop.f32.mrb[0].mxu0
        %v636 = vadd.f32 0.0, %v635
        %v637 = vpop.f32.mrb[0].mxu0
        %v638 = vpop.f32.mrb[0].mxu0
        %v639 = vadd.f32 0.0, %v638
        %v640 = vpop.f32.mrb[0].mxu0
        %641 = vmatprep.mubr.bf16.mxu0 0
        %642 = vmatmul.mubr.bf16.gmra.mrb[0].mxu0 %v542
        %v643 = vpop.f32.mrb[0].mxu0
        %v644 = vadd.f32 0.0, %v643
        %v645 = vpop.f32.mrb[0].mxu0
        %v646 = vpop.f32.mrb[0].mxu0
        %v647 = vadd.f32 0.0, %v646
        %v648 = vpop.f32.mrb[0].mxu0
        %649 = vmatprep.mubr.bf16.mxu0 0
        %650 = vmatmul.mubr.bf16.gmra.mrb[0].mxu0 %v545
        %v651 = vpop.f32.mrb[0].mxu0
        %v652 = vadd.f32 0.0, %v651
        %v653 = vpop.f32.mrb[0].mxu0
        %v654 = vpop.f32.mrb[0].mxu0
        %v655 = vadd.f32 0.0, %v654
        %v656 = vpop.f32.mrb[0].mxu0
        %657 = vmatprep.mubr.bf16.mxu0 0
        %658 = vmatmul.mubr.bf16.gmra.mrb[0].mxu0 %v548
        %v659 = vpop.f32.mrb[0].mxu0
        %v660 = vadd.f32 0.0, %v659
        %v661 = vpop.f32.mrb[0].mxu0
        %v662 = vpop.f32.mrb[0].mxu0
        %v663 = vadd.f32 0.0, %v662
        %v664 = vpop.f32.mrb[0].mxu0
        %665 = vmatprep.mubr.bf16.mxu0 0
        %666 = vmatmul.mubr.bf16.gmra.mrb[0].mxu0 %v551
        %v667 = vpop.f32.mrb[0].mxu0
        %v668 = vadd.f32 0.0, %v667
        %v669 = vpop.f32.mrb[0].mxu0
        %v670 = vpop.f32.mrb[0].mxu0
        %v671 = vadd.f32 0.0, %v670
        %v672 = vpop.f32.mrb[0].mxu0
        %673 = vmatprep.mubr.bf16.mxu0 0
        %674 = vmatmul.mubr.bf16.gmra.mrb[0].mxu0 %v554
        %v675 = vpop.f32.mrb[0].mxu0
        %v676 = vadd.f32 0.0, %v675
        %v677 = vpop.f32.mrb[0].mxu0
        %v678 = vpop.f32.mrb[0].mxu0
        %v679 = vadd.f32 0.0, %v678
        %v680 = vpop.f32.mrb[0].mxu0
        %681 = vmatprep.mubr.bf16.mxu0 0
        %682 = vmatmul.mubr.bf16.gmra.mrb[0].mxu0 %v557
        %v683 = vpop.f32.mrb[0].mxu0
        %v684 = vadd.f32 0.0, %v683
        %v685 = vpop.f32.mrb[0].mxu0
        %v686 = vpop.f32.mrb[0].mxu0
        %v687 = vadd.f32 0.0, %v686
        %v688 = vpop.f32.mrb[0].mxu0
        %689 = vmatprep.mubr.bf16.mxu0 0
        %690 = vmatmul.mubr.bf16.gmra.mrb[0].mxu0 %v560
        %v691 = vpop.f32.mrb[0].mxu0
        %v692 = vadd.f32 0.0, %v691
        %v693 = vpop.f32.mrb[0].mxu0
        %v694 = vpop.f32.mrb[0].mxu0
        %v695 = vadd.f32 0.0, %v694
        %v696 = vpop.f32.mrb[0].mxu0
        %697 = vmatprep.mubr.bf16.mxu0 0
        %698 = vmatmul.mubr.bf16.gmra.mrb[0].mxu0 %v563
        %v699 = vpop.f32.mrb[0].mxu0
        %v700 = vadd.f32 0.0, %v699
        %v701 = vpop.f32.mrb[0].mxu0
        %v702 = vpop.f32.mrb[0].mxu0
        %v703 = vadd.f32 0.0, %v702
        %v704 = vpop.f32.mrb[0].mxu0
        %705 = vmatprep.mubr.bf16.mxu0 0
        %706 = vmatmul.mubr.bf16.gmra.mrb[0].mxu0 %v566
        %v707 = vpop.f32.mrb[0].mxu0
        %v708 = vadd.f32 0.0, %v707
        %v709 = vpop.f32.mrb[0].mxu0
        %v710 = vpop.f32.mrb[0].mxu0
        %v711 = vadd.f32 0.0, %v710
        %v712 = vpop.f32.mrb[0].mxu0
        %713 = vmatprep.mubr.bf16.mxu0 0
        %714 = vmatmul.mubr.bf16.gmra.mrb[0].mxu0 %v569
        %v715 = vpop.f32.mrb[0].mxu0
        %v716 = vadd.f32 0.0, %v715
        %v717 = vpop.f32.mrb[0].mxu0
        %v718 = vpop.f32.mrb[0].mxu0
        %v719 = vadd.f32 0.0, %v718
        %v720 = vpop.f32.mrb[0].mxu0
        %721 = vmatprep.mubr.bf16.mxu0 0
        %722 = vmatmul.mubr.bf16.gmra.mrb[0].mxu0 %v572
        %v723 = vpop.f32.mrb[0].mxu0
        %v724 = vadd.f32 0.0, %v723
        %v725 = vpop.f32.mrb[0].mxu0
        %v726 = vpop.f32.mrb[0].mxu0
        %v727 = vadd.f32 0.0, %v726
        %v728 = vpop.f32.mrb[0].mxu0
        %729 = vmatprep.mubr.bf16.mxu0 0
        %730 = vmatmul.mubr.bf16.gmra.mrb[0].mxu0 %v575
        %v731 = vpop.f32.mrb[0].mxu0
        %v732 = vadd.f32 0.0, %v731
        %v733 = vpop.f32.mrb[0].mxu0
        %v734 = vpop.f32.mrb[0].mxu0
        %v735 = vadd.f32 0.0, %v734
        %v736 = vpop.f32.mrb[0].mxu0
        %737 = vdwg.mxu0
        %v738 = vpack.c.bf16 %v615, %v612
        %v739 = vpack.c.bf16 %v623, %v620
        %v740 = vpack.c.bf16 %v631, %v628
        %v741 = vpack.c.bf16 %v639, %v636
        %v742 = vpack.c.bf16 %v647, %v644
        %v743 = vpack.c.bf16 %v655, %v652
        %v744 = vpack.c.bf16 %v663, %v660
        %v745 = vpack.c.bf16 %v671, %v668
        %v746 = vpack.c.bf16 %v679, %v676
        %v747 = vpack.c.bf16 %v687, %v684
        %v748 = vpack.c.bf16 %v695, %v692
        %v749 = vpack.c.bf16 %v703, %v700
        %v750 = vpack.c.bf16 %v711, %v708
        %v751 = vpack.c.bf16 %v719, %v716
        %v752 = vpack.c.bf16 %v727, %v724
        %v753 = vpack.c.bf16 %v735, %v732
        %v754 = vld [vmem:[%s2] sm:$0xf]
        %v755 = vld [vmem:[%s2 + $0x4] sm:$0xf]
        %756 = vset.pattern.permute.xlu0 1
        %757 = vperm.xlu0 %756, %v254
        %v758 = vpop.permute.xlu0 %757
        %759 = vset.pattern.permute.xlu0 1
        %760 = vperm.xlu0 %759, %v255
        %v761 = vpop.permute.xlu0 %760
        %762 = vset.pattern.permute.xlu0 1
        %763 = vperm.xlu0 %762, %v256
        %v764 = vpop.permute.xlu0 %763
        %765 = vset.pattern.permute.xlu0 1
        %766 = vperm.xlu0 %765, %v257
        %v767 = vpop.permute.xlu0 %766
        %768 = vset.pattern.permute.xlu0 1
        %769 = vperm.xlu0 %768, %v258
        %v770 = vpop.permute.xlu0 %769
        %771 = vset.pattern.permute.xlu0 1
        %772 = vperm.xlu0 %771, %v259
        %v773 = vpop.permute.xlu0 %772
        %774 = vset.pattern.permute.xlu0 1
        %775 = vperm.xlu0 %774, %v260
        %v776 = vpop.permute.xlu0 %775
        %777 = vset.pattern.permute.xlu0 1
        %778 = vperm.xlu0 %777, %v261
        %v779 = vpop.permute.xlu0 %778
        %780 = vset.pattern.permute.xlu0 1
        %781 = vperm.xlu0 %780, %v262
        %v782 = vpop.permute.xlu0 %781
        %783 = vset.pattern.permute.xlu0 1
        %784 = vperm.xlu0 %783, %v263
        %v785 = vpop.permute.xlu0 %784
        %786 = vset.pattern.permute.xlu0 1
        %787 = vperm.xlu0 %786, %v264
        %v788 = vpop.permute.xlu0 %787
        %789 = vset.pattern.permute.xlu0 1
        %790 = vperm.xlu0 %789, %v265
        %v791 = vpop.permute.xlu0 %790
        %792 = vset.pattern.permute.xlu0 1
        %793 = vperm.xlu0 %792, %v266
        %v794 = vpop.permute.xlu0 %793
        %795 = vset.pattern.permute.xlu0 1
        %796 = vperm.xlu0 %795, %v267
        %v797 = vpop.permute.xlu0 %796
        %798 = vset.pattern.permute.xlu0 1
        %799 = vperm.xlu0 %798, %v268
        %v800 = vpop.permute.xlu0 %799
        %801 = vset.pattern.permute.xlu0 1
        %802 = vperm.xlu0 %801, %v269
        %v803 = vpop.permute.xlu0 %802
        %804 = vset.pattern.permute.xlu0 1
        %805 = vperm.xlu0 %804, %v270
        %v806 = vpop.permute.xlu0 %805
        %807 = vset.pattern.permute.xlu0 1
        %808 = vperm.xlu0 %807, %v271
        %v809 = vpop.permute.xlu0 %808
        %810 = vset.pattern.permute.xlu0 1
        %811 = vperm.xlu0 %810, %v272
        %v812 = vpop.permute.xlu0 %811
        %813 = vset.pattern.permute.xlu0 1
        %814 = vperm.xlu0 %813, %v273
        %v815 = vpop.permute.xlu0 %814
        %816 = vset.pattern.permute.xlu0 1
        %817 = vperm.xlu0 %816, %v274
        %v818 = vpop.permute.xlu0 %817
        %819 = vset.pattern.permute.xlu0 1
        %820 = vperm.xlu0 %819, %v275
        %v821 = vpop.permute.xlu0 %820
        %822 = vset.pattern.permute.xlu0 1
        %823 = vperm.xlu0 %822, %v276
        %v824 = vpop.permute.xlu0 %823
        %825 = vset.pattern.permute.xlu0 1
        %826 = vperm.xlu0 %825, %v277
        %v827 = vpop.permute.xlu0 %826
        %828 = vset.pattern.permute.xlu0 1
        %829 = vperm.xlu0 %828, %v278
        %v830 = vpop.permute.xlu0 %829
        %831 = vset.pattern.permute.xlu0 1
        %832 = vperm.xlu0 %831, %v279
        %v833 = vpop.permute.xlu0 %832
        %834 = vset.pattern.permute.xlu0 1
        %835 = vperm.xlu0 %834, %v280
        %v836 = vpop.permute.xlu0 %835
        %837 = vset.pattern.permute.xlu0 1
        %838 = vperm.xlu0 %837, %v281
        %v839 = vpop.permute.xlu0 %838
        %840 = vset.pattern.permute.xlu0 1
        %841 = vperm.xlu0 %840, %v282
        %v842 = vpop.permute.xlu0 %841
        %843 = vset.pattern.permute.xlu0 1
        %844 = vperm.xlu0 %843, %v283
        %v845 = vpop.permute.xlu0 %844
        %846 = vset.pattern.permute.xlu0 1
        %847 = vperm.xlu0 %846, %v284
        %v848 = vpop.permute.xlu0 %847
        %849 = vset.pattern.permute.xlu0 1
        %850 = vperm.xlu0 %849, %v285
        %v851 = vpop.permute.xlu0 %850
        %vm852 = vcmp.eq.s32.totalorder %v758, %v287
        %vm853 = vcmp.eq.s32.totalorder %v761, %v287
        %vm854 = vcmp.eq.s32.totalorder %v764, %v287
        %vm855 = vcmp.eq.s32.totalorder %v767, %v287
        %vm856 = vcmp.eq.s32.totalorder %v770, %v287
        %vm857 = vcmp.eq.s32.totalorder %v773, %v287
        %vm858 = vcmp.eq.s32.totalorder %v776, %v287
        %vm859 = vcmp.eq.s32.totalorder %v779, %v287
        %vm860 = vcmp.eq.s32.totalorder %v782, %v287
        %vm861 = vcmp.eq.s32.totalorder %v785, %v287
        %vm862 = vcmp.eq.s32.totalorder %v788, %v287
        %vm863 = vcmp.eq.s32.totalorder %v791, %v287
        %vm864 = vcmp.eq.s32.totalorder %v794, %v287
        %vm865 = vcmp.eq.s32.totalorder %v797, %v287
        %vm866 = vcmp.eq.s32.totalorder %v800, %v287
        %vm867 = vcmp.eq.s32.totalorder %v803, %v287
        %vm868 = vcmp.eq.s32.totalorder %v806, %v287
        %vm869 = vcmp.eq.s32.totalorder %v809, %v287
        %vm870 = vcmp.eq.s32.totalorder %v812, %v287
        %vm871 = vcmp.eq.s32.totalorder %v815, %v287
        %vm872 = vcmp.eq.s32.totalorder %v818, %v287
        %vm873 = vcmp.eq.s32.totalorder %v821, %v287
        %vm874 = vcmp.eq.s32.totalorder %v824, %v287
        %vm875 = vcmp.eq.s32.totalorder %v827, %v287
        %vm876 = vcmp.eq.s32.totalorder %v830, %v287
        %vm877 = vcmp.eq.s32.totalorder %v833, %v287
        %vm878 = vcmp.eq.s32.totalorder %v836, %v287
        %vm879 = vcmp.eq.s32.totalorder %v839, %v287
        %vm880 = vcmp.eq.s32.totalorder %v842, %v287
        %vm881 = vcmp.eq.s32.totalorder %v845, %v287
        %vm882 = vcmp.eq.s32.totalorder %v848, %v287
        %vm883 = vcmp.eq.s32.totalorder %v851, %v287
        %v884 = vsel %vm852, 1, 0
        %v885 = vsel %vm853, 1, 0
        %v886 = vsel %vm854, 1, 0
        %v887 = vsel %vm855, 1, 0
        %v888 = vsel %vm856, 1, 0
        %v889 = vsel %vm857, 1, 0
        %v890 = vsel %vm858, 1, 0
        %v891 = vsel %vm859, 1, 0
        %v892 = vsel %vm860, 1, 0
        %v893 = vsel %vm861, 1, 0
        %v894 = vsel %vm862, 1, 0
        %v895 = vsel %vm863, 1, 0
        %v896 = vsel %vm864, 1, 0
        %v897 = vsel %vm865, 1, 0
        %v898 = vsel %vm866, 1, 0
        %v899 = vsel %vm867, 1, 0
        %v900 = vsel %vm868, 1, 0
        %v901 = vsel %vm869, 1, 0
        %v902 = vsel %vm870, 1, 0
        %v903 = vsel %vm871, 1, 0
        %v904 = vsel %vm872, 1, 0
        %v905 = vsel %vm873, 1, 0
        %v906 = vsel %vm874, 1, 0
        %v907 = vsel %vm875, 1, 0
        %v908 = vsel %vm876, 1, 0
        %v909 = vsel %vm877, 1, 0
        %v910 = vsel %vm878, 1, 0
        %v911 = vsel %vm879, 1, 0
        %v912 = vsel %vm880, 1, 0
        %v913 = vsel %vm881, 1, 0
        %v914 = vsel %vm882, 1, 0
        %v915 = vsel %vm883, 1, 0
        %v916 = vcvt.s32.f32 %v884
        %v917 = vcvt.s32.f32 %v885
        %v918 = vcvt.s32.f32 %v886
        %v919 = vcvt.s32.f32 %v887
        %v920 = vcvt.s32.f32 %v888
        %v921 = vcvt.s32.f32 %v889
        %v922 = vcvt.s32.f32 %v890
        %v923 = vcvt.s32.f32 %v891
        %v924 = vcvt.s32.f32 %v892
        %v925 = vcvt.s32.f32 %v893
        %v926 = vcvt.s32.f32 %v894
        %v927 = vcvt.s32.f32 %v895
        %v928 = vcvt.s32.f32 %v896
        %v929 = vcvt.s32.f32 %v897
        %v930 = vcvt.s32.f32 %v898
        %v931 = vcvt.s32.f32 %v899
        %v932 = vcvt.s32.f32 %v900
        %v933 = vcvt.s32.f32 %v901
        %v934 = vcvt.s32.f32 %v902
        %v935 = vcvt.s32.f32 %v903
        %v936 = vcvt.s32.f32 %v904
        %v937 = vcvt.s32.f32 %v905
        %v938 = vcvt.s32.f32 %v906
        %v939 = vcvt.s32.f32 %v907
        %v940 = vcvt.s32.f32 %v908
        %v941 = vcvt.s32.f32 %v909
        %v942 = vcvt.s32.f32 %v910
        %v943 = vcvt.s32.f32 %v911
        %v944 = vcvt.s32.f32 %v912
        %v945 = vcvt.s32.f32 %v913
        %v946 = vcvt.s32.f32 %v914
        %v947 = vcvt.s32.f32 %v915
        %v948 = vpack.c.bf16 %v917, %v916
        %v949 = vpack.c.bf16 %v919, %v918
        %v950 = vpack.c.bf16 %v921, %v920
        %v951 = vpack.c.bf16 %v923, %v922
        %v952 = vpack.c.bf16 %v925, %v924
        %v953 = vpack.c.bf16 %v927, %v926
        %v954 = vpack.c.bf16 %v929, %v928
        %v955 = vpack.c.bf16 %v931, %v930
        %v956 = vpack.c.bf16 %v933, %v932
        %v957 = vpack.c.bf16 %v935, %v934
        %v958 = vpack.c.bf16 %v937, %v936
        %v959 = vpack.c.bf16 %v939, %v938
        %v960 = vpack.c.bf16 %v941, %v940
        %v961 = vpack.c.bf16 %v943, %v942
        %v962 = vpack.c.bf16 %v945, %v944
        %v963 = vpack.c.bf16 %v947, %v946
        %v965 = vsel %vm528, %v948, 0
        %v968 = vsel %vm528, %v949, 0
        %v971 = vsel %vm528, %v950, 0
        %v974 = vsel %vm528, %v951, 0
        %v977 = vsel %vm528, %v952, 0
        %v980 = vsel %vm528, %v953, 0
        %v983 = vsel %vm528, %v954, 0
        %v986 = vsel %vm528, %v955, 0
        %v989 = vsel %vm528, %v956, 0
        %v992 = vsel %vm528, %v957, 0
        %v995 = vsel %vm528, %v958, 0
        %v998 = vsel %vm528, %v959, 0
        %v1001 = vsel %vm528, %v960, 0
        %v1004 = vsel %vm528, %v961, 0
        %v1007 = vsel %vm528, %v962, 0
        %v1010 = vsel %vm528, %v963, 0
        %1012 = vmatprep.subr.bf16.mxu0 0
        %1013 = vmatpush1.bf16.msra.mxu0 %v520
        %1014 = vmatprep.subr.bf16.mxu0 0
        %1015 = vmatpush1.bf16.msra.mxu0 %v521
        %1016 = vmatprep.subr.bf16.mxu0 0
        %1017 = vmatpush1.bf16.msra.mxu0 %v522
        %1018 = vmatprep.subr.bf16.mxu0 0
        %1019 = vmatpush1.bf16.msra.mxu0 %v523
        %1020 = vmatprep.subr.bf16.mxu0 0
        %1021 = vmatpush1.bf16.msra.mxu0 0
        %1022 = vmatprep.subr.bf16.mxu0 0
        %1023 = vmatpush1.bf16.msra.mxu0 0
        %1024 = vmatprep.subr.bf16.mxu0 0
        %1025 = vmatpush1.bf16.msra.mxu0 0
        %1026 = vmatprep.subr.bf16.mxu0 0
        %1027 = vmatpush1.bf16.msra.mxu0 0
        %1028 = vmatprep.subr.bf16.mxu0 0
        %1029 = vmatpush1.bf16.msra.mxu0 0
        %1030 = vmatprep.subr.bf16.mxu0 0
        %1031 = vmatpush1.bf16.msra.mxu0 0
        %1032 = vmatprep.subr.bf16.mxu0 0
        %1033 = vmatpush1.bf16.msra.mxu0 0
        %1034 = vmatprep.subr.bf16.mxu0 0
        %1035 = vmatpush1.bf16.msra.mxu0 0
        %1036 = vmatprep.subr.bf16.mxu0 0
        %1037 = vmatpush1.bf16.msra.mxu0 0
        %1038 = vmatprep.subr.bf16.mxu0 0
        %1039 = vmatpush1.bf16.msra.mxu0 0
        %1040 = vmatprep.subr.bf16.mxu0 0
        %1041 = vmatpush1.bf16.msra.mxu0 0
        %1042 = vmatprep.subr.bf16.mxu0 0
        %1043 = vmatpush1.bf16.msra.mxu0 0
        %1044 = vmatprep.mubr.bf16.mxu0 0
        %1045 = vmatmul.mubr.bf16.gmra.mrb[0].mxu0 %v965
        %v1046 = vpop.f32.mrb[0].mxu0
        %v1047 = vadd.f32 0.0, %v1046
        %v1048 = vpop.f32.mrb[0].mxu0
        %v1049 = vpop.f32.mrb[0].mxu0
        %v1050 = vadd.f32 0.0, %v1049
        %v1051 = vpop.f32.mrb[0].mxu0
        %1052 = vmatprep.mubr.bf16.mxu0 0
        %1053 = vmatmul.mubr.bf16.gmra.mrb[0].mxu0 %v968
        %v1054 = vpop.f32.mrb[0].mxu0
        %v1055 = vadd.f32 0.0, %v1054
        %v1056 = vpop.f32.mrb[0].mxu0
        %v1057 = vpop.f32.mrb[0].mxu0
        %v1058 = vadd.f32 0.0, %v1057
        %v1059 = vpop.f32.mrb[0].mxu0
        %1060 = vmatprep.mubr.bf16.mxu0 0
        %1061 = vmatmul.mubr.bf16.gmra.mrb[0].mxu0 %v971
        %v1062 = vpop.f32.mrb[0].mxu0
        %v1063 = vadd.f32 0.0, %v1062
        %v1064 = vpop.f32.mrb[0].mxu0
        %v1065 = vpop.f32.mrb[0].mxu0
        %v1066 = vadd.f32 0.0, %v1065
        %v1067 = vpop.f32.mrb[0].mxu0
        %1068 = vmatprep.mubr.bf16.mxu0 0
        %1069 = vmatmul.mubr.bf16.gmra.mrb[0].mxu0 %v974
        %v1070 = vpop.f32.mrb[0].mxu0
        %v1071 = vadd.f32 0.0, %v1070
        %v1072 = vpop.f32.mrb[0].mxu0
        %v1073 = vpop.f32.mrb[0].mxu0
        %v1074 = vadd.f32 0.0, %v1073
        %v1075 = vpop.f32.mrb[0].mxu0
        %1076 = vmatprep.mubr.bf16.mxu0 0
        %1077 = vmatmul.mubr.bf16.gmra.mrb[0].mxu0 %v977
        %v1078 = vpop.f32.mrb[0].mxu0
        %v1079 = vadd.f32 0.0, %v1078
        %v1080 = vpop.f32.mrb[0].mxu0
        %v1081 = vpop.f32.mrb[0].mxu0
        %v1082 = vadd.f32 0.0, %v1081
        %v1083 = vpop.f32.mrb[0].mxu0
        %1084 = vmatprep.mubr.bf16.mxu0 0
        %1085 = vmatmul.mubr.bf16.gmra.mrb[0].mxu0 %v980
        %v1086 = vpop.f32.mrb[0].mxu0
        %v1087 = vadd.f32 0.0, %v1086
        %v1088 = vpop.f32.mrb[0].mxu0
        %v1089 = vpop.f32.mrb[0].mxu0
        %v1090 = vadd.f32 0.0, %v1089
        %v1091 = vpop.f32.mrb[0].mxu0
        %1092 = vmatprep.mubr.bf16.mxu0 0
        %1093 = vmatmul.mubr.bf16.gmra.mrb[0].mxu0 %v983
        %v1094 = vpop.f32.mrb[0].mxu0
        %v1095 = vadd.f32 0.0, %v1094
        %v1096 = vpop.f32.mrb[0].mxu0
        %v1097 = vpop.f32.mrb[0].mxu0
        %v1098 = vadd.f32 0.0, %v1097
        %v1099 = vpop.f32.mrb[0].mxu0
        %1100 = vmatprep.mubr.bf16.mxu0 0
        %1101 = vmatmul.mubr.bf16.gmra.mrb[0].mxu0 %v986
        %v1102 = vpop.f32.mrb[0].mxu0
        %v1103 = vadd.f32 0.0, %v1102
        %v1104 = vpop.f32.mrb[0].mxu0
        %v1105 = vpop.f32.mrb[0].mxu0
        %v1106 = vadd.f32 0.0, %v1105
        %v1107 = vpop.f32.mrb[0].mxu0
        %1108 = vmatprep.mubr.bf16.mxu0 0
        %1109 = vmatmul.mubr.bf16.gmra.mrb[0].mxu0 %v989
        %v1110 = vpop.f32.mrb[0].mxu0
        %v1111 = vadd.f32 0.0, %v1110
        %v1112 = vpop.f32.mrb[0].mxu0
        %v1113 = vpop.f32.mrb[0].mxu0
        %v1114 = vadd.f32 0.0, %v1113
        %v1115 = vpop.f32.mrb[0].mxu0
        %1116 = vmatprep.mubr.bf16.mxu0 0
        %1117 = vmatmul.mubr.bf16.gmra.mrb[0].mxu0 %v992
        %v1118 = vpop.f32.mrb[0].mxu0
        %v1119 = vadd.f32 0.0, %v1118
        %v1120 = vpop.f32.mrb[0].mxu0
        %v1121 = vpop.f32.mrb[0].mxu0
        %v1122 = vadd.f32 0.0, %v1121
        %v1123 = vpop.f32.mrb[0].mxu0
        %1124 = vmatprep.mubr.bf16.mxu0 0
        %1125 = vmatmul.mubr.bf16.gmra.mrb[0].mxu0 %v995
        %v1126 = vpop.f32.mrb[0].mxu0
        %v1127 = vadd.f32 0.0, %v1126
        %v1128 = vpop.f32.mrb[0].mxu0
        %v1129 = vpop.f32.mrb[0].mxu0
        %v1130 = vadd.f32 0.0, %v1129
        %v1131 = vpop.f32.mrb[0].mxu0
        %1132 = vmatprep.mubr.bf16.mxu0 0
        %1133 = vmatmul.mubr.bf16.gmra.mrb[0].mxu0 %v998
        %v1134 = vpop.f32.mrb[0].mxu0
        %v1135 = vadd.f32 0.0, %v1134
        %v1136 = vpop.f32.mrb[0].mxu0
        %v1137 = vpop.f32.mrb[0].mxu0
        %v1138 = vadd.f32 0.0, %v1137
        %v1139 = vpop.f32.mrb[0].mxu0
        %1140 = vmatprep.mubr.bf16.mxu0 0
        %1141 = vmatmul.mubr.bf16.gmra.mrb[0].mxu0 %v1001
        %v1142 = vpop.f32.mrb[0].mxu0
        %v1143 = vadd.f32 0.0, %v1142
        %v1144 = vpop.f32.mrb[0].mxu0
        %v1145 = vpop.f32.mrb[0].mxu0
        %v1146 = vadd.f32 0.0, %v1145
        %v1147 = vpop.f32.mrb[0].mxu0
        %1148 = vmatprep.mubr.bf16.mxu0 0
        %1149 = vmatmul.mubr.bf16.gmra.mrb[0].mxu0 %v1004
        %v1150 = vpop.f32.mrb[0].mxu0
        %v1151 = vadd.f32 0.0, %v1150
        %v1152 = vpop.f32.mrb[0].mxu0
        %v1153 = vpop.f32.mrb[0].mxu0
        %v1154 = vadd.f32 0.0, %v1153
        %v1155 = vpop.f32.mrb[0].mxu0
        %1156 = vmatprep.mubr.bf16.mxu0 0
        %1157 = vmatmul.mubr.bf16.gmra.mrb[0].mxu0 %v1007
        %v1158 = vpop.f32.mrb[0].mxu0
        %v1159 = vadd.f32 0.0, %v1158
        %v1160 = vpop.f32.mrb[0].mxu0
        %v1161 = vpop.f32.mrb[0].mxu0
        %v1162 = vadd.f32 0.0, %v1161
        %v1163 = vpop.f32.mrb[0].mxu0
        %1164 = vmatprep.mubr.bf16.mxu0 0
        %1165 = vmatmul.mubr.bf16.gmra.mrb[0].mxu0 %v1010
        %v1166 = vpop.f32.mrb[0].mxu0
        %v1167 = vadd.f32 0.0, %v1166
        %v1168 = vpop.f32.mrb[0].mxu0
        %v1169 = vpop.f32.mrb[0].mxu0
        %v1170 = vadd.f32 0.0, %v1169
        %v1171 = vpop.f32.mrb[0].mxu0
        %1172 = vdwg.mxu0
        %v1173 = vpack.c.bf16 %v1050, %v1047
        %v1174 = vpack.c.bf16 %v1058, %v1055
        %v1175 = vpack.c.bf16 %v1066, %v1063
        %v1176 = vpack.c.bf16 %v1074, %v1071
        %v1177 = vpack.c.bf16 %v1082, %v1079
        %v1178 = vpack.c.bf16 %v1090, %v1087
        %v1179 = vpack.c.bf16 %v1098, %v1095
        %v1180 = vpack.c.bf16 %v1106, %v1103
        %v1181 = vpack.c.bf16 %v1114, %v1111
        %v1182 = vpack.c.bf16 %v1122, %v1119
        %v1183 = vpack.c.bf16 %v1130, %v1127
        %v1184 = vpack.c.bf16 %v1138, %v1135
        %v1185 = vpack.c.bf16 %v1146, %v1143
        %v1186 = vpack.c.bf16 %v1154, %v1151
        %v1187 = vpack.c.bf16 %v1162, %v1159
        %v1188 = vpack.c.bf16 %v1170, %v1167
        %v1189 = vld [vmem:[%s2 + $0x8] sm:$0xf]
        %v1190 = vld [vmem:[%s2 + $0xc] sm:$0xf]
        %v1193 = vunpack.c.l.b16 %v1189
        %v1194 = vunpack.c.l.b16 %v1190
        %v1195 = vpack.c.b16 %v1194, %v1193
        %vm1197 = vcmask 130048
        %v1199 = vsel %vm1197, %v1173, 0
        %v1202 = vsel %vm1197, %v1174, 0
        %v1205 = vsel %vm1197, %v1175, 0
        %v1208 = vsel %vm1197, %v1176, 0
        %v1211 = vsel %vm1197, %v1177, 0
        %v1214 = vsel %vm1197, %v1178, 0
        %v1217 = vsel %vm1197, %v1179, 0
        %v1220 = vsel %vm1197, %v1180, 0
        %v1223 = vsel %vm1197, %v1181, 0
        %v1226 = vsel %vm1197, %v1182, 0
        %v1229 = vsel %vm1197, %v1183, 0
        %v1232 = vsel %vm1197, %v1184, 0
        %v1235 = vsel %vm1197, %v1185, 0
        %v1238 = vsel %vm1197, %v1186, 0
        %v1241 = vsel %vm1197, %v1187, 0
        %v1244 = vsel %vm1197, %v1188, 0
        %1246 = vmatprep.subr.bf16.mxu0 0
        %1247 = vmatpush1.bf16.msra.mxu0 %v1195
        %1248 = vmatprep.subr.bf16.mxu0 0
        %1249 = vmatpush1.bf16.msra.mxu0 0
        %1250 = vmatprep.subr.bf16.mxu0 0
        %1251 = vmatpush1.bf16.msra.mxu0 0
        %1252 = vmatprep.subr.bf16.mxu0 0
        %1253 = vmatpush1.bf16.msra.mxu0 0
        %1254 = vmatprep.subr.bf16.mxu0 0
        %1255 = vmatpush1.bf16.msra.mxu0 0
        %1256 = vmatprep.subr.bf16.mxu0 0
        %1257 = vmatpush1.bf16.msra.mxu0 0
        %1258 = vmatprep.subr.bf16.mxu0 0
        %1259 = vmatpush1.bf16.msra.mxu0 0
        %1260 = vmatprep.subr.bf16.mxu0 0
        %1261 = vmatpush1.bf16.msra.mxu0 0
        %1262 = vmatprep.subr.bf16.mxu0 0
        %1263 = vmatpush1.bf16.msra.mxu0 0
        %1264 = vmatprep.subr.bf16.mxu0 0
        %1265 = vmatpush1.bf16.msra.mxu0 0
        %1266 = vmatprep.subr.bf16.mxu0 0
        %1267 = vmatpush1.bf16.msra.mxu0 0
        %1268 = vmatprep.subr.bf16.mxu0 0
        %1269 = vmatpush1.bf16.msra.mxu0 0
        %1270 = vmatprep.subr.bf16.mxu0 0
        %1271 = vmatpush1.bf16.msra.mxu0 0
        %1272 = vmatprep.subr.bf16.mxu0 0
        %1273 = vmatpush1.bf16.msra.mxu0 0
        %1274 = vmatprep.subr.bf16.mxu0 0
        %1275 = vmatpush1.bf16.msra.mxu0 0
        %1276 = vmatprep.subr.bf16.mxu0 0
        %1277 = vmatpush1.bf16.msra.mxu0 0
        %1278 = vmatprep.mubr.bf16.mxu0 0
        %1279 = vmatmul.mubr.bf16.gmra.mrb[0].mxu0 %v1199
        %v1280 = vpop.f32.mrb[0].mxu0
        %v1281 = vadd.f32 0.0, %v1280
        %v1282 = vpop.f32.mrb[0].mxu0
        %v1283 = vpop.f32.mrb[0].mxu0
        %v1284 = vadd.f32 0.0, %v1283
        %v1285 = vpop.f32.mrb[0].mxu0
        %1286 = vmatprep.mubr.bf16.mxu0 0
        %1287 = vmatmul.mubr.bf16.gmra.mrb[0].mxu0 %v1202
        %v1288 = vpop.f32.mrb[0].mxu0
        %v1289 = vadd.f32 0.0, %v1288
        %v1290 = vpop.f32.mrb[0].mxu0
        %v1291 = vpop.f32.mrb[0].mxu0
        %v1292 = vadd.f32 0.0, %v1291
        %v1293 = vpop.f32.mrb[0].mxu0
        %1294 = vmatprep.mubr.bf16.mxu0 0
        %1295 = vmatmul.mubr.bf16.gmra.mrb[0].mxu0 %v1205
        %v1296 = vpop.f32.mrb[0].mxu0
        %v1297 = vadd.f32 0.0, %v1296
        %v1298 = vpop.f32.mrb[0].mxu0
        %v1299 = vpop.f32.mrb[0].mxu0
        %v1300 = vadd.f32 0.0, %v1299
        %v1301 = vpop.f32.mrb[0].mxu0
        %1302 = vmatprep.mubr.bf16.mxu0 0
        %1303 = vmatmul.mubr.bf16.gmra.mrb[0].mxu0 %v1208
        %v1304 = vpop.f32.mrb[0].mxu0
        %v1305 = vadd.f32 0.0, %v1304
        %v1306 = vpop.f32.mrb[0].mxu0
        %v1307 = vpop.f32.mrb[0].mxu0
        %v1308 = vadd.f32 0.0, %v1307
        %v1309 = vpop.f32.mrb[0].mxu0
        %1310 = vmatprep.mubr.bf16.mxu0 0
        %1311 = vmatmul.mubr.bf16.gmra.mrb[0].mxu0 %v1211
        %v1312 = vpop.f32.mrb[0].mxu0
        %v1313 = vadd.f32 0.0, %v1312
        %v1314 = vpop.f32.mrb[0].mxu0
        %v1315 = vpop.f32.mrb[0].mxu0
        %v1316 = vadd.f32 0.0, %v1315
        %v1317 = vpop.f32.mrb[0].mxu0
        %1318 = vmatprep.mubr.bf16.mxu0 0
        %1319 = vmatmul.mubr.bf16.gmra.mrb[0].mxu0 %v1214
        %v1320 = vpop.f32.mrb[0].mxu0
        %v1321 = vadd.f32 0.0, %v1320
        %v1322 = vpop.f32.mrb[0].mxu0
        %v1323 = vpop.f32.mrb[0].mxu0
        %v1324 = vadd.f32 0.0, %v1323
        %v1325 = vpop.f32.mrb[0].mxu0
        %1326 = vmatprep.mubr.bf16.mxu0 0
        %1327 = vmatmul.mubr.bf16.gmra.mrb[0].mxu0 %v1217
        %v1328 = vpop.f32.mrb[0].mxu0
        %v1329 = vadd.f32 0.0, %v1328
        %v1330 = vpop.f32.mrb[0].mxu0
        %v1331 = vpop.f32.mrb[0].mxu0
        %v1332 = vadd.f32 0.0, %v1331
        %v1333 = vpop.f32.mrb[0].mxu0
        %1334 = vmatprep.mubr.bf16.mxu0 0
        %1335 = vmatmul.mubr.bf16.gmra.mrb[0].mxu0 %v1220
        %v1336 = vpop.f32.mrb[0].mxu0
        %v1337 = vadd.f32 0.0, %v1336
        %v1338 = vpop.f32.mrb[0].mxu0
        %v1339 = vpop.f32.mrb[0].mxu0
        %v1340 = vadd.f32 0.0, %v1339
        %v1341 = vpop.f32.mrb[0].mxu0
        %1342 = vmatprep.mubr.bf16.mxu0 0
        %1343 = vmatmul.mubr.bf16.gmra.mrb[0].mxu0 %v1223
        %v1344 = vpop.f32.mrb[0].mxu0
        %v1345 = vadd.f32 0.0, %v1344
        %v1346 = vpop.f32.mrb[0].mxu0
        %v1347 = vpop.f32.mrb[0].mxu0
        %v1348 = vadd.f32 0.0, %v1347
        %v1349 = vpop.f32.mrb[0].mxu0
        %1350 = vmatprep.mubr.bf16.mxu0 0
        %1351 = vmatmul.mubr.bf16.gmra.mrb[0].mxu0 %v1226
        %v1352 = vpop.f32.mrb[0].mxu0
        %v1353 = vadd.f32 0.0, %v1352
        %v1354 = vpop.f32.mrb[0].mxu0
        %v1355 = vpop.f32.mrb[0].mxu0
        %v1356 = vadd.f32 0.0, %v1355
        %v1357 = vpop.f32.mrb[0].mxu0
        %1358 = vmatprep.mubr.bf16.mxu0 0
        %1359 = vmatmul.mubr.bf16.gmra.mrb[0].mxu0 %v1229
        %v1360 = vpop.f32.mrb[0].mxu0
        %v1361 = vadd.f32 0.0, %v1360
        %v1362 = vpop.f32.mrb[0].mxu0
        %v1363 = vpop.f32.mrb[0].mxu0
        %v1364 = vadd.f32 0.0, %v1363
        %v1365 = vpop.f32.mrb[0].mxu0
        %1366 = vmatprep.mubr.bf16.mxu0 0
        %1367 = vmatmul.mubr.bf16.gmra.mrb[0].mxu0 %v1232
        %v1368 = vpop.f32.mrb[0].mxu0
        %v1369 = vadd.f32 0.0, %v1368
        %v1370 = vpop.f32.mrb[0].mxu0
        %v1371 = vpop.f32.mrb[0].mxu0
        %v1372 = vadd.f32 0.0, %v1371
        %v1373 = vpop.f32.mrb[0].mxu0
        %1374 = vmatprep.mubr.bf16.mxu0 0
        %1375 = vmatmul.mubr.bf16.gmra.mrb[0].mxu0 %v1235
        %v1376 = vpop.f32.mrb[0].mxu0
        %v1377 = vadd.f32 0.0, %v1376
        %v1378 = vpop.f32.mrb[0].mxu0
        %v1379 = vpop.f32.mrb[0].mxu0
        %v1380 = vadd.f32 0.0, %v1379
        %v1381 = vpop.f32.mrb[0].mxu0
        %1382 = vmatprep.mubr.bf16.mxu0 0
        %1383 = vmatmul.mubr.bf16.gmra.mrb[0].mxu0 %v1238
        %v1384 = vpop.f32.mrb[0].mxu0
        %v1385 = vadd.f32 0.0, %v1384
        %v1386 = vpop.f32.mrb[0].mxu0
        %v1387 = vpop.f32.mrb[0].mxu0
        %v1388 = vadd.f32 0.0, %v1387
        %v1389 = vpop.f32.mrb[0].mxu0
        %1390 = vmatprep.mubr.bf16.mxu0 0
        %1391 = vmatmul.mubr.bf16.gmra.mrb[0].mxu0 %v1241
        %v1392 = vpop.f32.mrb[0].mxu0
        %v1393 = vadd.f32 0.0, %v1392
        %v1394 = vpop.f32.mrb[0].mxu0
        %v1395 = vpop.f32.mrb[0].mxu0
        %v1396 = vadd.f32 0.0, %v1395
        %v1397 = vpop.f32.mrb[0].mxu0
        %1398 = vmatprep.mubr.bf16.mxu0 0
        %1399 = vmatmul.mubr.bf16.gmra.mrb[0].mxu0 %v1244
        %v1400 = vpop.f32.mrb[0].mxu0
        %v1401 = vadd.f32 0.0, %v1400
        %v1402 = vpop.f32.mrb[0].mxu0
        %v1403 = vpop.f32.mrb[0].mxu0
        %v1404 = vadd.f32 0.0, %v1403
        %v1405 = vpop.f32.mrb[0].mxu0
        %1406 = vdwg.mxu0
        %v1409 = vunpack.c.l.b16 %v754
        %v1410 = vunpack.c.l.b16 %v755
        %v1411 = vpack.c.b16 %v1410, %v1409
        %v1414 = vsel %vm1197, %v738, 0
        %v1417 = vsel %vm1197, %v739, 0
        %v1420 = vsel %vm1197, %v740, 0
        %v1423 = vsel %vm1197, %v741, 0
        %v1426 = vsel %vm1197, %v742, 0
        %v1429 = vsel %vm1197, %v743, 0
        %v1432 = vsel %vm1197, %v744, 0
        %v1435 = vsel %vm1197, %v745, 0
        %v1438 = vsel %vm1197, %v746, 0
        %v1441 = vsel %vm1197, %v747, 0
        %v1444 = vsel %vm1197, %v748, 0
        %v1447 = vsel %vm1197, %v749, 0
        %v1450 = vsel %vm1197, %v750, 0
        %v1453 = vsel %vm1197, %v751, 0
        %v1456 = vsel %vm1197, %v752, 0
        %v1459 = vsel %vm1197, %v753, 0
        %1461 = vmatprep.subr.bf16.mxu0 0
        %1462 = vmatpush1.bf16.msra.mxu0 %v1411
        %1463 = vmatprep.subr.bf16.mxu0 0
        %1464 = vmatpush1.bf16.msra.mxu0 0
        %1465 = vmatprep.subr.bf16.mxu0 0
        %1466 = vmatpush1.bf16.msra.mxu0 0
        %1467 = vmatprep.subr.bf16.mxu0 0
        %1468 = vmatpush1.bf16.msra.mxu0 0
        %1469 = vmatprep.subr.bf16.mxu0 0
        %1470 = vmatpush1.bf16.msra.mxu0 0
        %1471 = vmatprep.subr.bf16.mxu0 0
        %1472 = vmatpush1.bf16.msra.mxu0 0
        %1473 = vmatprep.subr.bf16.mxu0 0
        %1474 = vmatpush1.bf16.msra.mxu0 0
        %1475 = vmatprep.subr.bf16.mxu0 0
        %1476 = vmatpush1.bf16.msra.mxu0 0
        %1477 = vmatprep.subr.bf16.mxu0 0
        %1478 = vmatpush1.bf16.msra.mxu0 0
        %1479 = vmatprep.subr.bf16.mxu0 0
        %1480 = vmatpush1.bf16.msra.mxu0 0
        %1481 = vmatprep.subr.bf16.mxu0 0
        %1482 = vmatpush1.bf16.msra.mxu0 0
        %1483 = vmatprep.subr.bf16.mxu0 0
        %1484 = vmatpush1.bf16.msra.mxu0 0
        %1485 = vmatprep.subr.bf16.mxu0 0
        %1486 = vmatpush1.bf16.msra.mxu0 0
        %1487 = vmatprep.subr.bf16.mxu0 0
        %1488 = vmatpush1.bf16.msra.mxu0 0
        %1489 = vmatprep.subr.bf16.mxu0 0
        %1490 = vmatpush1.bf16.msra.mxu0 0
        %1491 = vmatprep.subr.bf16.mxu0 0
        %1492 = vmatpush1.bf16.msra.mxu0 0
        %1493 = vmatprep.mubr.bf16.mxu0 0
        %1494 = vmatmul.mubr.bf16.gmra.mrb[0].mxu0 %v1414
        %v1495 = vpop.f32.mrb[0].mxu0
        %v1496 = vadd.f32 %v1281, %v1495
        %v1497 = vpop.f32.mrb[0].mxu0
        %v1498 = vpop.f32.mrb[0].mxu0
        %v1499 = vadd.f32 %v1284, %v1498
        %v1500 = vpop.f32.mrb[0].mxu0
        %1501 = vmatprep.mubr.bf16.mxu0 0
        %1502 = vmatmul.mubr.bf16.gmra.mrb[0].mxu0 %v1417
        %v1503 = vpop.f32.mrb[0].mxu0
        %v1504 = vadd.f32 %v1289, %v1503
        %v1505 = vpop.f32.mrb[0].mxu0
        %v1506 = vpop.f32.mrb[0].mxu0
        %v1507 = vadd.f32 %v1292, %v1506
        %v1508 = vpop.f32.mrb[0].mxu0
        %1509 = vmatprep.mubr.bf16.mxu0 0
        %1510 = vmatmul.mubr.bf16.gmra.mrb[0].mxu0 %v1420
        %v1511 = vpop.f32.mrb[0].mxu0
        %v1512 = vadd.f32 %v1297, %v1511
        %v1513 = vpop.f32.mrb[0].mxu0
        %v1514 = vpop.f32.mrb[0].mxu0
        %v1515 = vadd.f32 %v1300, %v1514
        %v1516 = vpop.f32.mrb[0].mxu0
        %1517 = vmatprep.mubr.bf16.mxu0 0
        %1518 = vmatmul.mubr.bf16.gmra.mrb[0].mxu0 %v1423
        %v1519 = vpop.f32.mrb[0].mxu0
        %v1520 = vadd.f32 %v1305, %v1519
        %v1521 = vpop.f32.mrb[0].mxu0
        %v1522 = vpop.f32.mrb[0].mxu0
        %v1523 = vadd.f32 %v1308, %v1522
        %v1524 = vpop.f32.mrb[0].mxu0
        %1525 = vmatprep.mubr.bf16.mxu0 0
        %1526 = vmatmul.mubr.bf16.gmra.mrb[0].mxu0 %v1426
        %v1527 = vpop.f32.mrb[0].mxu0
        %v1528 = vadd.f32 %v1313, %v1527
        %v1529 = vpop.f32.mrb[0].mxu0
        %v1530 = vpop.f32.mrb[0].mxu0
        %v1531 = vadd.f32 %v1316, %v1530
        %v1532 = vpop.f32.mrb[0].mxu0
        %1533 = vmatprep.mubr.bf16.mxu0 0
        %1534 = vmatmul.mubr.bf16.gmra.mrb[0].mxu0 %v1429
        %v1535 = vpop.f32.mrb[0].mxu0
        %v1536 = vadd.f32 %v1321, %v1535
        %v1537 = vpop.f32.mrb[0].mxu0
        %v1538 = vpop.f32.mrb[0].mxu0
        %v1539 = vadd.f32 %v1324, %v1538
        %v1540 = vpop.f32.mrb[0].mxu0
        %1541 = vmatprep.mubr.bf16.mxu0 0
        %1542 = vmatmul.mubr.bf16.gmra.mrb[0].mxu0 %v1432
        %v1543 = vpop.f32.mrb[0].mxu0
        %v1544 = vadd.f32 %v1329, %v1543
        %v1545 = vpop.f32.mrb[0].mxu0
        %v1546 = vpop.f32.mrb[0].mxu0
        %v1547 = vadd.f32 %v1332, %v1546
        %v1548 = vpop.f32.mrb[0].mxu0
        %1549 = vmatprep.mubr.bf16.mxu0 0
        %1550 = vmatmul.mubr.bf16.gmra.mrb[0].mxu0 %v1435
        %v1551 = vpop.f32.mrb[0].mxu0
        %v1552 = vadd.f32 %v1337, %v1551
        %v1553 = vpop.f32.mrb[0].mxu0
        %v1554 = vpop.f32.mrb[0].mxu0
        %v1555 = vadd.f32 %v1340, %v1554
        %v1556 = vpop.f32.mrb[0].mxu0
        %1557 = vmatprep.mubr.bf16.mxu0 0
        %1558 = vmatmul.mubr.bf16.gmra.mrb[0].mxu0 %v1438
        %v1559 = vpop.f32.mrb[0].mxu0
        %v1560 = vadd.f32 %v1345, %v1559
        %v1561 = vpop.f32.mrb[0].mxu0
        %v1562 = vpop.f32.mrb[0].mxu0
        %v1563 = vadd.f32 %v1348, %v1562
        %v1564 = vpop.f32.mrb[0].mxu0
        %1565 = vmatprep.mubr.bf16.mxu0 0
        %1566 = vmatmul.mubr.bf16.gmra.mrb[0].mxu0 %v1441
        %v1567 = vpop.f32.mrb[0].mxu0
        %v1568 = vadd.f32 %v1353, %v1567
        %v1569 = vpop.f32.mrb[0].mxu0
        %v1570 = vpop.f32.mrb[0].mxu0
        %v1571 = vadd.f32 %v1356, %v1570
        %v1572 = vpop.f32.mrb[0].mxu0
        %1573 = vmatprep.mubr.bf16.mxu0 0
        %1574 = vmatmul.mubr.bf16.gmra.mrb[0].mxu0 %v1444
        %v1575 = vpop.f32.mrb[0].mxu0
        %v1576 = vadd.f32 %v1361, %v1575
        %v1577 = vpop.f32.mrb[0].mxu0
        %v1578 = vpop.f32.mrb[0].mxu0
        %v1579 = vadd.f32 %v1364, %v1578
        %v1580 = vpop.f32.mrb[0].mxu0
        %1581 = vmatprep.mubr.bf16.mxu0 0
        %1582 = vmatmul.mubr.bf16.gmra.mrb[0].mxu0 %v1447
        %v1583 = vpop.f32.mrb[0].mxu0
        %v1584 = vadd.f32 %v1369, %v1583
        %v1585 = vpop.f32.mrb[0].mxu0
        %v1586 = vpop.f32.mrb[0].mxu0
        %v1587 = vadd.f32 %v1372, %v1586
        %v1588 = vpop.f32.mrb[0].mxu0
        %1589 = vmatprep.mubr.bf16.mxu0 0
        %1590 = vmatmul.mubr.bf16.gmra.mrb[0].mxu0 %v1450
        %v1591 = vpop.f32.mrb[0].mxu0
        %v1592 = vadd.f32 %v1377, %v1591
        %v1593 = vpop.f32.mrb[0].mxu0
        %v1594 = vpop.f32.mrb[0].mxu0
        %v1595 = vadd.f32 %v1380, %v1594
        %v1596 = vpop.f32.mrb[0].mxu0
        %1597 = vmatprep.mubr.bf16.mxu0 0
        %1598 = vmatmul.mubr.bf16.gmra.mrb[0].mxu0 %v1453
        %v1599 = vpop.f32.mrb[0].mxu0
        %v1600 = vadd.f32 %v1385, %v1599
        %v1601 = vpop.f32.mrb[0].mxu0
        %v1602 = vpop.f32.mrb[0].mxu0
        %v1603 = vadd.f32 %v1388, %v1602
        %v1604 = vpop.f32.mrb[0].mxu0
        %1605 = vmatprep.mubr.bf16.mxu0 0
        %1606 = vmatmul.mubr.bf16.gmra.mrb[0].mxu0 %v1456
        %v1607 = vpop.f32.mrb[0].mxu0
        %v1608 = vadd.f32 %v1393, %v1607
        %v1609 = vpop.f32.mrb[0].mxu0
        %v1610 = vpop.f32.mrb[0].mxu0
        %v1611 = vadd.f32 %v1396, %v1610
        %v1612 = vpop.f32.mrb[0].mxu0
        %1613 = vmatprep.mubr.bf16.mxu0 0
        %1614 = vmatmul.mubr.bf16.gmra.mrb[0].mxu0 %v1459
        %v1615 = vpop.f32.mrb[0].mxu0
        %v1616 = vadd.f32 %v1401, %v1615
        %v1617 = vpop.f32.mrb[0].mxu0
        %v1618 = vpop.f32.mrb[0].mxu0
        %v1619 = vadd.f32 %v1404, %v1618
        %v1620 = vpop.f32.mrb[0].mxu0
        %1621 = vdwg.mxu0
        %1622 = vset.pattern.permute.xlu0 2
        %1623 = vperm.xlu0 %1622, %v254
        %v1624 = vpop.permute.xlu0 %1623
        %1625 = vset.pattern.permute.xlu0 2
        %1626 = vperm.xlu0 %1625, %v255
        %v1627 = vpop.permute.xlu0 %1626
        %1628 = vset.pattern.permute.xlu0 2
        %1629 = vperm.xlu0 %1628, %v256
        %v1630 = vpop.permute.xlu0 %1629
        %1631 = vset.pattern.permute.xlu0 2
        %1632 = vperm.xlu0 %1631, %v257
        %v1633 = vpop.permute.xlu0 %1632
        %1634 = vset.pattern.permute.xlu0 2
        %1635 = vperm.xlu0 %1634, %v258
        %v1636 = vpop.permute.xlu0 %1635
        %1637 = vset.pattern.permute.xlu0 2
        %1638 = vperm.xlu0 %1637, %v259
        %v1639 = vpop.permute.xlu0 %1638
        %1640 = vset.pattern.permute.xlu0 2
        %1641 = vperm.xlu0 %1640, %v260
        %v1642 = vpop.permute.xlu0 %1641
        %1643 = vset.pattern.permute.xlu0 2
        %1644 = vperm.xlu0 %1643, %v261
        %v1645 = vpop.permute.xlu0 %1644
        %1646 = vset.pattern.permute.xlu0 2
        %1647 = vperm.xlu0 %1646, %v262
        %v1648 = vpop.permute.xlu0 %1647
        %1649 = vset.pattern.permute.xlu0 2
        %1650 = vperm.xlu0 %1649, %v263
        %v1651 = vpop.permute.xlu0 %1650
        %1652 = vset.pattern.permute.xlu0 2
        %1653 = vperm.xlu0 %1652, %v264
        %v1654 = vpop.permute.xlu0 %1653
        %1655 = vset.pattern.permute.xlu0 2
        %1656 = vperm.xlu0 %1655, %v265
        %v1657 = vpop.permute.xlu0 %1656
        %1658 = vset.pattern.permute.xlu0 2
        %1659 = vperm.xlu0 %1658, %v266
        %v1660 = vpop.permute.xlu0 %1659
        %1661 = vset.pattern.permute.xlu0 2
        %1662 = vperm.xlu0 %1661, %v267
        %v1663 = vpop.permute.xlu0 %1662
        %1664 = vset.pattern.permute.xlu0 2
        %1665 = vperm.xlu0 %1664, %v268
        %v1666 = vpop.permute.xlu0 %1665
        %1667 = vset.pattern.permute.xlu0 2
        %1668 = vperm.xlu0 %1667, %v269
        %v1669 = vpop.permute.xlu0 %1668
        %1670 = vset.pattern.permute.xlu0 2
        %1671 = vperm.xlu0 %1670, %v270
        %v1672 = vpop.permute.xlu0 %1671
        %1673 = vset.pattern.permute.xlu0 2
        %1674 = vperm.xlu0 %1673, %v271
        %v1675 = vpop.permute.xlu0 %1674
        %1676 = vset.pattern.permute.xlu0 2
        %1677 = vperm.xlu0 %1676, %v272
        %v1678 = vpop.permute.xlu0 %1677
        %1679 = vset.pattern.permute.xlu0 2
        %1680 = vperm.xlu0 %1679, %v273
        %v1681 = vpop.permute.xlu0 %1680
        %1682 = vset.pattern.permute.xlu0 2
        %1683 = vperm.xlu0 %1682, %v274
        %v1684 = vpop.permute.xlu0 %1683
        %1685 = vset.pattern.permute.xlu0 2
        %1686 = vperm.xlu0 %1685, %v275
        %v1687 = vpop.permute.xlu0 %1686
        %1688 = vset.pattern.permute.xlu0 2
        %1689 = vperm.xlu0 %1688, %v276
        %v1690 = vpop.permute.xlu0 %1689
        %1691 = vset.pattern.permute.xlu0 2
        %1692 = vperm.xlu0 %1691, %v277
        %v1693 = vpop.permute.xlu0 %1692
        %1694 = vset.pattern.permute.xlu0 2
        %1695 = vperm.xlu0 %1694, %v278
        %v1696 = vpop.permute.xlu0 %1695
        %1697 = vset.pattern.permute.xlu0 2
        %1698 = vperm.xlu0 %1697, %v279
        %v1699 = vpop.permute.xlu0 %1698
        %1700 = vset.pattern.permute.xlu0 2
        %1701 = vperm.xlu0 %1700, %v280
        %v1702 = vpop.permute.xlu0 %1701
        %1703 = vset.pattern.permute.xlu0 2
        %1704 = vperm.xlu0 %1703, %v281
        %v1705 = vpop.permute.xlu0 %1704
        %1706 = vset.pattern.permute.xlu0 2
        %1707 = vperm.xlu0 %1706, %v282
        %v1708 = vpop.permute.xlu0 %1707
        %1709 = vset.pattern.permute.xlu0 2
        %1710 = vperm.xlu0 %1709, %v283
        %v1711 = vpop.permute.xlu0 %1710
        %1712 = vset.pattern.permute.xlu0 2
        %1713 = vperm.xlu0 %1712, %v284
        %v1714 = vpop.permute.xlu0 %1713
        %1715 = vset.pattern.permute.xlu0 2
        %1716 = vperm.xlu0 %1715, %v285
        %v1717 = vpop.permute.xlu0 %1716
        %vm1718 = vcmp.eq.s32.totalorder %v1624, %v287
        %vm1719 = vcmp.eq.s32.totalorder %v1627, %v287
        %vm1720 = vcmp.eq.s32.totalorder %v1630, %v287
        %vm1721 = vcmp.eq.s32.totalorder %v1633, %v287
        %vm1722 = vcmp.eq.s32.totalorder %v1636, %v287
        %vm1723 = vcmp.eq.s32.totalorder %v1639, %v287
        %vm1724 = vcmp.eq.s32.totalorder %v1642, %v287
        %vm1725 = vcmp.eq.s32.totalorder %v1645, %v287
        %vm1726 = vcmp.eq.s32.totalorder %v1648, %v287
        %vm1727 = vcmp.eq.s32.totalorder %v1651, %v287
        %vm1728 = vcmp.eq.s32.totalorder %v1654, %v287
        %vm1729 = vcmp.eq.s32.totalorder %v1657, %v287
        %vm1730 = vcmp.eq.s32.totalorder %v1660, %v287
        %vm1731 = vcmp.eq.s32.totalorder %v1663, %v287
        %vm1732 = vcmp.eq.s32.totalorder %v1666, %v287
        %vm1733 = vcmp.eq.s32.totalorder %v1669, %v287
        %vm1734 = vcmp.eq.s32.totalorder %v1672, %v287
        %vm1735 = vcmp.eq.s32.totalorder %v1675, %v287
        %vm1736 = vcmp.eq.s32.totalorder %v1678, %v287
        %vm1737 = vcmp.eq.s32.totalorder %v1681, %v287
        %vm1738 = vcmp.eq.s32.totalorder %v1684, %v287
        %vm1739 = vcmp.eq.s32.totalorder %v1687, %v287
        %vm1740 = vcmp.eq.s32.totalorder %v1690, %v287
        %vm1741 = vcmp.eq.s32.totalorder %v1693, %v287
        %vm1742 = vcmp.eq.s32.totalorder %v1696, %v287
        %vm1743 = vcmp.eq.s32.totalorder %v1699, %v287
        %vm1744 = vcmp.eq.s32.totalorder %v1702, %v287
        %vm1745 = vcmp.eq.s32.totalorder %v1705, %v287
        %vm1746 = vcmp.eq.s32.totalorder %v1708, %v287
        %vm1747 = vcmp.eq.s32.totalorder %v1711, %v287
        %vm1748 = vcmp.eq.s32.totalorder %v1714, %v287
        %vm1749 = vcmp.eq.s32.totalorder %v1717, %v287
        %v1750 = vsel %vm1718, 1, 0
        %v1751 = vsel %vm1719, 1, 0
        %v1752 = vsel %vm1720, 1, 0
        %v1753 = vsel %vm1721, 1, 0
        %v1754 = vsel %vm1722, 1, 0
        %v1755 = vsel %vm1723, 1, 0
        %v1756 = vsel %vm1724, 1, 0
        %v1757 = vsel %vm1725, 1, 0
        %v1758 = vsel %vm1726, 1, 0
        %v1759 = vsel %vm1727, 1, 0
        %v1760 = vsel %vm1728, 1, 0
        %v1761 = vsel %vm1729, 1, 0
        %v1762 = vsel %vm1730, 1, 0
        %v1763 = vsel %vm1731, 1, 0
        %v1764 = vsel %vm1732, 1, 0
        %v1765 = vsel %vm1733, 1, 0
        %v1766 = vsel %vm1734, 1, 0
        %v1767 = vsel %vm1735, 1, 0
        %v1768 = vsel %vm1736, 1, 0
        %v1769 = vsel %vm1737, 1, 0
        %v1770 = vsel %vm1738, 1, 0
        %v1771 = vsel %vm1739, 1, 0
        %v1772 = vsel %vm1740, 1, 0
        %v1773 = vsel %vm1741, 1, 0
        %v1774 = vsel %vm1742, 1, 0
        %v1775 = vsel %vm1743, 1, 0
        %v1776 = vsel %vm1744, 1, 0
        %v1777 = vsel %vm1745, 1, 0
        %v1778 = vsel %vm1746, 1, 0
        %v1779 = vsel %vm1747, 1, 0
        %v1780 = vsel %vm1748, 1, 0
        %v1781 = vsel %vm1749, 1, 0
        %v1782 = vcvt.s32.f32 %v1750
        %v1783 = vcvt.s32.f32 %v1751
        %v1784 = vcvt.s32.f32 %v1752
        %v1785 = vcvt.s32.f32 %v1753
        %v1786 = vcvt.s32.f32 %v1754
        %v1787 = vcvt.s32.f32 %v1755
        %v1788 = vcvt.s32.f32 %v1756
        %v1789 = vcvt.s32.f32 %v1757
        %v1790 = vcvt.s32.f32 %v1758
        %v1791 = vcvt.s32.f32 %v1759
        %v1792 = vcvt.s32.f32 %v1760
        %v1793 = vcvt.s32.f32 %v1761
        %v1794 = vcvt.s32.f32 %v1762
        %v1795 = vcvt.s32.f32 %v1763
        %v1796 = vcvt.s32.f32 %v1764
        %v1797 = vcvt.s32.f32 %v1765
        %v1798 = vcvt.s32.f32 %v1766
        %v1799 = vcvt.s32.f32 %v1767
        %v1800 = vcvt.s32.f32 %v1768
        %v1801 = vcvt.s32.f32 %v1769
        %v1802 = vcvt.s32.f32 %v1770
        %v1803 = vcvt.s32.f32 %v1771
        %v1804 = vcvt.s32.f32 %v1772
        %v1805 = vcvt.s32.f32 %v1773
        %v1806 = vcvt.s32.f32 %v1774
        %v1807 = vcvt.s32.f32 %v1775
        %v1808 = vcvt.s32.f32 %v1776
        %v1809 = vcvt.s32.f32 %v1777
        %v1810 = vcvt.s32.f32 %v1778
        %v1811 = vcvt.s32.f32 %v1779
        %v1812 = vcvt.s32.f32 %v1780
        %v1813 = vcvt.s32.f32 %v1781
        %v1814 = vpack.c.bf16 %v1783, %v1782
        %v1815 = vpack.c.bf16 %v1785, %v1784
        %v1816 = vpack.c.bf16 %v1787, %v1786
        %v1817 = vpack.c.bf16 %v1789, %v1788
        %v1818 = vpack.c.bf16 %v1791, %v1790
        %v1819 = vpack.c.bf16 %v1793, %v1792
        %v1820 = vpack.c.bf16 %v1795, %v1794
        %v1821 = vpack.c.bf16 %v1797, %v1796
        %v1822 = vpack.c.bf16 %v1799, %v1798
        %v1823 = vpack.c.bf16 %v1801, %v1800
        %v1824 = vpack.c.bf16 %v1803, %v1802
        %v1825 = vpack.c.bf16 %v1805, %v1804
        %v1826 = vpack.c.bf16 %v1807, %v1806
        %v1827 = vpack.c.bf16 %v1809, %v1808
        %v1828 = vpack.c.bf16 %v1811, %v1810
        %v1829 = vpack.c.bf16 %v1813, %v1812
        %v1831 = vsel %vm528, %v1814, 0
        %v1834 = vsel %vm528, %v1815, 0
        %v1837 = vsel %vm528, %v1816, 0
        %v1840 = vsel %vm528, %v1817, 0
        %v1843 = vsel %vm528, %v1818, 0
        %v1846 = vsel %vm528, %v1819, 0
        %v1849 = vsel %vm528, %v1820, 0
        %v1852 = vsel %vm528, %v1821, 0
        %v1855 = vsel %vm528, %v1822, 0
        %v1858 = vsel %vm528, %v1823, 0
        %v1861 = vsel %vm528, %v1824, 0
        %v1864 = vsel %vm528, %v1825, 0
        %v1867 = vsel %vm528, %v1826, 0
        %v1870 = vsel %vm528, %v1827, 0
        %v1873 = vsel %vm528, %v1828, 0
        %v1876 = vsel %vm528, %v1829, 0
        %1878 = vmatprep.subr.bf16.mxu0 0
        %1879 = vmatpush1.bf16.msra.mxu0 %v520
        %1880 = vmatprep.subr.bf16.mxu0 0
        %1881 = vmatpush1.bf16.msra.mxu0 %v521
        %1882 = vmatprep.subr.bf16.mxu0 0
        %1883 = vmatpush1.bf16.msra.mxu0 %v522
        %1884 = vmatprep.subr.bf16.mxu0 0
        %1885 = vmatpush1.bf16.msra.mxu0 %v523
        %1886 = vmatprep.subr.bf16.mxu0 0
        %1887 = vmatpush1.bf16.msra.mxu0 0
        %1888 = vmatprep.subr.bf16.mxu0 0
        %1889 = vmatpush1.bf16.msra.mxu0 0
        %1890 = vmatprep.subr.bf16.mxu0 0
        %1891 = vmatpush1.bf16.msra.mxu0 0
        %1892 = vmatprep.subr.bf16.mxu0 0
        %1893 = vmatpush1.bf16.msra.mxu0 0
        %1894 = vmatprep.subr.bf16.mxu0 0
        %1895 = vmatpush1.bf16.msra.mxu0 0
        %1896 = vmatprep.subr.bf16.mxu0 0
        %1897 = vmatpush1.bf16.msra.mxu0 0
        %1898 = vmatprep.subr.bf16.mxu0 0
        %1899 = vmatpush1.bf16.msra.mxu0 0
        %1900 = vmatprep.subr.bf16.mxu0 0
        %1901 = vmatpush1.bf16.msra.mxu0 0
        %1902 = vmatprep.subr.bf16.mxu0 0
        %1903 = vmatpush1.bf16.msra.mxu0 0
        %1904 = vmatprep.subr.bf16.mxu0 0
        %1905 = vmatpush1.bf16.msra.mxu0 0
        %1906 = vmatprep.subr.bf16.mxu0 0
        %1907 = vmatpush1.bf16.msra.mxu0 0
        %1908 = vmatprep.subr.bf16.mxu0 0
        %1909 = vmatpush1.bf16.msra.mxu0 0
        %1910 = vmatprep.mubr.bf16.mxu0 0
        %1911 = vmatmul.mubr.bf16.gmra.mrb[0].mxu0 %v1831
        %v1912 = vpop.f32.mrb[0].mxu0
        %v1913 = vadd.f32 0.0, %v1912
        %v1914 = vpop.f32.mrb[0].mxu0
        %v1915 = vpop.f32.mrb[0].mxu0
        %v1916 = vadd.f32 0.0, %v1915
        %v1917 = vpop.f32.mrb[0].mxu0
        %1918 = vmatprep.mubr.bf16.mxu0 0
        %1919 = vmatmul.mubr.bf16.gmra.mrb[0].mxu0 %v1834
        %v1920 = vpop.f32.mrb[0].mxu0
        %v1921 = vadd.f32 0.0, %v1920
        %v1922 = vpop.f32.mrb[0].mxu0
        %v1923 = vpop.f32.mrb[0].mxu0
        %v1924 = vadd.f32 0.0, %v1923
        %v1925 = vpop.f32.mrb[0].mxu0
        %1926 = vmatprep.mubr.bf16.mxu0 0
        %1927 = vmatmul.mubr.bf16.gmra.mrb[0].mxu0 %v1837
        %v1928 = vpop.f32.mrb[0].mxu0
        %v1929 = vadd.f32 0.0, %v1928
        %v1930 = vpop.f32.mrb[0].mxu0
        %v1931 = vpop.f32.mrb[0].mxu0
        %v1932 = vadd.f32 0.0, %v1931
        %v1933 = vpop.f32.mrb[0].mxu0
        %1934 = vmatprep.mubr.bf16.mxu0 0
        %1935 = vmatmul.mubr.bf16.gmra.mrb[0].mxu0 %v1840
        %v1936 = vpop.f32.mrb[0].mxu0
        %v1937 = vadd.f32 0.0, %v1936
        %v1938 = vpop.f32.mrb[0].mxu0
        %v1939 = vpop.f32.mrb[0].mxu0
        %v1940 = vadd.f32 0.0, %v1939
        %v1941 = vpop.f32.mrb[0].mxu0
        %1942 = vmatprep.mubr.bf16.mxu0 0
        %1943 = vmatmul.mubr.bf16.gmra.mrb[0].mxu0 %v1843
        %v1944 = vpop.f32.mrb[0].mxu0
        %v1945 = vadd.f32 0.0, %v1944
        %v1946 = vpop.f32.mrb[0].mxu0
        %v1947 = vpop.f32.mrb[0].mxu0
        %v1948 = vadd.f32 0.0, %v1947
        %v1949 = vpop.f32.mrb[0].mxu0
        %1950 = vmatprep.mubr.bf16.mxu0 0
        %1951 = vmatmul.mubr.bf16.gmra.mrb[0].mxu0 %v1846
        %v1952 = vpop.f32.mrb[0].mxu0
        %v1953 = vadd.f32 0.0, %v1952
        %v1954 = vpop.f32.mrb[0].mxu0
        %v1955 = vpop.f32.mrb[0].mxu0
        %v1956 = vadd.f32 0.0, %v1955
        %v1957 = vpop.f32.mrb[0].mxu0
        %1958 = vmatprep.mubr.bf16.mxu0 0
        %1959 = vmatmul.mubr.bf16.gmra.mrb[0].mxu0 %v1849
        %v1960 = vpop.f32.mrb[0].mxu0
        %v1961 = vadd.f32 0.0, %v1960
        %v1962 = vpop.f32.mrb[0].mxu0
        %v1963 = vpop.f32.mrb[0].mxu0
        %v1964 = vadd.f32 0.0, %v1963
        %v1965 = vpop.f32.mrb[0].mxu0
        %1966 = vmatprep.mubr.bf16.mxu0 0
        %1967 = vmatmul.mubr.bf16.gmra.mrb[0].mxu0 %v1852
        %v1968 = vpop.f32.mrb[0].mxu0
        %v1969 = vadd.f32 0.0, %v1968
        %v1970 = vpop.f32.mrb[0].mxu0
        %v1971 = vpop.f32.mrb[0].mxu0
        %v1972 = vadd.f32 0.0, %v1971
        %v1973 = vpop.f32.mrb[0].mxu0
        %1974 = vmatprep.mubr.bf16.mxu0 0
        %1975 = vmatmul.mubr.bf16.gmra.mrb[0].mxu0 %v1855
        %v1976 = vpop.f32.mrb[0].mxu0
        %v1977 = vadd.f32 0.0, %v1976
        %v1978 = vpop.f32.mrb[0].mxu0
        %v1979 = vpop.f32.mrb[0].mxu0
        %v1980 = vadd.f32 0.0, %v1979
        %v1981 = vpop.f32.mrb[0].mxu0
        %1982 = vmatprep.mubr.bf16.mxu0 0
        %1983 = vmatmul.mubr.bf16.gmra.mrb[0].mxu0 %v1858
        %v1984 = vpop.f32.mrb[0].mxu0
        %v1985 = vadd.f32 0.0, %v1984
        %v1986 = vpop.f32.mrb[0].mxu0
        %v1987 = vpop.f32.mrb[0].mxu0
        %v1988 = vadd.f32 0.0, %v1987
        %v1989 = vpop.f32.mrb[0].mxu0
        %1990 = vmatprep.mubr.bf16.mxu0 0
        %1991 = vmatmul.mubr.bf16.gmra.mrb[0].mxu0 %v1861
        %v1992 = vpop.f32.mrb[0].mxu0
        %v1993 = vadd.f32 0.0, %v1992
        %v1994 = vpop.f32.mrb[0].mxu0
        %v1995 = vpop.f32.mrb[0].mxu0
        %v1996 = vadd.f32 0.0, %v1995
        %v1997 = vpop.f32.mrb[0].mxu0
        %1998 = vmatprep.mubr.bf16.mxu0 0
        %1999 = vmatmul.mubr.bf16.gmra.mrb[0].mxu0 %v1864
        %v2000 = vpop.f32.mrb[0].mxu0
        %v2001 = vadd.f32 0.0, %v2000
        %v2002 = vpop.f32.mrb[0].mxu0
        %v2003 = vpop.f32.mrb[0].mxu0
        %v2004 = vadd.f32 0.0, %v2003
        %v2005 = vpop.f32.mrb[0].mxu0
        %2006 = vmatprep.mubr.bf16.mxu0 0
        %2007 = vmatmul.mubr.bf16.gmra.mrb[0].mxu0 %v1867
        %v2008 = vpop.f32.mrb[0].mxu0
        %v2009 = vadd.f32 0.0, %v2008
        %v2010 = vpop.f32.mrb[0].mxu0
        %v2011 = vpop.f32.mrb[0].mxu0
        %v2012 = vadd.f32 0.0, %v2011
        %v2013 = vpop.f32.mrb[0].mxu0
        %2014 = vmatprep.mubr.bf16.mxu0 0
        %2015 = vmatmul.mubr.bf16.gmra.mrb[0].mxu0 %v1870
        %v2016 = vpop.f32.mrb[0].mxu0
        %v2017 = vadd.f32 0.0, %v2016
        %v2018 = vpop.f32.mrb[0].mxu0
        %v2019 = vpop.f32.mrb[0].mxu0
        %v2020 = vadd.f32 0.0, %v2019
        %v2021 = vpop.f32.mrb[0].mxu0
        %2022 = vmatprep.mubr.bf16.mxu0 0
        %2023 = vmatmul.mubr.bf16.gmra.mrb[0].mxu0 %v1873
        %v2024 = vpop.f32.mrb[0].mxu0
        %v2025 = vadd.f32 0.0, %v2024
        %v2026 = vpop.f32.mrb[0].mxu0
        %v2027 = vpop.f32.mrb[0].mxu0
        %v2028 = vadd.f32 0.0, %v2027
        %v2029 = vpop.f32.mrb[0].mxu0
        %2030 = vmatprep.mubr.bf16.mxu0 0
        %2031 = vmatmul.mubr.bf16.gmra.mrb[0].mxu0 %v1876
        %v2032 = vpop.f32.mrb[0].mxu0
        %v2033 = vadd.f32 0.0, %v2032
        %v2034 = vpop.f32.mrb[0].mxu0
        %v2035 = vpop.f32.mrb[0].mxu0
        %v2036 = vadd.f32 0.0, %v2035
        %v2037 = vpop.f32.mrb[0].mxu0
        %2038 = vdwg.mxu0
        %v2039 = vpack.c.bf16 %v1916, %v1913
        %v2040 = vpack.c.bf16 %v1924, %v1921
        %v2041 = vpack.c.bf16 %v1932, %v1929
        %v2042 = vpack.c.bf16 %v1940, %v1937
        %v2043 = vpack.c.bf16 %v1948, %v1945
        %v2044 = vpack.c.bf16 %v1956, %v1953
        %v2045 = vpack.c.bf16 %v1964, %v1961
        %v2046 = vpack.c.bf16 %v1972, %v1969
        %v2047 = vpack.c.bf16 %v1980, %v1977
        %v2048 = vpack.c.bf16 %v1988, %v1985
        %v2049 = vpack.c.bf16 %v1996, %v1993
        %v2050 = vpack.c.bf16 %v2004, %v2001
        %v2051 = vpack.c.bf16 %v2012, %v2009
        %v2052 = vpack.c.bf16 %v2020, %v2017
        %v2053 = vpack.c.bf16 %v2028, %v2025
        %v2054 = vpack.c.bf16 %v2036, %v2033
        %v2055 = vld [vmem:[%s2 + $0x10] sm:$0xf]
        %v2056 = vld [vmem:[%s2 + $0x14] sm:$0xf]
        %v2059 = vunpack.c.l.b16 %v2055
        %v2060 = vunpack.c.l.b16 %v2056
        %v2061 = vpack.c.b16 %v2060, %v2059
        %v2064 = vsel %vm1197, %v2039, 0
        %v2067 = vsel %vm1197, %v2040, 0
        %v2070 = vsel %vm1197, %v2041, 0
        %v2073 = vsel %vm1197, %v2042, 0
        %v2076 = vsel %vm1197, %v2043, 0
        %v2079 = vsel %vm1197, %v2044, 0
        %v2082 = vsel %vm1197, %v2045, 0
        %v2085 = vsel %vm1197, %v2046, 0
        %v2088 = vsel %vm1197, %v2047, 0
        %v2091 = vsel %vm1197, %v2048, 0
        %v2094 = vsel %vm1197, %v2049, 0
        %v2097 = vsel %vm1197, %v2050, 0
        %v2100 = vsel %vm1197, %v2051, 0
        %v2103 = vsel %vm1197, %v2052, 0
        %v2106 = vsel %vm1197, %v2053, 0
        %v2109 = vsel %vm1197, %v2054, 0
        %2111 = vmatprep.subr.bf16.mxu0 0
        %2112 = vmatpush1.bf16.msra.mxu0 %v2061
        %2113 = vmatprep.subr.bf16.mxu0 0
        %2114 = vmatpush1.bf16.msra.mxu0 0
        %2115 = vmatprep.subr.bf16.mxu0 0
        %2116 = vmatpush1.bf16.msra.mxu0 0
        %2117 = vmatprep.subr.bf16.mxu0 0
        %2118 = vmatpush1.bf16.msra.mxu0 0
        %2119 = vmatprep.subr.bf16.mxu0 0
        %2120 = vmatpush1.bf16.msra.mxu0 0
        %2121 = vmatprep.subr.bf16.mxu0 0
        %2122 = vmatpush1.bf16.msra.mxu0 0
        %2123 = vmatprep.subr.bf16.mxu0 0
        %2124 = vmatpush1.bf16.msra.mxu0 0
        %2125 = vmatprep.subr.bf16.mxu0 0
        %2126 = vmatpush1.bf16.msra.mxu0 0
        %2127 = vmatprep.subr.bf16.mxu0 0
        %2128 = vmatpush1.bf16.msra.mxu0 0
        %2129 = vmatprep.subr.bf16.mxu0 0
        %2130 = vmatpush1.bf16.msra.mxu0 0
        %2131 = vmatprep.subr.bf16.mxu0 0
        %2132 = vmatpush1.bf16.msra.mxu0 0
        %2133 = vmatprep.subr.bf16.mxu0 0
        %2134 = vmatpush1.bf16.msra.mxu0 0
        %2135 = vmatprep.subr.bf16.mxu0 0
        %2136 = vmatpush1.bf16.msra.mxu0 0
        %2137 = vmatprep.subr.bf16.mxu0 0
        %2138 = vmatpush1.bf16.msra.mxu0 0
        %2139 = vmatprep.subr.bf16.mxu0 0
        %2140 = vmatpush1.bf16.msra.mxu0 0
        %2141 = vmatprep.subr.bf16.mxu0 0
        %2142 = vmatpush1.bf16.msra.mxu0 0
        %2143 = vmatprep.mubr.bf16.mxu0 0
        %2144 = vmatmul.mubr.bf16.gmra.mrb[0].mxu0 %v2064
        %v2145 = vpop.f32.mrb[0].mxu0
        %v2146 = vadd.f32 0.0, %v2145
        %v2147 = vpop.f32.mrb[0].mxu0
        %v2148 = vpop.f32.mrb[0].mxu0
        %v2149 = vadd.f32 0.0, %v2148
        %v2150 = vpop.f32.mrb[0].mxu0
        %2151 = vmatprep.mubr.bf16.mxu0 0
        %2152 = vmatmul.mubr.bf16.gmra.mrb[0].mxu0 %v2067
        %v2153 = vpop.f32.mrb[0].mxu0
        %v2154 = vadd.f32 0.0, %v2153
        %v2155 = vpop.f32.mrb[0].mxu0
        %v2156 = vpop.f32.mrb[0].mxu0
        %v2157 = vadd.f32 0.0, %v2156
        %v2158 = vpop.f32.mrb[0].mxu0
        %2159 = vmatprep.mubr.bf16.mxu0 0
        %2160 = vmatmul.mubr.bf16.gmra.mrb[0].mxu0 %v2070
        %v2161 = vpop.f32.mrb[0].mxu0
        %v2162 = vadd.f32 0.0, %v2161
        %v2163 = vpop.f32.mrb[0].mxu0
        %v2164 = vpop.f32.mrb[0].mxu0
        %v2165 = vadd.f32 0.0, %v2164
        %v2166 = vpop.f32.mrb[0].mxu0
        %2167 = vmatprep.mubr.bf16.mxu0 0
        %2168 = vmatmul.mubr.bf16.gmra.mrb[0].mxu0 %v2073
        %v2169 = vpop.f32.mrb[0].mxu0
        %v2170 = vadd.f32 0.0, %v2169
        %v2171 = vpop.f32.mrb[0].mxu0
        %v2172 = vpop.f32.mrb[0].mxu0
        %v2173 = vadd.f32 0.0, %v2172
        %v2174 = vpop.f32.mrb[0].mxu0
        %2175 = vmatprep.mubr.bf16.mxu0 0
        %2176 = vmatmul.mubr.bf16.gmra.mrb[0].mxu0 %v2076
        %v2177 = vpop.f32.mrb[0].mxu0
        %v2178 = vadd.f32 0.0, %v2177
        %v2179 = vpop.f32.mrb[0].mxu0
        %v2180 = vpop.f32.mrb[0].mxu0
        %v2181 = vadd.f32 0.0, %v2180
        %v2182 = vpop.f32.mrb[0].mxu0
        %2183 = vmatprep.mubr.bf16.mxu0 0
        %2184 = vmatmul.mubr.bf16.gmra.mrb[0].mxu0 %v2079
        %v2185 = vpop.f32.mrb[0].mxu0
        %v2186 = vadd.f32 0.0, %v2185
        %v2187 = vpop.f32.mrb[0].mxu0
        %v2188 = vpop.f32.mrb[0].mxu0
        %v2189 = vadd.f32 0.0, %v2188
        %v2190 = vpop.f32.mrb[0].mxu0
        %2191 = vmatprep.mubr.bf16.mxu0 0
        %2192 = vmatmul.mubr.bf16.gmra.mrb[0].mxu0 %v2082
        %v2193 = vpop.f32.mrb[0].mxu0
        %v2194 = vadd.f32 0.0, %v2193
        %v2195 = vpop.f32.mrb[0].mxu0
        %v2196 = vpop.f32.mrb[0].mxu0
        %v2197 = vadd.f32 0.0, %v2196
        %v2198 = vpop.f32.mrb[0].mxu0
        %2199 = vmatprep.mubr.bf16.mxu0 0
        %2200 = vmatmul.mubr.bf16.gmra.mrb[0].mxu0 %v2085
        %v2201 = vpop.f32.mrb[0].mxu0
        %v2202 = vadd.f32 0.0, %v2201
        %v2203 = vpop.f32.mrb[0].mxu0
        %v2204 = vpop.f32.mrb[0].mxu0
        %v2205 = vadd.f32 0.0, %v2204
        %v2206 = vpop.f32.mrb[0].mxu0
        %2207 = vmatprep.mubr.bf16.mxu0 0
        %2208 = vmatmul.mubr.bf16.gmra.mrb[0].mxu0 %v2088
        %v2209 = vpop.f32.mrb[0].mxu0
        %v2210 = vadd.f32 0.0, %v2209
        %v2211 = vpop.f32.mrb[0].mxu0
        %v2212 = vpop.f32.mrb[0].mxu0
        %v2213 = vadd.f32 0.0, %v2212
        %v2214 = vpop.f32.mrb[0].mxu0
        %2215 = vmatprep.mubr.bf16.mxu0 0
        %2216 = vmatmul.mubr.bf16.gmra.mrb[0].mxu0 %v2091
        %v2217 = vpop.f32.mrb[0].mxu0
        %v2218 = vadd.f32 0.0, %v2217
        %v2219 = vpop.f32.mrb[0].mxu0
        %v2220 = vpop.f32.mrb[0].mxu0
        %v2221 = vadd.f32 0.0, %v2220
        %v2222 = vpop.f32.mrb[0].mxu0
        %2223 = vmatprep.mubr.bf16.mxu0 0
        %2224 = vmatmul.mubr.bf16.gmra.mrb[0].mxu0 %v2094
        %v2225 = vpop.f32.mrb[0].mxu0
        %v2226 = vadd.f32 0.0, %v2225
        %v2227 = vpop.f32.mrb[0].mxu0
        %v2228 = vpop.f32.mrb[0].mxu0
        %v2229 = vadd.f32 0.0, %v2228
        %v2230 = vpop.f32.mrb[0].mxu0
        %2231 = vmatprep.mubr.bf16.mxu0 0
        %2232 = vmatmul.mubr.bf16.gmra.mrb[0].mxu0 %v2097
        %v2233 = vpop.f32.mrb[0].mxu0
        %v2234 = vadd.f32 0.0, %v2233
        %v2235 = vpop.f32.mrb[0].mxu0
        %v2236 = vpop.f32.mrb[0].mxu0
        %v2237 = vadd.f32 0.0, %v2236
        %v2238 = vpop.f32.mrb[0].mxu0
        %2239 = vmatprep.mubr.bf16.mxu0 0
        %2240 = vmatmul.mubr.bf16.gmra.mrb[0].mxu0 %v2100
        %v2241 = vpop.f32.mrb[0].mxu0
        %v2242 = vadd.f32 0.0, %v2241
        %v2243 = vpop.f32.mrb[0].mxu0
        %v2244 = vpop.f32.mrb[0].mxu0
        %v2245 = vadd.f32 0.0, %v2244
        %v2246 = vpop.f32.mrb[0].mxu0
        %2247 = vmatprep.mubr.bf16.mxu0 0
        %2248 = vmatmul.mubr.bf16.gmra.mrb[0].mxu0 %v2103
        %v2249 = vpop.f32.mrb[0].mxu0
        %v2250 = vadd.f32 0.0, %v2249
        %v2251 = vpop.f32.mrb[0].mxu0
        %v2252 = vpop.f32.mrb[0].mxu0
        %v2253 = vadd.f32 0.0, %v2252
        %v2254 = vpop.f32.mrb[0].mxu0
        %2255 = vmatprep.mubr.bf16.mxu0 0
        %2256 = vmatmul.mubr.bf16.gmra.mrb[0].mxu0 %v2106
        %v2257 = vpop.f32.mrb[0].mxu0
        %v2258 = vadd.f32 0.0, %v2257
        %v2259 = vpop.f32.mrb[0].mxu0
        %v2260 = vpop.f32.mrb[0].mxu0
        %v2261 = vadd.f32 0.0, %v2260
        %v2262 = vpop.f32.mrb[0].mxu0
        %2263 = vmatprep.mubr.bf16.mxu0 0
        %2264 = vmatmul.mubr.bf16.gmra.mrb[0].mxu0 %v2109
        %v2265 = vpop.f32.mrb[0].mxu0
        %v2266 = vadd.f32 0.0, %v2265
        %v2267 = vpop.f32.mrb[0].mxu0
        %v2268 = vpop.f32.mrb[0].mxu0
        %v2269 = vadd.f32 0.0, %v2268
        %v2270 = vpop.f32.mrb[0].mxu0
        %2271 = vdwg.mxu0
        %v2272 = vadd.f32 %v1496, %v2146
        %v2273 = vadd.f32 %v1499, %v2149
        %v2274 = vadd.f32 %v1504, %v2154
        %v2275 = vadd.f32 %v1507, %v2157
        %v2276 = vadd.f32 %v1512, %v2162
        %v2277 = vadd.f32 %v1515, %v2165
        %v2278 = vadd.f32 %v1520, %v2170
        %v2279 = vadd.f32 %v1523, %v2173
        %v2280 = vadd.f32 %v1528, %v2178
        %v2281 = vadd.f32 %v1531, %v2181
        %v2282 = vadd.f32 %v1536, %v2186
        %v2283 = vadd.f32 %v1539, %v2189
        %v2284 = vadd.f32 %v1544, %v2194
        %v2285 = vadd.f32 %v1547, %v2197
        %v2286 = vadd.f32 %v1552, %v2202
        %v2287 = vadd.f32 %v1555, %v2205
        %v2288 = vadd.f32 %v1560, %v2210
        %v2289 = vadd.f32 %v1563, %v2213
        %v2290 = vadd.f32 %v1568, %v2218
        %v2291 = vadd.f32 %v1571, %v2221
        %v2292 = vadd.f32 %v1576, %v2226
        %v2293 = vadd.f32 %v1579, %v2229
        %v2294 = vadd.f32 %v1584, %v2234
        %v2295 = vadd.f32 %v1587, %v2237
        %v2296 = vadd.f32 %v1592, %v2242
        %v2297 = vadd.f32 %v1595, %v2245
        %v2298 = vadd.f32 %v1600, %v2250
        %v2299 = vadd.f32 %v1603, %v2253
        %v2300 = vadd.f32 %v1608, %v2258
        %v2301 = vadd.f32 %v1611, %v2261
        %v2302 = vadd.f32 %v1616, %v2266
        %v2303 = vadd.f32 %v1619, %v2269
        %2304 = vset.pattern.permute.xlu0 3
        %2305 = vperm.xlu0 %2304, %v254
        %v2306 = vpop.permute.xlu0 %2305
        %2307 = vset.pattern.permute.xlu0 3
        %2308 = vperm.xlu0 %2307, %v255
        %v2309 = vpop.permute.xlu0 %2308
        %2310 = vset.pattern.permute.xlu0 3
        %2311 = vperm.xlu0 %2310, %v256
        %v2312 = vpop.permute.xlu0 %2311
        %2313 = vset.pattern.permute.xlu0 3
        %2314 = vperm.xlu0 %2313, %v257
        %v2315 = vpop.permute.xlu0 %2314
        %2316 = vset.pattern.permute.xlu0 3
        %2317 = vperm.xlu0 %2316, %v258
        %v2318 = vpop.permute.xlu0 %2317
        %2319 = vset.pattern.permute.xlu0 3
        %2320 = vperm.xlu0 %2319, %v259
        %v2321 = vpop.permute.xlu0 %2320
        %2322 = vset.pattern.permute.xlu0 3
        %2323 = vperm.xlu0 %2322, %v260
        %v2324 = vpop.permute.xlu0 %2323
        %2325 = vset.pattern.permute.xlu0 3
        %2326 = vperm.xlu0 %2325, %v261
        %v2327 = vpop.permute.xlu0 %2326
        %2328 = vset.pattern.permute.xlu0 3
        %2329 = vperm.xlu0 %2328, %v262
        %v2330 = vpop.permute.xlu0 %2329
        %2331 = vset.pattern.permute.xlu0 3
        %2332 = vperm.xlu0 %2331, %v263
        %v2333 = vpop.permute.xlu0 %2332
        %2334 = vset.pattern.permute.xlu0 3
        %2335 = vperm.xlu0 %2334, %v264
        %v2336 = vpop.permute.xlu0 %2335
        %2337 = vset.pattern.permute.xlu0 3
        %2338 = vperm.xlu0 %2337, %v265
        %v2339 = vpop.permute.xlu0 %2338
        %2340 = vset.pattern.permute.xlu0 3
        %2341 = vperm.xlu0 %2340, %v266
        %v2342 = vpop.permute.xlu0 %2341
        %2343 = vset.pattern.permute.xlu0 3
        %2344 = vperm.xlu0 %2343, %v267
        %v2345 = vpop.permute.xlu0 %2344
        %2346 = vset.pattern.permute.xlu0 3
        %2347 = vperm.xlu0 %2346, %v268
        %v2348 = vpop.permute.xlu0 %2347
        %2349 = vset.pattern.permute.xlu0 3
        %2350 = vperm.xlu0 %2349, %v269
        %v2351 = vpop.permute.xlu0 %2350
        %2352 = vset.pattern.permute.xlu0 3
        %2353 = vperm.xlu0 %2352, %v270
        %v2354 = vpop.permute.xlu0 %2353
        %2355 = vset.pattern.permute.xlu0 3
        %2356 = vperm.xlu0 %2355, %v271
        %v2357 = vpop.permute.xlu0 %2356
        %2358 = vset.pattern.permute.xlu0 3
        %2359 = vperm.xlu0 %2358, %v272
        %v2360 = vpop.permute.xlu0 %2359
        %2361 = vset.pattern.permute.xlu0 3
        %2362 = vperm.xlu0 %2361, %v273
        %v2363 = vpop.permute.xlu0 %2362
        %2364 = vset.pattern.permute.xlu0 3
        %2365 = vperm.xlu0 %2364, %v274
        %v2366 = vpop.permute.xlu0 %2365
        %2367 = vset.pattern.permute.xlu0 3
        %2368 = vperm.xlu0 %2367, %v275
        %v2369 = vpop.permute.xlu0 %2368
        %2370 = vset.pattern.permute.xlu0 3
        %2371 = vperm.xlu0 %2370, %v276
        %v2372 = vpop.permute.xlu0 %2371
        %2373 = vset.pattern.permute.xlu0 3
        %2374 = vperm.xlu0 %2373, %v277
        %v2375 = vpop.permute.xlu0 %2374
        %2376 = vset.pattern.permute.xlu0 3
        %2377 = vperm.xlu0 %2376, %v278
        %v2378 = vpop.permute.xlu0 %2377
        %2379 = vset.pattern.permute.xlu0 3
        %2380 = vperm.xlu0 %2379, %v279
        %v2381 = vpop.permute.xlu0 %2380
        %2382 = vset.pattern.permute.xlu0 3
        %2383 = vperm.xlu0 %2382, %v280
        %v2384 = vpop.permute.xlu0 %2383
        %2385 = vset.pattern.permute.xlu0 3
        %2386 = vperm.xlu0 %2385, %v281
        %v2387 = vpop.permute.xlu0 %2386
        %2388 = vset.pattern.permute.xlu0 3
        %2389 = vperm.xlu0 %2388, %v282
        %v2390 = vpop.permute.xlu0 %2389
        %2391 = vset.pattern.permute.xlu0 3
        %2392 = vperm.xlu0 %2391, %v283
        %v2393 = vpop.permute.xlu0 %2392
        %2394 = vset.pattern.permute.xlu0 3
        %2395 = vperm.xlu0 %2394, %v284
        %v2396 = vpop.permute.xlu0 %2395
        %2397 = vset.pattern.permute.xlu0 3
        %2398 = vperm.xlu0 %2397, %v285
        %v2399 = vpop.permute.xlu0 %2398
        %vm2400 = vcmp.eq.s32.totalorder %v2306, %v287
        %vm2401 = vcmp.eq.s32.totalorder %v2309, %v287
        %vm2402 = vcmp.eq.s32.totalorder %v2312, %v287
        %vm2403 = vcmp.eq.s32.totalorder %v2315, %v287
        %vm2404 = vcmp.eq.s32.totalorder %v2318, %v287
        %vm2405 = vcmp.eq.s32.totalorder %v2321, %v287
        %vm2406 = vcmp.eq.s32.totalorder %v2324, %v287
        %vm2407 = vcmp.eq.s32.totalorder %v2327, %v287
        %vm2408 = vcmp.eq.s32.totalorder %v2330, %v287
        %vm2409 = vcmp.eq.s32.totalorder %v2333, %v287
        %vm2410 = vcmp.eq.s32.totalorder %v2336, %v287
        %vm2411 = vcmp.eq.s32.totalorder %v2339, %v287
        %vm2412 = vcmp.eq.s32.totalorder %v2342, %v287
        %vm2413 = vcmp.eq.s32.totalorder %v2345, %v287
        %vm2414 = vcmp.eq.s32.totalorder %v2348, %v287
        %vm2415 = vcmp.eq.s32.totalorder %v2351, %v287
        %vm2416 = vcmp.eq.s32.totalorder %v2354, %v287
        %vm2417 = vcmp.eq.s32.totalorder %v2357, %v287
        %vm2418 = vcmp.eq.s32.totalorder %v2360, %v287
        %vm2419 = vcmp.eq.s32.totalorder %v2363, %v287
        %vm2420 = vcmp.eq.s32.totalorder %v2366, %v287
        %vm2421 = vcmp.eq.s32.totalorder %v2369, %v287
        %vm2422 = vcmp.eq.s32.totalorder %v2372, %v287
        %vm2423 = vcmp.eq.s32.totalorder %v2375, %v287
        %vm2424 = vcmp.eq.s32.totalorder %v2378, %v287
        %vm2425 = vcmp.eq.s32.totalorder %v2381, %v287
        %vm2426 = vcmp.eq.s32.totalorder %v2384, %v287
        %vm2427 = vcmp.eq.s32.totalorder %v2387, %v287
        %vm2428 = vcmp.eq.s32.totalorder %v2390, %v287
        %vm2429 = vcmp.eq.s32.totalorder %v2393, %v287
        %vm2430 = vcmp.eq.s32.totalorder %v2396, %v287
        %vm2431 = vcmp.eq.s32.totalorder %v2399, %v287
        %v2432 = vsel %vm2400, 1, 0
        %v2433 = vsel %vm2401, 1, 0
        %v2434 = vsel %vm2402, 1, 0
        %v2435 = vsel %vm2403, 1, 0
        %v2436 = vsel %vm2404, 1, 0
        %v2437 = vsel %vm2405, 1, 0
        %v2438 = vsel %vm2406, 1, 0
        %v2439 = vsel %vm2407, 1, 0
        %v2440 = vsel %vm2408, 1, 0
        %v2441 = vsel %vm2409, 1, 0
        %v2442 = vsel %vm2410, 1, 0
        %v2443 = vsel %vm2411, 1, 0
        %v2444 = vsel %vm2412, 1, 0
        %v2445 = vsel %vm2413, 1, 0
        %v2446 = vsel %vm2414, 1, 0
        %v2447 = vsel %vm2415, 1, 0
        %v2448 = vsel %vm2416, 1, 0
        %v2449 = vsel %vm2417, 1, 0
        %v2450 = vsel %vm2418, 1, 0
        %v2451 = vsel %vm2419, 1, 0
        %v2452 = vsel %vm2420, 1, 0
        %v2453 = vsel %vm2421, 1, 0
        %v2454 = vsel %vm2422, 1, 0
        %v2455 = vsel %vm2423, 1, 0
        %v2456 = vsel %vm2424, 1, 0
        %v2457 = vsel %vm2425, 1, 0
        %v2458 = vsel %vm2426, 1, 0
        %v2459 = vsel %vm2427, 1, 0
        %v2460 = vsel %vm2428, 1, 0
        %v2461 = vsel %vm2429, 1, 0
        %v2462 = vsel %vm2430, 1, 0
        %v2463 = vsel %vm2431, 1, 0
        %v2464 = vcvt.s32.f32 %v2432
        %v2465 = vcvt.s32.f32 %v2433
        %v2466 = vcvt.s32.f32 %v2434
        %v2467 = vcvt.s32.f32 %v2435
        %v2468 = vcvt.s32.f32 %v2436
        %v2469 = vcvt.s32.f32 %v2437
        %v2470 = vcvt.s32.f32 %v2438
        %v2471 = vcvt.s32.f32 %v2439
        %v2472 = vcvt.s32.f32 %v2440
        %v2473 = vcvt.s32.f32 %v2441
        %v2474 = vcvt.s32.f32 %v2442
        %v2475 = vcvt.s32.f32 %v2443
        %v2476 = vcvt.s32.f32 %v2444
        %v2477 = vcvt.s32.f32 %v2445
        %v2478 = vcvt.s32.f32 %v2446
        %v2479 = vcvt.s32.f32 %v2447
        %v2480 = vcvt.s32.f32 %v2448
        %v2481 = vcvt.s32.f32 %v2449
        %v2482 = vcvt.s32.f32 %v2450
        %v2483 = vcvt.s32.f32 %v2451
        %v2484 = vcvt.s32.f32 %v2452
        %v2485 = vcvt.s32.f32 %v2453
        %v2486 = vcvt.s32.f32 %v2454
        %v2487 = vcvt.s32.f32 %v2455
        %v2488 = vcvt.s32.f32 %v2456
        %v2489 = vcvt.s32.f32 %v2457
        %v2490 = vcvt.s32.f32 %v2458
        %v2491 = vcvt.s32.f32 %v2459
        %v2492 = vcvt.s32.f32 %v2460
        %v2493 = vcvt.s32.f32 %v2461
        %v2494 = vcvt.s32.f32 %v2462
        %v2495 = vcvt.s32.f32 %v2463
        %v2496 = vpack.c.bf16 %v2465, %v2464
        %v2497 = vpack.c.bf16 %v2467, %v2466
        %v2498 = vpack.c.bf16 %v2469, %v2468
        %v2499 = vpack.c.bf16 %v2471, %v2470
        %v2500 = vpack.c.bf16 %v2473, %v2472
        %v2501 = vpack.c.bf16 %v2475, %v2474
        %v2502 = vpack.c.bf16 %v2477, %v2476
        %v2503 = vpack.c.bf16 %v2479, %v2478
        %v2504 = vpack.c.bf16 %v2481, %v2480
        %v2505 = vpack.c.bf16 %v2483, %v2482
        %v2506 = vpack.c.bf16 %v2485, %v2484
        %v2507 = vpack.c.bf16 %v2487, %v2486
        %v2508 = vpack.c.bf16 %v2489, %v2488
        %v2509 = vpack.c.bf16 %v2491, %v2490
        %v2510 = vpack.c.bf16 %v2493, %v2492
        %v2511 = vpack.c.bf16 %v2495, %v2494
        %v2513 = vsel %vm528, %v2496, 0
        %v2516 = vsel %vm528, %v2497, 0
        %v2519 = vsel %vm528, %v2498, 0
        %v2522 = vsel %vm528, %v2499, 0
        %v2525 = vsel %vm528, %v2500, 0
        %v2528 = vsel %vm528, %v2501, 0
        %v2531 = vsel %vm528, %v2502, 0
        %v2534 = vsel %vm528, %v2503, 0
        %v2537 = vsel %vm528, %v2504, 0
        %v2540 = vsel %vm528, %v2505, 0
        %v2543 = vsel %vm528, %v2506, 0
        %v2546 = vsel %vm528, %v2507, 0
        %v2549 = vsel %vm528, %v2508, 0
        %v2552 = vsel %vm528, %v2509, 0
        %v2555 = vsel %vm528, %v2510, 0
        %v2558 = vsel %vm528, %v2511, 0
        %2560 = vmatprep.subr.bf16.mxu0 0
        %2561 = vmatpush1.bf16.msra.mxu0 %v520
        %2562 = vmatprep.subr.bf16.mxu0 0
        %2563 = vmatpush1.bf16.msra.mxu0 %v521
        %2564 = vmatprep.subr.bf16.mxu0 0
        %2565 = vmatpush1.bf16.msra.mxu0 %v522
        %2566 = vmatprep.subr.bf16.mxu0 0
        %2567 = vmatpush1.bf16.msra.mxu0 %v523
        %2568 = vmatprep.subr.bf16.mxu0 0
        %2569 = vmatpush1.bf16.msra.mxu0 0
        %2570 = vmatprep.subr.bf16.mxu0 0
        %2571 = vmatpush1.bf16.msra.mxu0 0
        %2572 = vmatprep.subr.bf16.mxu0 0
        %2573 = vmatpush1.bf16.msra.mxu0 0
        %2574 = vmatprep.subr.bf16.mxu0 0
        %2575 = vmatpush1.bf16.msra.mxu0 0
        %2576 = vmatprep.subr.bf16.mxu0 0
        %2577 = vmatpush1.bf16.msra.mxu0 0
        %2578 = vmatprep.subr.bf16.mxu0 0
        %2579 = vmatpush1.bf16.msra.mxu0 0
        %2580 = vmatprep.subr.bf16.mxu0 0
        %2581 = vmatpush1.bf16.msra.mxu0 0
        %2582 = vmatprep.subr.bf16.mxu0 0
        %2583 = vmatpush1.bf16.msra.mxu0 0
        %2584 = vmatprep.subr.bf16.mxu0 0
        %2585 = vmatpush1.bf16.msra.mxu0 0
        %2586 = vmatprep.subr.bf16.mxu0 0
        %2587 = vmatpush1.bf16.msra.mxu0 0
        %2588 = vmatprep.subr.bf16.mxu0 0
        %2589 = vmatpush1.bf16.msra.mxu0 0
        %2590 = vmatprep.subr.bf16.mxu0 0
        %2591 = vmatpush1.bf16.msra.mxu0 0
        %2592 = vmatprep.mubr.bf16.mxu0 0
        %2593 = vmatmul.mubr.bf16.gmra.mrb[0].mxu0 %v2513
        %v2594 = vpop.f32.mrb[0].mxu0
        %v2595 = vadd.f32 0.0, %v2594
        %v2596 = vpop.f32.mrb[0].mxu0
        %v2597 = vpop.f32.mrb[0].mxu0
        %v2598 = vadd.f32 0.0, %v2597
        %v2599 = vpop.f32.mrb[0].mxu0
        %2600 = vmatprep.mubr.bf16.mxu0 0
        %2601 = vmatmul.mubr.bf16.gmra.mrb[0].mxu0 %v2516
        %v2602 = vpop.f32.mrb[0].mxu0
        %v2603 = vadd.f32 0.0, %v2602
        %v2604 = vpop.f32.mrb[0].mxu0
        %v2605 = vpop.f32.mrb[0].mxu0
        %v2606 = vadd.f32 0.0, %v2605
        %v2607 = vpop.f32.mrb[0].mxu0
        %2608 = vmatprep.mubr.bf16.mxu0 0
        %2609 = vmatmul.mubr.bf16.gmra.mrb[0].mxu0 %v2519
        %v2610 = vpop.f32.mrb[0].mxu0
        %v2611 = vadd.f32 0.0, %v2610
        %v2612 = vpop.f32.mrb[0].mxu0
        %v2613 = vpop.f32.mrb[0].mxu0
        %v2614 = vadd.f32 0.0, %v2613
        %v2615 = vpop.f32.mrb[0].mxu0
        %2616 = vmatprep.mubr.bf16.mxu0 0
        %2617 = vmatmul.mubr.bf16.gmra.mrb[0].mxu0 %v2522
        %v2618 = vpop.f32.mrb[0].mxu0
        %v2619 = vadd.f32 0.0, %v2618
        %v2620 = vpop.f32.mrb[0].mxu0
        %v2621 = vpop.f32.mrb[0].mxu0
        %v2622 = vadd.f32 0.0, %v2621
        %v2623 = vpop.f32.mrb[0].mxu0
        %2624 = vmatprep.mubr.bf16.mxu0 0
        %2625 = vmatmul.mubr.bf16.gmra.mrb[0].mxu0 %v2525
        %v2626 = vpop.f32.mrb[0].mxu0
        %v2627 = vadd.f32 0.0, %v2626
        %v2628 = vpop.f32.mrb[0].mxu0
        %v2629 = vpop.f32.mrb[0].mxu0
        %v2630 = vadd.f32 0.0, %v2629
        %v2631 = vpop.f32.mrb[0].mxu0
        %2632 = vmatprep.mubr.bf16.mxu0 0
        %2633 = vmatmul.mubr.bf16.gmra.mrb[0].mxu0 %v2528
        %v2634 = vpop.f32.mrb[0].mxu0
        %v2635 = vadd.f32 0.0, %v2634
        %v2636 = vpop.f32.mrb[0].mxu0
        %v2637 = vpop.f32.mrb[0].mxu0
        %v2638 = vadd.f32 0.0, %v2637
        %v2639 = vpop.f32.mrb[0].mxu0
        %2640 = vmatprep.mubr.bf16.mxu0 0
        %2641 = vmatmul.mubr.bf16.gmra.mrb[0].mxu0 %v2531
        %v2642 = vpop.f32.mrb[0].mxu0
        %v2643 = vadd.f32 0.0, %v2642
        %v2644 = vpop.f32.mrb[0].mxu0
        %v2645 = vpop.f32.mrb[0].mxu0
        %v2646 = vadd.f32 0.0, %v2645
        %v2647 = vpop.f32.mrb[0].mxu0
        %2648 = vmatprep.mubr.bf16.mxu0 0
        %2649 = vmatmul.mubr.bf16.gmra.mrb[0].mxu0 %v2534
        %v2650 = vpop.f32.mrb[0].mxu0
        %v2651 = vadd.f32 0.0, %v2650
        %v2652 = vpop.f32.mrb[0].mxu0
        %v2653 = vpop.f32.mrb[0].mxu0
        %v2654 = vadd.f32 0.0, %v2653
        %v2655 = vpop.f32.mrb[0].mxu0
        %2656 = vmatprep.mubr.bf16.mxu0 0
        %2657 = vmatmul.mubr.bf16.gmra.mrb[0].mxu0 %v2537
        %v2658 = vpop.f32.mrb[0].mxu0
        %v2659 = vadd.f32 0.0, %v2658
        %v2660 = vpop.f32.mrb[0].mxu0
        %v2661 = vpop.f32.mrb[0].mxu0
        %v2662 = vadd.f32 0.0, %v2661
        %v2663 = vpop.f32.mrb[0].mxu0
        %2664 = vmatprep.mubr.bf16.mxu0 0
        %2665 = vmatmul.mubr.bf16.gmra.mrb[0].mxu0 %v2540
        %v2666 = vpop.f32.mrb[0].mxu0
        %v2667 = vadd.f32 0.0, %v2666
        %v2668 = vpop.f32.mrb[0].mxu0
        %v2669 = vpop.f32.mrb[0].mxu0
        %v2670 = vadd.f32 0.0, %v2669
        %v2671 = vpop.f32.mrb[0].mxu0
        %2672 = vmatprep.mubr.bf16.mxu0 0
        %2673 = vmatmul.mubr.bf16.gmra.mrb[0].mxu0 %v2543
        %v2674 = vpop.f32.mrb[0].mxu0
        %v2675 = vadd.f32 0.0, %v2674
        %v2676 = vpop.f32.mrb[0].mxu0
        %v2677 = vpop.f32.mrb[0].mxu0
        %v2678 = vadd.f32 0.0, %v2677
        %v2679 = vpop.f32.mrb[0].mxu0
        %2680 = vmatprep.mubr.bf16.mxu0 0
        %2681 = vmatmul.mubr.bf16.gmra.mrb[0].mxu0 %v2546
        %v2682 = vpop.f32.mrb[0].mxu0
        %v2683 = vadd.f32 0.0, %v2682
        %v2684 = vpop.f32.mrb[0].mxu0
        %v2685 = vpop.f32.mrb[0].mxu0
        %v2686 = vadd.f32 0.0, %v2685
        %v2687 = vpop.f32.mrb[0].mxu0
        %2688 = vmatprep.mubr.bf16.mxu0 0
        %2689 = vmatmul.mubr.bf16.gmra.mrb[0].mxu0 %v2549
        %v2690 = vpop.f32.mrb[0].mxu0
        %v2691 = vadd.f32 0.0, %v2690
        %v2692 = vpop.f32.mrb[0].mxu0
        %v2693 = vpop.f32.mrb[0].mxu0
        %v2694 = vadd.f32 0.0, %v2693
        %v2695 = vpop.f32.mrb[0].mxu0
        %2696 = vmatprep.mubr.bf16.mxu0 0
        %2697 = vmatmul.mubr.bf16.gmra.mrb[0].mxu0 %v2552
        %v2698 = vpop.f32.mrb[0].mxu0
        %v2699 = vadd.f32 0.0, %v2698
        %v2700 = vpop.f32.mrb[0].mxu0
        %v2701 = vpop.f32.mrb[0].mxu0
        %v2702 = vadd.f32 0.0, %v2701
        %v2703 = vpop.f32.mrb[0].mxu0
        %2704 = vmatprep.mubr.bf16.mxu0 0
        %2705 = vmatmul.mubr.bf16.gmra.mrb[0].mxu0 %v2555
        %v2706 = vpop.f32.mrb[0].mxu0
        %v2707 = vadd.f32 0.0, %v2706
        %v2708 = vpop.f32.mrb[0].mxu0
        %v2709 = vpop.f32.mrb[0].mxu0
        %v2710 = vadd.f32 0.0, %v2709
        %v2711 = vpop.f32.mrb[0].mxu0
        %2712 = vmatprep.mubr.bf16.mxu0 0
        %2713 = vmatmul.mubr.bf16.gmra.mrb[0].mxu0 %v2558
        %v2714 = vpop.f32.mrb[0].mxu0
        %v2715 = vadd.f32 0.0, %v2714
        %v2716 = vpop.f32.mrb[0].mxu0
        %v2717 = vpop.f32.mrb[0].mxu0
        %v2718 = vadd.f32 0.0, %v2717
        %v2719 = vpop.f32.mrb[0].mxu0
        %2720 = vdwg.mxu0
        %v2721 = vpack.c.bf16 %v2598, %v2595
        %v2722 = vpack.c.bf16 %v2606, %v2603
        %v2723 = vpack.c.bf16 %v2614, %v2611
        %v2724 = vpack.c.bf16 %v2622, %v2619
        %v2725 = vpack.c.bf16 %v2630, %v2627
        %v2726 = vpack.c.bf16 %v2638, %v2635
        %v2727 = vpack.c.bf16 %v2646, %v2643
        %v2728 = vpack.c.bf16 %v2654, %v2651
        %v2729 = vpack.c.bf16 %v2662, %v2659
        %v2730 = vpack.c.bf16 %v2670, %v2667
        %v2731 = vpack.c.bf16 %v2678, %v2675
        %v2732 = vpack.c.bf16 %v2686, %v2683
        %v2733 = vpack.c.bf16 %v2694, %v2691
        %v2734 = vpack.c.bf16 %v2702, %v2699
        %v2735 = vpack.c.bf16 %v2710, %v2707
        %v2736 = vpack.c.bf16 %v2718, %v2715
        %v2737 = vld [vmem:[%s2 + $0x18] sm:$0xf]
        %v2738 = vld [vmem:[%s2 + $0x1c] sm:$0xf]
        %v2741 = vunpack.c.l.b16 %v2737
        %v2742 = vunpack.c.l.b16 %v2738
        %v2743 = vpack.c.b16 %v2742, %v2741
        %v2746 = vsel %vm1197, %v2721, 0
        %v2749 = vsel %vm1197, %v2722, 0
        %v2752 = vsel %vm1197, %v2723, 0
        %v2755 = vsel %vm1197, %v2724, 0
        %v2758 = vsel %vm1197, %v2725, 0
        %v2761 = vsel %vm1197, %v2726, 0
        %v2764 = vsel %vm1197, %v2727, 0
        %v2767 = vsel %vm1197, %v2728, 0
        %v2770 = vsel %vm1197, %v2729, 0
        %v2773 = vsel %vm1197, %v2730, 0
        %v2776 = vsel %vm1197, %v2731, 0
        %v2779 = vsel %vm1197, %v2732, 0
        %v2782 = vsel %vm1197, %v2733, 0
        %v2785 = vsel %vm1197, %v2734, 0
        %v2788 = vsel %vm1197, %v2735, 0
        %v2791 = vsel %vm1197, %v2736, 0
        %2793 = vmatprep.subr.bf16.mxu0 0
        %2794 = vmatpush1.bf16.msra.mxu0 %v2743
        %2795 = vmatprep.subr.bf16.mxu0 0
        %2796 = vmatpush1.bf16.msra.mxu0 0
        %2797 = vmatprep.subr.bf16.mxu0 0
        %2798 = vmatpush1.bf16.msra.mxu0 0
        %2799 = vmatprep.subr.bf16.mxu0 0
        %2800 = vmatpush1.bf16.msra.mxu0 0
        %2801 = vmatprep.subr.bf16.mxu0 0
        %2802 = vmatpush1.bf16.msra.mxu0 0
        %2803 = vmatprep.subr.bf16.mxu0 0
        %2804 = vmatpush1.bf16.msra.mxu0 0
        %2805 = vmatprep.subr.bf16.mxu0 0
        %2806 = vmatpush1.bf16.msra.mxu0 0
        %2807 = vmatprep.subr.bf16.mxu0 0
        %2808 = vmatpush1.bf16.msra.mxu0 0
        %2809 = vmatprep.subr.bf16.mxu0 0
        %2810 = vmatpush1.bf16.msra.mxu0 0
        %2811 = vmatprep.subr.bf16.mxu0 0
        %2812 = vmatpush1.bf16.msra.mxu0 0
        %2813 = vmatprep.subr.bf16.mxu0 0
        %2814 = vmatpush1.bf16.msra.mxu0 0
        %2815 = vmatprep.subr.bf16.mxu0 0
        %2816 = vmatpush1.bf16.msra.mxu0 0
        %2817 = vmatprep.subr.bf16.mxu0 0
        %2818 = vmatpush1.bf16.msra.mxu0 0
        %2819 = vmatprep.subr.bf16.mxu0 0
        %2820 = vmatpush1.bf16.msra.mxu0 0
        %2821 = vmatprep.subr.bf16.mxu0 0
        %2822 = vmatpush1.bf16.msra.mxu0 0
        %2823 = vmatprep.subr.bf16.mxu0 0
        %2824 = vmatpush1.bf16.msra.mxu0 0
        %2825 = vmatprep.mubr.bf16.mxu0 0
        %2826 = vmatmul.mubr.bf16.gmra.mrb[0].mxu0 %v2746
        %v2827 = vpop.f32.mrb[0].mxu0
        %v2828 = vadd.f32 0.0, %v2827
        %v2829 = vpop.f32.mrb[0].mxu0
        %v2830 = vpop.f32.mrb[0].mxu0
        %v2831 = vadd.f32 0.0, %v2830
        %v2832 = vpop.f32.mrb[0].mxu0
        %2833 = vmatprep.mubr.bf16.mxu0 0
        %2834 = vmatmul.mubr.bf16.gmra.mrb[0].mxu0 %v2749
        %v2835 = vpop.f32.mrb[0].mxu0
        %v2836 = vadd.f32 0.0, %v2835
        %v2837 = vpop.f32.mrb[0].mxu0
        %v2838 = vpop.f32.mrb[0].mxu0
        %v2839 = vadd.f32 0.0, %v2838
        %v2840 = vpop.f32.mrb[0].mxu0
        %2841 = vmatprep.mubr.bf16.mxu0 0
        %2842 = vmatmul.mubr.bf16.gmra.mrb[0].mxu0 %v2752
        %v2843 = vpop.f32.mrb[0].mxu0
        %v2844 = vadd.f32 0.0, %v2843
        %v2845 = vpop.f32.mrb[0].mxu0
        %v2846 = vpop.f32.mrb[0].mxu0
        %v2847 = vadd.f32 0.0, %v2846
        %v2848 = vpop.f32.mrb[0].mxu0
        %2849 = vmatprep.mubr.bf16.mxu0 0
        %2850 = vmatmul.mubr.bf16.gmra.mrb[0].mxu0 %v2755
        %v2851 = vpop.f32.mrb[0].mxu0
        %v2852 = vadd.f32 0.0, %v2851
        %v2853 = vpop.f32.mrb[0].mxu0
        %v2854 = vpop.f32.mrb[0].mxu0
        %v2855 = vadd.f32 0.0, %v2854
        %v2856 = vpop.f32.mrb[0].mxu0
        %2857 = vmatprep.mubr.bf16.mxu0 0
        %2858 = vmatmul.mubr.bf16.gmra.mrb[0].mxu0 %v2758
        %v2859 = vpop.f32.mrb[0].mxu0
        %v2860 = vadd.f32 0.0, %v2859
        %v2861 = vpop.f32.mrb[0].mxu0
        %v2862 = vpop.f32.mrb[0].mxu0
        %v2863 = vadd.f32 0.0, %v2862
        %v2864 = vpop.f32.mrb[0].mxu0
        %2865 = vmatprep.mubr.bf16.mxu0 0
        %2866 = vmatmul.mubr.bf16.gmra.mrb[0].mxu0 %v2761
        %v2867 = vpop.f32.mrb[0].mxu0
        %v2868 = vadd.f32 0.0, %v2867
        %v2869 = vpop.f32.mrb[0].mxu0
        %v2870 = vpop.f32.mrb[0].mxu0
        %v2871 = vadd.f32 0.0, %v2870
        %v2872 = vpop.f32.mrb[0].mxu0
        %2873 = vmatprep.mubr.bf16.mxu0 0
        %2874 = vmatmul.mubr.bf16.gmra.mrb[0].mxu0 %v2764
        %v2875 = vpop.f32.mrb[0].mxu0
        %v2876 = vadd.f32 0.0, %v2875
        %v2877 = vpop.f32.mrb[0].mxu0
        %v2878 = vpop.f32.mrb[0].mxu0
        %v2879 = vadd.f32 0.0, %v2878
        %v2880 = vpop.f32.mrb[0].mxu0
        %2881 = vmatprep.mubr.bf16.mxu0 0
        %2882 = vmatmul.mubr.bf16.gmra.mrb[0].mxu0 %v2767
        %v2883 = vpop.f32.mrb[0].mxu0
        %v2884 = vadd.f32 0.0, %v2883
        %v2885 = vpop.f32.mrb[0].mxu0
        %v2886 = vpop.f32.mrb[0].mxu0
        %v2887 = vadd.f32 0.0, %v2886
        %v2888 = vpop.f32.mrb[0].mxu0
        %2889 = vmatprep.mubr.bf16.mxu0 0
        %2890 = vmatmul.mubr.bf16.gmra.mrb[0].mxu0 %v2770
        %v2891 = vpop.f32.mrb[0].mxu0
        %v2892 = vadd.f32 0.0, %v2891
        %v2893 = vpop.f32.mrb[0].mxu0
        %v2894 = vpop.f32.mrb[0].mxu0
        %v2895 = vadd.f32 0.0, %v2894
        %v2896 = vpop.f32.mrb[0].mxu0
        %2897 = vmatprep.mubr.bf16.mxu0 0
        %2898 = vmatmul.mubr.bf16.gmra.mrb[0].mxu0 %v2773
        %v2899 = vpop.f32.mrb[0].mxu0
        %v2900 = vadd.f32 0.0, %v2899
        %v2901 = vpop.f32.mrb[0].mxu0
        %v2902 = vpop.f32.mrb[0].mxu0
        %v2903 = vadd.f32 0.0, %v2902
        %v2904 = vpop.f32.mrb[0].mxu0
        %2905 = vmatprep.mubr.bf16.mxu0 0
        %2906 = vmatmul.mubr.bf16.gmra.mrb[0].mxu0 %v2776
        %v2907 = vpop.f32.mrb[0].mxu0
        %v2908 = vadd.f32 0.0, %v2907
        %v2909 = vpop.f32.mrb[0].mxu0
        %v2910 = vpop.f32.mrb[0].mxu0
        %v2911 = vadd.f32 0.0, %v2910
        %v2912 = vpop.f32.mrb[0].mxu0
        %2913 = vmatprep.mubr.bf16.mxu0 0
        %2914 = vmatmul.mubr.bf16.gmra.mrb[0].mxu0 %v2779
        %v2915 = vpop.f32.mrb[0].mxu0
        %v2916 = vadd.f32 0.0, %v2915
        %v2917 = vpop.f32.mrb[0].mxu0
        %v2918 = vpop.f32.mrb[0].mxu0
        %v2919 = vadd.f32 0.0, %v2918
        %v2920 = vpop.f32.mrb[0].mxu0
        %2921 = vmatprep.mubr.bf16.mxu0 0
        %2922 = vmatmul.mubr.bf16.gmra.mrb[0].mxu0 %v2782
        %v2923 = vpop.f32.mrb[0].mxu0
        %v2924 = vadd.f32 0.0, %v2923
        %v2925 = vpop.f32.mrb[0].mxu0
        %v2926 = vpop.f32.mrb[0].mxu0
        %v2927 = vadd.f32 0.0, %v2926
        %v2928 = vpop.f32.mrb[0].mxu0
        %2929 = vmatprep.mubr.bf16.mxu0 0
        %2930 = vmatmul.mubr.bf16.gmra.mrb[0].mxu0 %v2785
        %v2931 = vpop.f32.mrb[0].mxu0
        %v2932 = vadd.f32 0.0, %v2931
        %v2933 = vpop.f32.mrb[0].mxu0
        %v2934 = vpop.f32.mrb[0].mxu0
        %v2935 = vadd.f32 0.0, %v2934
        %v2936 = vpop.f32.mrb[0].mxu0
        %2937 = vmatprep.mubr.bf16.mxu0 0
        %2938 = vmatmul.mubr.bf16.gmra.mrb[0].mxu0 %v2788
        %v2939 = vpop.f32.mrb[0].mxu0
        %v2940 = vadd.f32 0.0, %v2939
        %v2941 = vpop.f32.mrb[0].mxu0
        %v2942 = vpop.f32.mrb[0].mxu0
        %v2943 = vadd.f32 0.0, %v2942
        %v2944 = vpop.f32.mrb[0].mxu0
        %2945 = vmatprep.mubr.bf16.mxu0 0
        %2946 = vmatmul.mubr.bf16.gmra.mrb[0].mxu0 %v2791
        %v2947 = vpop.f32.mrb[0].mxu0
        %v2948 = vadd.f32 0.0, %v2947
        %v2949 = vpop.f32.mrb[0].mxu0
        %v2950 = vpop.f32.mrb[0].mxu0
        %v2951 = vadd.f32 0.0, %v2950
        %v2952 = vpop.f32.mrb[0].mxu0
        %2953 = vdwg.mxu0
        %v2954 = vadd.f32 %v2272, %v2828
        %v2955 = vadd.f32 %v2273, %v2831
        %v2956 = vadd.f32 %v2274, %v2836
        %v2957 = vadd.f32 %v2275, %v2839
        %v2958 = vadd.f32 %v2276, %v2844
        %v2959 = vadd.f32 %v2277, %v2847
        %v2960 = vadd.f32 %v2278, %v2852
        %v2961 = vadd.f32 %v2279, %v2855
        %v2962 = vadd.f32 %v2280, %v2860
        %v2963 = vadd.f32 %v2281, %v2863
        %v2964 = vadd.f32 %v2282, %v2868
        %v2965 = vadd.f32 %v2283, %v2871
        %v2966 = vadd.f32 %v2284, %v2876
        %v2967 = vadd.f32 %v2285, %v2879
        %v2968 = vadd.f32 %v2286, %v2884
        %v2969 = vadd.f32 %v2287, %v2887
        %v2970 = vadd.f32 %v2288, %v2892
        %v2971 = vadd.f32 %v2289, %v2895
        %v2972 = vadd.f32 %v2290, %v2900
        %v2973 = vadd.f32 %v2291, %v2903
        %v2974 = vadd.f32 %v2292, %v2908
        %v2975 = vadd.f32 %v2293, %v2911
        %v2976 = vadd.f32 %v2294, %v2916
        %v2977 = vadd.f32 %v2295, %v2919
        %v2978 = vadd.f32 %v2296, %v2924
        %v2979 = vadd.f32 %v2297, %v2927
        %v2980 = vadd.f32 %v2298, %v2932
        %v2981 = vadd.f32 %v2299, %v2935
        %v2982 = vadd.f32 %v2300, %v2940
        %v2983 = vadd.f32 %v2301, %v2943
        %v2984 = vadd.f32 %v2302, %v2948
        %v2985 = vadd.f32 %v2303, %v2951
        %v2986 = vld [vmem:[%s3] sm:$0x1]
        %v2988 = vlaneseq
        %v2989 = vshrl.u32 %v2988, 7
        %v2990 = vsub.s32 0, %v2989
        %v2991 = vrot.slane %v2986, %v2990
        %v2993 = vadd.f32 %v2954, %v2991
        %v2994 = vadd.f32 %v2955, %v2991
        %v2995 = vadd.f32 %v2956, %v2991
        %v2996 = vadd.f32 %v2957, %v2991
        %v2997 = vadd.f32 %v2958, %v2991
        %v2998 = vadd.f32 %v2959, %v2991
        %v2999 = vadd.f32 %v2960, %v2991
        %v3000 = vadd.f32 %v2961, %v2991
        %v3001 = vadd.f32 %v2962, %v2991
        %v3002 = vadd.f32 %v2963, %v2991
        %v3003 = vadd.f32 %v2964, %v2991
        %v3004 = vadd.f32 %v2965, %v2991
        %v3005 = vadd.f32 %v2966, %v2991
        %v3006 = vadd.f32 %v2967, %v2991
        %v3007 = vadd.f32 %v2968, %v2991
        %v3008 = vadd.f32 %v2969, %v2991
        %v3009 = vadd.f32 %v2970, %v2991
        %v3010 = vadd.f32 %v2971, %v2991
        %v3011 = vadd.f32 %v2972, %v2991
        %v3012 = vadd.f32 %v2973, %v2991
        %v3013 = vadd.f32 %v2974, %v2991
        %v3014 = vadd.f32 %v2975, %v2991
        %v3015 = vadd.f32 %v2976, %v2991
        %v3016 = vadd.f32 %v2977, %v2991
        %v3017 = vadd.f32 %v2978, %v2991
        %v3018 = vadd.f32 %v2979, %v2991
        %v3019 = vadd.f32 %v2980, %v2991
        %v3020 = vadd.f32 %v2981, %v2991
        %v3021 = vadd.f32 %v2982, %v2991
        %v3022 = vadd.f32 %v2983, %v2991
        %v3023 = vadd.f32 %v2984, %v2991
        %v3024 = vadd.f32 %v2985, %v2991
        %v3025 = vmax.f32 %v2993, 0.0
        %v3026 = vmax.f32 %v2994, 0.0
        %v3027 = vmax.f32 %v2995, 0.0
        %v3028 = vmax.f32 %v2996, 0.0
        %v3029 = vmax.f32 %v2997, 0.0
        %v3030 = vmax.f32 %v2998, 0.0
        %v3031 = vmax.f32 %v2999, 0.0
        %v3032 = vmax.f32 %v3000, 0.0
        %v3033 = vmax.f32 %v3001, 0.0
        %v3034 = vmax.f32 %v3002, 0.0
        %v3035 = vmax.f32 %v3003, 0.0
        %v3036 = vmax.f32 %v3004, 0.0
        %v3037 = vmax.f32 %v3005, 0.0
        %v3038 = vmax.f32 %v3006, 0.0
        %v3039 = vmax.f32 %v3007, 0.0
        %v3040 = vmax.f32 %v3008, 0.0
        %v3041 = vmax.f32 %v3009, 0.0
        %v3042 = vmax.f32 %v3010, 0.0
        %v3043 = vmax.f32 %v3011, 0.0
        %v3044 = vmax.f32 %v3012, 0.0
        %v3045 = vmax.f32 %v3013, 0.0
        %v3046 = vmax.f32 %v3014, 0.0
        %v3047 = vmax.f32 %v3015, 0.0
        %v3048 = vmax.f32 %v3016, 0.0
        %v3049 = vmax.f32 %v3017, 0.0
        %v3050 = vmax.f32 %v3018, 0.0
        %v3051 = vmax.f32 %v3019, 0.0
        %v3052 = vmax.f32 %v3020, 0.0
        %v3053 = vmax.f32 %v3021, 0.0
        %v3054 = vmax.f32 %v3022, 0.0
        %v3055 = vmax.f32 %v3023, 0.0
        %v3056 = vmax.f32 %v3024, 0.0
        %v3057 = vpack.c.bf16 %v3026, %v3025
        %v3058 = vpack.c.bf16 %v3028, %v3027
        %v3059 = vpack.c.bf16 %v3030, %v3029
        %v3060 = vpack.c.bf16 %v3032, %v3031
        %v3061 = vpack.c.bf16 %v3034, %v3033
        %v3062 = vpack.c.bf16 %v3036, %v3035
        %v3063 = vpack.c.bf16 %v3038, %v3037
        %v3064 = vpack.c.bf16 %v3040, %v3039
        %v3065 = vpack.c.bf16 %v3042, %v3041
        %v3066 = vpack.c.bf16 %v3044, %v3043
        %v3067 = vpack.c.bf16 %v3046, %v3045
        %v3068 = vpack.c.bf16 %v3048, %v3047
        %v3069 = vpack.c.bf16 %v3050, %v3049
        %v3070 = vpack.c.bf16 %v3052, %v3051
        %v3071 = vpack.c.bf16 %v3054, %v3053
        %v3072 = vpack.c.bf16 %v3056, %v3055
        %v3073 = vld [vmem:[%s4] sm:$0xf]
        %v3074 = vld [vmem:[%s4 + $0x4] sm:$0xf]
        %v3075 = vld [vmem:[%s4 + $0x8] sm:$0xf]
        %v3076 = vld [vmem:[%s4 + $0xc] sm:$0xf]
        %v3077 = vld [vmem:[%s4 + $0x10] sm:$0xf]
        %v3078 = vld [vmem:[%s4 + $0x14] sm:$0xf]
        %v3079 = vld [vmem:[%s4 + $0x18] sm:$0xf]
        %v3080 = vld [vmem:[%s4 + $0x1c] sm:$0xf]
        %v3081 = vld [vmem:[%s4 + $0x20] sm:$0xf]
        %v3082 = vld [vmem:[%s4 + $0x24] sm:$0xf]
        %v3083 = vld [vmem:[%s4 + $0x28] sm:$0xf]
        %v3084 = vld [vmem:[%s4 + $0x2c] sm:$0xf]
        %v3085 = vld [vmem:[%s4 + $0x30] sm:$0xf]
        %v3086 = vld [vmem:[%s4 + $0x34] sm:$0xf]
        %v3087 = vld [vmem:[%s4 + $0x38] sm:$0xf]
        %v3088 = vld [vmem:[%s4 + $0x3c] sm:$0xf]
        %v3089 = vld [vmem:[%s5] sm:$0x1]
        %v3091 = vlaneseq
        %v3092 = vshrl.u32 %v3091, 7
        %v3093 = vsub.s32 0, %v3092
        %v3094 = vrot.slane %v3089, %v3093
        %v3112 = vunpack.c.l.b16 %v3073
        %v3113 = vunpack.c.l.b16 %v3074
        %v3114 = vunpack.c.l.b16 %v3075
        %v3115 = vunpack.c.l.b16 %v3076
        %v3116 = vunpack.c.l.b16 %v3077
        %v3117 = vunpack.c.l.b16 %v3078
        %v3118 = vunpack.c.l.b16 %v3079
        %v3119 = vunpack.c.l.b16 %v3080
        %v3120 = vunpack.c.l.b16 %v3081
        %v3121 = vunpack.c.l.b16 %v3082
        %v3122 = vunpack.c.l.b16 %v3083
        %v3123 = vunpack.c.l.b16 %v3084
        %v3124 = vunpack.c.l.b16 %v3085
        %v3125 = vunpack.c.l.b16 %v3086
        %v3126 = vunpack.c.l.b16 %v3087
        %v3127 = vunpack.c.l.b16 %v3088
        %v3128 = vpack.c.b16 %v3113, %v3112
        %v3129 = vpack.c.b16 %v3115, %v3114
        %v3130 = vpack.c.b16 %v3117, %v3116
        %v3131 = vpack.c.b16 %v3119, %v3118
        %v3132 = vpack.c.b16 %v3121, %v3120
        %v3133 = vpack.c.b16 %v3123, %v3122
        %v3134 = vpack.c.b16 %v3125, %v3124
        %v3135 = vpack.c.b16 %v3127, %v3126
        %3144 = vmatprep.subr.bf16.mxu0 0
        %3145 = vmatpush1.bf16.msra.mxu0 %v3128
        %3146 = vmatprep.subr.bf16.mxu0 0
        %3147 = vmatpush1.bf16.msra.mxu0 %v3129
        %3148 = vmatprep.subr.bf16.mxu0 0
        %3149 = vmatpush1.bf16.msra.mxu0 %v3130
        %3150 = vmatprep.subr.bf16.mxu0 0
        %3151 = vmatpush1.bf16.msra.mxu0 %v3131
        %3152 = vmatprep.subr.bf16.mxu0 0
        %3153 = vmatpush1.bf16.msra.mxu0 %v3132
        %3154 = vmatprep.subr.bf16.mxu0 0
        %3155 = vmatpush1.bf16.msra.mxu0 %v3133
        %3156 = vmatprep.subr.bf16.mxu0 0
        %3157 = vmatpush1.bf16.msra.mxu0 %v3134
        %3158 = vmatprep.subr.bf16.mxu0 0
        %3159 = vmatpush1.bf16.msra.mxu0 %v3135
        %3160 = vmatprep.subr.bf16.mxu0 0
        %3161 = vmatpush1.bf16.msra.mxu0 0
        %3162 = vmatprep.subr.bf16.mxu0 0
        %3163 = vmatpush1.bf16.msra.mxu0 0
        %3164 = vmatprep.subr.bf16.mxu0 0
        %3165 = vmatpush1.bf16.msra.mxu0 0
        %3166 = vmatprep.subr.bf16.mxu0 0
        %3167 = vmatpush1.bf16.msra.mxu0 0
        %3168 = vmatprep.subr.bf16.mxu0 0
        %3169 = vmatpush1.bf16.msra.mxu0 0
        %3170 = vmatprep.subr.bf16.mxu0 0
        %3171 = vmatpush1.bf16.msra.mxu0 0
        %3172 = vmatprep.subr.bf16.mxu0 0
        %3173 = vmatpush1.bf16.msra.mxu0 0
        %3174 = vmatprep.subr.bf16.mxu0 0
        %3175 = vmatpush1.bf16.msra.mxu0 0
        %3176 = vmatprep.mubr.bf16.mxu0 0
        %3177 = vmatmul.mubr.bf16.gmra.mrb[0].mxu0 %v3057
        %v3178 = vpop.f32.mrb[0].mxu0
        %v3179 = vadd.f32 %v3094, %v3178
        %v3180 = vpop.f32.mrb[0].mxu0
        %v3181 = vpop.f32.mrb[0].mxu0
        %v3182 = vadd.f32 %v3094, %v3181
        %v3183 = vpop.f32.mrb[0].mxu0
        %3184 = vmatprep.mubr.bf16.mxu0 0
        %3185 = vmatmul.mubr.bf16.gmra.mrb[0].mxu0 %v3058
        %v3186 = vpop.f32.mrb[0].mxu0
        %v3187 = vadd.f32 %v3094, %v3186
        %v3188 = vpop.f32.mrb[0].mxu0
        %v3189 = vpop.f32.mrb[0].mxu0
        %v3190 = vadd.f32 %v3094, %v3189
        %v3191 = vpop.f32.mrb[0].mxu0
        %3192 = vmatprep.mubr.bf16.mxu0 0
        %3193 = vmatmul.mubr.bf16.gmra.mrb[0].mxu0 %v3059
        %v3194 = vpop.f32.mrb[0].mxu0
        %v3195 = vadd.f32 %v3094, %v3194
        %v3196 = vpop.f32.mrb[0].mxu0
        %v3197 = vpop.f32.mrb[0].mxu0
        %v3198 = vadd.f32 %v3094, %v3197
        %v3199 = vpop.f32.mrb[0].mxu0
        %3200 = vmatprep.mubr.bf16.mxu0 0
        %3201 = vmatmul.mubr.bf16.gmra.mrb[0].mxu0 %v3060
        %v3202 = vpop.f32.mrb[0].mxu0
        %v3203 = vadd.f32 %v3094, %v3202
        %v3204 = vpop.f32.mrb[0].mxu0
        %v3205 = vpop.f32.mrb[0].mxu0
        %v3206 = vadd.f32 %v3094, %v3205
        %v3207 = vpop.f32.mrb[0].mxu0
        %3208 = vmatprep.mubr.bf16.mxu0 0
        %3209 = vmatmul.mubr.bf16.gmra.mrb[0].mxu0 %v3061
        %v3210 = vpop.f32.mrb[0].mxu0
        %v3211 = vadd.f32 %v3094, %v3210
        %v3212 = vpop.f32.mrb[0].mxu0
        %v3213 = vpop.f32.mrb[0].mxu0
        %v3214 = vadd.f32 %v3094, %v3213
        %v3215 = vpop.f32.mrb[0].mxu0
        %3216 = vmatprep.mubr.bf16.mxu0 0
        %3217 = vmatmul.mubr.bf16.gmra.mrb[0].mxu0 %v3062
        %v3218 = vpop.f32.mrb[0].mxu0
        %v3219 = vadd.f32 %v3094, %v3218
        %v3220 = vpop.f32.mrb[0].mxu0
        %v3221 = vpop.f32.mrb[0].mxu0
        %v3222 = vadd.f32 %v3094, %v3221
        %v3223 = vpop.f32.mrb[0].mxu0
        %3224 = vmatprep.mubr.bf16.mxu0 0
        %3225 = vmatmul.mubr.bf16.gmra.mrb[0].mxu0 %v3063
        %v3226 = vpop.f32.mrb[0].mxu0
        %v3227 = vadd.f32 %v3094, %v3226
        %v3228 = vpop.f32.mrb[0].mxu0
        %v3229 = vpop.f32.mrb[0].mxu0
        %v3230 = vadd.f32 %v3094, %v3229
        %v3231 = vpop.f32.mrb[0].mxu0
        %3232 = vmatprep.mubr.bf16.mxu0 0
        %3233 = vmatmul.mubr.bf16.gmra.mrb[0].mxu0 %v3064
        %v3234 = vpop.f32.mrb[0].mxu0
        %v3235 = vadd.f32 %v3094, %v3234
        %v3236 = vpop.f32.mrb[0].mxu0
        %v3237 = vpop.f32.mrb[0].mxu0
        %v3238 = vadd.f32 %v3094, %v3237
        %v3239 = vpop.f32.mrb[0].mxu0
        %3240 = vmatprep.mubr.bf16.mxu0 0
        %3241 = vmatmul.mubr.bf16.gmra.mrb[0].mxu0 %v3065
        %v3242 = vpop.f32.mrb[0].mxu0
        %v3243 = vadd.f32 %v3094, %v3242
        %v3244 = vpop.f32.mrb[0].mxu0
        %v3245 = vpop.f32.mrb[0].mxu0
        %v3246 = vadd.f32 %v3094, %v3245
        %v3247 = vpop.f32.mrb[0].mxu0
        %3248 = vmatprep.mubr.bf16.mxu0 0
        %3249 = vmatmul.mubr.bf16.gmra.mrb[0].mxu0 %v3066
        %v3250 = vpop.f32.mrb[0].mxu0
        %v3251 = vadd.f32 %v3094, %v3250
        %v3252 = vpop.f32.mrb[0].mxu0
        %v3253 = vpop.f32.mrb[0].mxu0
        %v3254 = vadd.f32 %v3094, %v3253
        %v3255 = vpop.f32.mrb[0].mxu0
        %3256 = vmatprep.mubr.bf16.mxu0 0
        %3257 = vmatmul.mubr.bf16.gmra.mrb[0].mxu0 %v3067
        %v3258 = vpop.f32.mrb[0].mxu0
        %v3259 = vadd.f32 %v3094, %v3258
        %v3260 = vpop.f32.mrb[0].mxu0
        %v3261 = vpop.f32.mrb[0].mxu0
        %v3262 = vadd.f32 %v3094, %v3261
        %v3263 = vpop.f32.mrb[0].mxu0
        %3264 = vmatprep.mubr.bf16.mxu0 0
        %3265 = vmatmul.mubr.bf16.gmra.mrb[0].mxu0 %v3068
        %v3266 = vpop.f32.mrb[0].mxu0
        %v3267 = vadd.f32 %v3094, %v3266
        %v3268 = vpop.f32.mrb[0].mxu0
        %v3269 = vpop.f32.mrb[0].mxu0
        %v3270 = vadd.f32 %v3094, %v3269
        %v3271 = vpop.f32.mrb[0].mxu0
        %3272 = vmatprep.mubr.bf16.mxu0 0
        %3273 = vmatmul.mubr.bf16.gmra.mrb[0].mxu0 %v3069
        %v3274 = vpop.f32.mrb[0].mxu0
        %v3275 = vadd.f32 %v3094, %v3274
        %v3276 = vpop.f32.mrb[0].mxu0
        %v3277 = vpop.f32.mrb[0].mxu0
        %v3278 = vadd.f32 %v3094, %v3277
        %v3279 = vpop.f32.mrb[0].mxu0
        %3280 = vmatprep.mubr.bf16.mxu0 0
        %3281 = vmatmul.mubr.bf16.gmra.mrb[0].mxu0 %v3070
        %v3282 = vpop.f32.mrb[0].mxu0
        %v3283 = vadd.f32 %v3094, %v3282
        %v3284 = vpop.f32.mrb[0].mxu0
        %v3285 = vpop.f32.mrb[0].mxu0
        %v3286 = vadd.f32 %v3094, %v3285
        %v3287 = vpop.f32.mrb[0].mxu0
        %3288 = vmatprep.mubr.bf16.mxu0 0
        %3289 = vmatmul.mubr.bf16.gmra.mrb[0].mxu0 %v3071
        %v3290 = vpop.f32.mrb[0].mxu0
        %v3291 = vadd.f32 %v3094, %v3290
        %v3292 = vpop.f32.mrb[0].mxu0
        %v3293 = vpop.f32.mrb[0].mxu0
        %v3294 = vadd.f32 %v3094, %v3293
        %v3295 = vpop.f32.mrb[0].mxu0
        %3296 = vmatprep.mubr.bf16.mxu0 0
        %3297 = vmatmul.mubr.bf16.gmra.mrb[0].mxu0 %v3072
        %v3298 = vpop.f32.mrb[0].mxu0
        %v3299 = vadd.f32 %v3094, %v3298
        %v3300 = vpop.f32.mrb[0].mxu0
        %v3301 = vpop.f32.mrb[0].mxu0
        %v3302 = vadd.f32 %v3094, %v3301
        %v3303 = vpop.f32.mrb[0].mxu0
        %3304 = vdwg.mxu0
        %3305 = vst [vmem:[%s245] sm:$0xff] %v3179
        %3306 = vst [vmem:[%s245 + $0x8] sm:$0xff] %v3182
        %3307 = vst [vmem:[%s245 + $0x10] sm:$0xff] %v3187
        %3308 = vst [vmem:[%s245 + $0x18] sm:$0xff] %v3190
        %3309 = vst [vmem:[%s245 + $0x20] sm:$0xff] %v3195
        %3310 = vst [vmem:[%s245 + $0x28] sm:$0xff] %v3198
        %3311 = vst [vmem:[%s245 + $0x30] sm:$0xff] %v3203
        %3312 = vst [vmem:[%s245 + $0x38] sm:$0xff] %v3206
        %3313 = vst [vmem:[%s245 + $0x40] sm:$0xff] %v3211
        %3314 = vst [vmem:[%s245 + $0x48] sm:$0xff] %v3214
        %3315 = vst [vmem:[%s245 + $0x50] sm:$0xff] %v3219
        %3316 = vst [vmem:[%s245 + $0x58] sm:$0xff] %v3222
        %3317 = vst [vmem:[%s245 + $0x60] sm:$0xff] %v3227
        %3318 = vst [vmem:[%s245 + $0x68] sm:$0xff] %v3230
        %3319 = vst [vmem:[%s245 + $0x70] sm:$0xff] %v3235
        %3320 = vst [vmem:[%s245 + $0x78] sm:$0xff] %v3238
        %3321 = vst [vmem:[%s245 + $0x80] sm:$0xff] %v3243
        %3322 = vst [vmem:[%s245 + $0x88] sm:$0xff] %v3246
        %3323 = vst [vmem:[%s245 + $0x90] sm:$0xff] %v3251
        %3324 = vst [vmem:[%s245 + $0x98] sm:$0xff] %v3254
        %3325 = vst [vmem:[%s245 + $0xa0] sm:$0xff] %v3259
        %3326 = vst [vmem:[%s245 + $0xa8] sm:$0xff] %v3262
        %3327 = vst [vmem:[%s245 + $0xb0] sm:$0xff] %v3267
        %3328 = vst [vmem:[%s245 + $0xb8] sm:$0xff] %v3270
        %3329 = vst [vmem:[%s245 + $0xc0] sm:$0xff] %v3275
        %3330 = vst [vmem:[%s245 + $0xc8] sm:$0xff] %v3278
        %3331 = vst [vmem:[%s245 + $0xd0] sm:$0xff] %v3283
        %3332 = vst [vmem:[%s245 + $0xd8] sm:$0xff] %v3286
        %3333 = vst [vmem:[%s245 + $0xe0] sm:$0xff] %v3291
        %3334 = vst [vmem:[%s245 + $0xe8] sm:$0xff] %v3294
        %3335 = vst [vmem:[%s245 + $0xf0] sm:$0xff] %v3299
        %3336 = vst [vmem:[%s245 + $0xf8] sm:$0xff] %v3302
        %s3337 = sand.u32 %s159, 1
        %s3338 = scalar_lea.sflag [#allocation3], %s3337
        %s3339 = sand.u32 %s159, 1
        %s3340 = smul.addr %s3339, 256
        %s3341 = scalar_lea.vmem [#allocation2], %s3340
        // Predicated region
        $region45: #{tpu_custom_call.1} parent=43 // pred_check
          %p3342 = pneg %p169
        $region46: #{tpu_custom_call.1} parent=43 // pred_check_branch
          %3344 = sbr.rel (%p3342) target = $region48
        $region47: #{tpu_custom_call.1} parent=43 // pred_region
          %s3345 = smul.u32 32, %s20
          %s3347 = ssub.s32 4096, 4096
          %3348 = vsyncadd %s3338, %s3347
          %s3349 = smul.addr %s3345, 128
          %s3350 = scalar_lea.hbm %s6, %s3349
          %s3351 = sshll.u32 %s3341, 4
          %s3352 = int_to_ptr.vmem [resolvable:$true] %s3351
          %3357 = dma.vmem_to_hbm [thread:$0]  %s3352, 4096, %s3350, %s3338, 128, 128, 8
        $region48: #{tpu_custom_call.1} parent=43 // pred_fallthru
          _
      $region44: #{tpu_custom_call.1} parent=5 // pred_fallthru
        _
      %p3358 = scmp.le.s32.totalorder 2, %s15
      // Predicated region
      $region49: #{tpu_custom_call.1} parent=5 // pred_check
        %p3359 = pneg %p3358
      $region50: #{tpu_custom_call.1} parent=5 // pred_check_branch
        %3361 = sbr.rel (%p3359) target = $region52
      $region51: #{tpu_custom_call.1} parent=5 // pred_region
        %s3362 = ssub.s32 %s15, 2
        // Predicated region
        $region53: #{tpu_custom_call.1} parent=51 // pred_check
          %p3363 = pneg %p175
        $region54: #{tpu_custom_call.1} parent=51 // pred_check_branch
          %3365 = sbr.rel (%p3363) target = $region56
        $region55: #{tpu_custom_call.1} parent=51 // pred_region
          %s3366 = sand.u32 %s160, 1
          %s3367 = scalar_lea.sflag [#allocation3], %s3366
          %s3368 = sand.u32 %s160, 1
          %s3369 = smul.addr %s3368, 256
          %s3370 = scalar_lea.vmem [#allocation2], %s3369
          %3371 = dma.done %s3367, 4096
        $region56: #{tpu_custom_call.1} parent=51 // pred_fallthru
          _
      $region52: #{tpu_custom_call.1} parent=5 // pred_fallthru
        _
    $region6: #{tpu_custom_call.1} parent=1 // loop_footer
      %s19 = sadd.s32 1, %s15
    $region7: #{tpu_custom_call.1} parent=1 // loop_footer_branch
      %14 = sbr.rel target = $region3
    $region8: #{tpu_custom_call.1} parent=1 // loop_exit
      _
    %3372 = vsyncpa [#allocation3], 1
    %s3373 = scalar_lea.sflag [#allocation3], 1
    %3374 = vsyncpa %s3373, 1

</llo_original>
